<compile_context>
chip_gen: v7x
topology: tpu7x:2x2x1
jax: 0.10.0
libtpu: 0.0.40
codegen_flags: <defaults>
</compile_context>

<pallas_src>
import functools

import jax
import jax.numpy as jnp
from jax import lax
from jax.experimental import pallas as pl
from jax.experimental.pallas import tpu as pltpu

IN_FEATURES = 100
NUM_CLASSES = 2
HIDDEN = (2048, 512, 128, 32)
K_PAD = 128       # in_features zero-padded to one full 128-lane tile
CLASS_PAD = 128   # logits / output padded to a lane-dense 128-wide slab


def _round_up(x, m):
    return (x + m - 1) // m * m


@functools.lru_cache(maxsize=None)
def _dual_tensorcore_chip():
    """True on chips with 2 TensorCores (v7x); conservative False otherwise."""
    try:
        kind = jax.devices()[0].device_kind.lower()
    except Exception:
        return False
    return "v7" in kind


def mlp_kernel(x_ref, w1_ref, w2_ref, w3_ref, w4_ref, w5_ref, bias_ref, o_ref,
               *, bias_layout, num_classes):
    """Fused MLP forward for one batch tile.

    5 bf16 MXU matmuls with fp32 accumulation, fp32 bias + ReLU between them,
    finished with a numerically stable fp32 softmax over the class axis
    (matches nn.Softmax(dim=1)).  Padded class columns are masked out.
    """
    def bias(i):
        off, n = bias_layout[i]           # static python ints
        return bias_ref[:, off:off + n]   # fp32 (1, n)

    def linear(h_bf16, w_ref, i):
        # bf16 x bf16 -> fp32 accumulation on the MXU, fp32 bias add.
        return jnp.dot(h_bf16, w_ref[...],
                       preferred_element_type=jnp.float32) + bias(i)

    def relu_bf16(y_f32):
        # ReLU in fp32, cast back to bf16 for the next MXU matmul.
        return jnp.maximum(y_f32, 0.0).astype(jnp.bfloat16)

    h = x_ref[...]                          # bf16 [bm, 128]
    h = relu_bf16(linear(h, w1_ref, 0))     # [bm, 2048]
    h = relu_bf16(linear(h, w2_ref, 1))     # [bm, 512]
    h = relu_bf16(linear(h, w3_ref, 2))     # [bm, 128]
    h = relu_bf16(linear(h, w4_ref, 3))     # [bm, 32]
    logits = linear(h, w5_ref, 4)           # fp32 [bm, 128] (lane-dense)

    # Mask padded class columns, then numerically stable softmax (fp32,
    # exact divide).
    col = lax.broadcasted_iota(jnp.int32, logits.shape, 1)
    valid = col < num_classes
    logits = jnp.where(valid, logits, jnp.float32(-1e30))
    m = jnp.max(logits, axis=1, keepdims=True)
    e = jnp.where(valid, jnp.exp(logits - m), 0.0)
    denom = jnp.sum(e, axis=1, keepdims=True)
    o_ref[...] = (e / denom).astype(o_ref.dtype)


def make_params(key, in_features=IN_FEATURES, num_classes=NUM_CLASSES):
    """Deterministic fp32 parameter init (Kaiming-uniform-ish), stored (in, out)."""
    dims = (in_features,) + HIDDEN + (num_classes,)
    params = []
    for i in range(len(dims) - 1):
        key, kw, kb = jax.random.split(key, 3)
        fan_in, fan_out = dims[i], dims[i + 1]
        bound = 1.0 / jnp.sqrt(jnp.float32(fan_in))
        w = jax.random.uniform(kw, (fan_in, fan_out), jnp.float32, -bound, bound)
        b = jax.random.uniform(kb, (1, fan_out), jnp.float32, -bound, bound)
        params.append((w, b))
    return params


def prepare_params(params, k_pad=K_PAD, class_pad=CLASS_PAD):
    """One-time conversion for the kernel.

    - pad w1's K dim to 128 and the last layer's N dim (and bias) to 128,
    - cast weights to bf16 (MXU-native), keep biases fp32,
    - concatenate the fp32 biases into one lane-aligned slab (each segment
      starts on a 128-lane boundary) so they travel in a single DMA.
    Returns (weights_bf16_list, bias_slab_f32).
    """
    n_layers = len(params)
    weights, bias_cols = [], []
    for i, (w, b) in enumerate(params):
        if i == 0 and w.shape[0] < k_pad:
            w = jnp.pad(w, ((0, k_pad - w.shape[0]), (0, 0)))
        if i == n_layers - 1 and w.shape[1] < class_pad:
            w = jnp.pad(w, ((0, 0), (0, class_pad - w.shape[1])))
            b = jnp.pad(b, ((0, 0), (0, class_pad - b.shape[1])))
        weights.append(w.astype(jnp.bfloat16))
        bias_cols.append(b.astype(jnp.float32))

    slab_parts = []
    for b in bias_cols:
        n = b.shape[1]
        slab_parts.append(jnp.pad(b, ((0, 0), (0, _round_up(n, 128) - n))))
    bias_slab = jnp.concatenate(slab_parts, axis=1)
    return weights, bias_slab


@functools.partial(jax.jit, static_argnames=("num_classes", "block_m"))
def mlp_forward(x, weights, bias_slab, *, num_classes=NUM_CLASSES, block_m=256):
    """x: fp32 [batch, in_features]; (weights, bias_slab) from prepare_params()."""
    batch = x.shape[0]
    k = weights[0].shape[0]            # padded in_features (128)
    out_pad = weights[-1].shape[1]     # padded class width (128)

    # Zero-pad features to the padded K and cast activations to bf16.
    if x.shape[1] < k:
        x = jnp.pad(x, ((0, 0), (0, k - x.shape[1])))
    x = x.astype(jnp.bfloat16)

    # Batch tile: multiple of 16 (bf16 sublane packing).  On dual-TC chips
    # (v7x) cap the tile at 512 (64 MiB VMEM) and ensure >= 2 grid steps so
    # dimension_semantics=("parallel",) shards tiles across both TensorCores.
    bm = _round_up(min(block_m, _round_up(batch, 16)), 16)
    if _dual_tensorcore_chip():
        bm = min(bm, 512)
        if batch > 16:
            bm = min(bm, max(16, _round_up(batch, 32) // 2))
    padded_batch = _round_up(batch, bm)
    if padded_batch != batch:
        x = jnp.pad(x, ((0, padded_batch - batch), (0, 0)))

    # Static bias-slab layout; must match prepare_params (128-lane segments).
    bias_layout, off = [], 0
    for w in weights:
        n = w.shape[1]
        bias_layout.append((off, n))
        off += _round_up(n, 128)
    bias_layout = tuple(bias_layout)

    # Weights / bias slab are full-extent blocks whose block index never
    # changes -> resident in VMEM across the whole grid; single-buffer them
    # (the second pipeline buffer would never be used).
    def resident_spec(arr):
        nd = arr.ndim
        return pl.BlockSpec(arr.shape, lambda i, _nd=nd: (0,) * _nd,
                            pipeline_mode=pl.Buffered(1))

    in_specs = [pl.BlockSpec((bm, k), lambda i: (i, 0))]
    in_specs += [resident_spec(w) for w in weights]
    in_specs += [resident_spec(bias_slab)]
    out_spec = pl.BlockSpec((bm, out_pad), lambda i: (i, 0))

    kernel = functools.partial(mlp_kernel, bias_layout=bias_layout,
                               num_classes=num_classes)

    out = pl.pallas_call(
        kernel,
        out_shape=jax.ShapeDtypeStruct((padded_batch, out_pad), jnp.float32),
        grid_spec=pltpu.PrefetchScalarGridSpec(
            num_scalar_prefetch=0,
            grid=(padded_batch // bm,),
            in_specs=in_specs,
            out_specs=out_spec,
        ),
        compiler_params=pltpu.CompilerParams(
            dimension_semantics=("parallel",),  # batch tiles shard across TCs
        ),
    )(x, *weights, bias_slab)

    return out[:batch, :num_classes]


def mlp_reference_bf16(x, raw_params):
    """Pure-JAX reference mirroring the kernel's bf16-matmul / fp32-acc math."""
    x = jnp.pad(x, ((0, 0), (0, K_PAD - x.shape[1])))
    h = x.astype(jnp.bfloat16)
    n = len(raw_params)
    logits = None
    for i, (w, b) in enumerate(raw_params):
        if i == 0:
            w = jnp.pad(w, ((0, K_PAD - w.shape[0]), (0, 0)))
        y = jnp.dot(h, w.astype(jnp.bfloat16),
                    preferred_element_type=jnp.float32) + b
        if i < n - 1:
            h = jnp.maximum(y, 0.0).astype(jnp.bfloat16)
        else:
            logits = y
    return jax.nn.softmax(logits, axis=1)


def mlp_reference_f32(x, raw_params):
    """Full-fp32 reference matching the original PyTorch module's math."""
    h = x
    n = len(raw_params)
    logits = None
    for i, (w, b) in enumerate(raw_params):
        y = h @ w + b
        if i < n - 1:
            h = jnp.maximum(y, 0.0)
        else:
            logits = y
    return jax.nn.softmax(logits, axis=1)


if __name__ == "__main__":
    key = jax.random.PRNGKey(0)
    kx, kp = jax.random.split(key)

    batch = 64
    x = jax.random.normal(kx, (batch, IN_FEATURES), jnp.float32)
    raw_params = make_params(kp)
    weights, bias_slab = prepare_params(raw_params)

    out = jax.block_until_ready(mlp_forward(x, weights, bias_slab))
    assert out.shape == (batch, NUM_CLASSES)

    # Exact divide in the kernel -> softmax rows sum to 1 tightly.
    assert jnp.allclose(jnp.sum(out, axis=1), 1.0, atol=1e-5)

    # Match the bf16-matmul / fp32-acc reference closely ...
    ref_bf16 = mlp_reference_bf16(x, raw_params)
    assert jnp.allclose(out, ref_bf16, atol=2e-3, rtol=2e-2)

    # ... and the original fp32 module semantics within bf16-induced tolerance.
    ref_f32 = mlp_reference_f32(x, raw_params)
    assert jnp.allclose(out, ref_f32, atol=5e-2)

    print("KERNEL_OK")
</pallas_src>

<mosaic_0001>
module attributes {stable_mosaic.version = 11 : i64} {
  func.func @mlp_kernel(%arg0: i32, %arg1: memref<64x128xbf16, #tpu.memory_space<vmem>>, %arg2: memref<128x2048xbf16, #tpu.memory_space<vmem>>, %arg3: memref<2048x512xbf16, #tpu.memory_space<vmem>>, %arg4: memref<512x128xbf16, #tpu.memory_space<vmem>>, %arg5: memref<128x32xbf16, #tpu.memory_space<vmem>>, %arg6: memref<32x128xbf16, #tpu.memory_space<vmem>>, %arg7: memref<1x2944xf32, #tpu.memory_space<vmem>>, %arg8: memref<64x128xf32, #tpu.memory_space<vmem>>) attributes {dimension_semantics = [#tpu.dimension_semantics<parallel>], iteration_bounds = array<i64: 1>, scalar_prefetch = 0 : i64, scratch_operands = 0 : i64, tpu.core_type = #tpu.core_type<tc>, window_params = [{transform_indices = @transform_0, window_bounds = array<i64: 64, 128>}, {pipeline_mode = #tpu.pipeline_mode<synchronous>, transform_indices = @transform_1, window_bounds = array<i64: 128, 2048>}, {pipeline_mode = #tpu.pipeline_mode<synchronous>, transform_indices = @transform_2, window_bounds = array<i64: 2048, 512>}, {pipeline_mode = #tpu.pipeline_mode<synchronous>, transform_indices = @transform_3, window_bounds = array<i64: 512, 128>}, {pipeline_mode = #tpu.pipeline_mode<synchronous>, transform_indices = @transform_4, window_bounds = array<i64: 128, 32>}, {pipeline_mode = #tpu.pipeline_mode<synchronous>, transform_indices = @transform_5, window_bounds = array<i64: 32, 128>}, {pipeline_mode = #tpu.pipeline_mode<synchronous>, transform_indices = @transform_6, window_bounds = array<i64: 1, 2944>}, {transform_indices = @transform_7, window_bounds = array<i64: 64, 128>}]} {
    %c0 = arith.constant 0 : index
    %c0_0 = arith.constant 0 : index
    %0 = vector.load %arg1[%c0, %c0_0] : memref<64x128xbf16, #tpu.memory_space<vmem>>, vector<64x128xbf16>
    %c0_1 = arith.constant 0 : index
    %c0_2 = arith.constant 0 : index
    %1 = vector.load %arg2[%c0_1, %c0_2] : memref<128x2048xbf16, #tpu.memory_space<vmem>>, vector<128x2048xbf16>
    %cst = arith.constant dense<0.000000e+00> : vector<64x2048xf32>
    %2 = tpu.matmul %0, %1, %cst {dimension_numbers = #tpu.dot_dimension_numbers<[1], [0], [0], [1], [0, 0, 1, 1], [], []>} : vector<64x128xbf16>, vector<128x2048xbf16>, vector<64x2048xf32> -> vector<64x2048xf32>
    %c0_3 = arith.constant 0 : index
    %c0_4 = arith.constant 0 : index
    %3 = vector.load %arg7[%c0_3, %c0_4] : memref<1x2944xf32, #tpu.memory_space<vmem>>, vector<1x2048xf32>
    %4 = vector.broadcast %3 : vector<1x2048xf32> to vector<64x2048xf32>
    %5 = arith.addf %2, %4 : vector<64x2048xf32>
    %cst_5 = arith.constant 0.000000e+00 : f32
    %6 = vector.broadcast %cst_5 : f32 to vector<64x2048xf32>
    %7 = arith.maximumf %5, %6 : vector<64x2048xf32>
    %8 = arith.truncf %7 : vector<64x2048xf32> to vector<64x2048xbf16>
    %c0_6 = arith.constant 0 : index
    %c0_7 = arith.constant 0 : index
    %9 = vector.load %arg3[%c0_6, %c0_7] : memref<2048x512xbf16, #tpu.memory_space<vmem>>, vector<2048x512xbf16>
    %cst_8 = arith.constant dense<0.000000e+00> : vector<64x512xf32>
    %10 = tpu.matmul %8, %9, %cst_8 {dimension_numbers = #tpu.dot_dimension_numbers<[1], [0], [0], [1], [0, 0, 1, 1], [], []>} : vector<64x2048xbf16>, vector<2048x512xbf16>, vector<64x512xf32> -> vector<64x512xf32>
    %c0_9 = arith.constant 0 : index
    %c2048 = arith.constant 2048 : index
    %11 = vector.load %arg7[%c0_9, %c2048] : memref<1x2944xf32, #tpu.memory_space<vmem>>, vector<1x512xf32>
    %12 = vector.broadcast %11 : vector<1x512xf32> to vector<64x512xf32>
    %13 = arith.addf %10, %12 : vector<64x512xf32>
    %cst_10 = arith.constant 0.000000e+00 : f32
    %14 = vector.broadcast %cst_10 : f32 to vector<64x512xf32>
    %15 = arith.maximumf %13, %14 : vector<64x512xf32>
    %16 = arith.truncf %15 : vector<64x512xf32> to vector<64x512xbf16>
    %c0_11 = arith.constant 0 : index
    %c0_12 = arith.constant 0 : index
    %17 = vector.load %arg4[%c0_11, %c0_12] : memref<512x128xbf16, #tpu.memory_space<vmem>>, vector<512x128xbf16>
    %cst_13 = arith.constant dense<0.000000e+00> : vector<64x128xf32>
    %18 = tpu.matmul %16, %17, %cst_13 {dimension_numbers = #tpu.dot_dimension_numbers<[1], [0], [0], [1], [0, 0, 1, 1], [], []>} : vector<64x512xbf16>, vector<512x128xbf16>, vector<64x128xf32> -> vector<64x128xf32>
    %c0_14 = arith.constant 0 : index
    %c2560 = arith.constant 2560 : index
    %19 = vector.load %arg7[%c0_14, %c2560] : memref<1x2944xf32, #tpu.memory_space<vmem>>, vector<1x128xf32>
    %20 = vector.broadcast %19 : vector<1x128xf32> to vector<64x128xf32>
    %21 = arith.addf %18, %20 : vector<64x128xf32>
    %cst_15 = arith.constant 0.000000e+00 : f32
    %22 = vector.broadcast %cst_15 : f32 to vector<64x128xf32>
    %23 = arith.maximumf %21, %22 : vector<64x128xf32>
    %24 = arith.truncf %23 : vector<64x128xf32> to vector<64x128xbf16>
    %c0_16 = arith.constant 0 : index
    %c0_17 = arith.constant 0 : index
    %25 = vector.load %arg5[%c0_16, %c0_17] : memref<128x32xbf16, #tpu.memory_space<vmem>>, vector<128x32xbf16>
    %cst_18 = arith.constant dense<0.000000e+00> : vector<64x32xf32>
    %26 = tpu.matmul %24, %25, %cst_18 {dimension_numbers = #tpu.dot_dimension_numbers<[1], [0], [0], [1], [0, 0, 1, 1], [], []>} : vector<64x128xbf16>, vector<128x32xbf16>, vector<64x32xf32> -> vector<64x32xf32>
    %c0_19 = arith.constant 0 : index
    %c2688 = arith.constant 2688 : index
    %27 = vector.load %arg7[%c0_19, %c2688] : memref<1x2944xf32, #tpu.memory_space<vmem>>, vector<1x32xf32>
    %28 = vector.broadcast %27 : vector<1x32xf32> to vector<64x32xf32>
    %29 = arith.addf %26, %28 : vector<64x32xf32>
    %cst_20 = arith.constant 0.000000e+00 : f32
    %30 = vector.broadcast %cst_20 : f32 to vector<64x32xf32>
    %31 = arith.maximumf %29, %30 : vector<64x32xf32>
    %32 = arith.truncf %31 : vector<64x32xf32> to vector<64x32xbf16>
    %c0_21 = arith.constant 0 : index
    %c0_22 = arith.constant 0 : index
    %33 = vector.load %arg6[%c0_21, %c0_22] : memref<32x128xbf16, #tpu.memory_space<vmem>>, vector<32x128xbf16>
    %cst_23 = arith.constant dense<0.000000e+00> : vector<64x128xf32>
    %34 = tpu.matmul %32, %33, %cst_23 {dimension_numbers = #tpu.dot_dimension_numbers<[1], [0], [0], [1], [0, 0, 1, 1], [], []>} : vector<64x32xbf16>, vector<32x128xbf16>, vector<64x128xf32> -> vector<64x128xf32>
    %c0_24 = arith.constant 0 : index
    %c2816 = arith.constant 2816 : index
    %35 = vector.load %arg7[%c0_24, %c2816] : memref<1x2944xf32, #tpu.memory_space<vmem>>, vector<1x128xf32>
    %36 = vector.broadcast %35 : vector<1x128xf32> to vector<64x128xf32>
    %37 = arith.addf %34, %36 : vector<64x128xf32>
    %38 = tpu.iota {dimensions = array<i32: 1>} : vector<64x128xi32>
    %c2_i32 = arith.constant 2 : i32
    %39 = vector.broadcast %c2_i32 : i32 to vector<64x128xi32>
    %40 = arith.cmpi slt, %38, %39 : vector<64x128xi32>
    %cst_25 = arith.constant -1.000000e+30 : f32
    %41 = vector.broadcast %cst_25 : f32 to vector<64x128xf32>
    %42 = arith.select %40, %37, %41 : vector<64x128xi1>, vector<64x128xf32>
    %cst_26 = arith.constant dense<0xFF800000> : vector<64xf32>
    %43 = vector.multi_reduction <maximumf>, %42, %cst_26 [1] : vector<64x128xf32> to vector<64xf32>
    %44 = vector.shape_cast %43 : vector<64xf32> to vector<64x1xf32>
    %45 = vector.broadcast %44 : vector<64x1xf32> to vector<64x128xf32>
    %46 = arith.subf %42, %45 : vector<64x128xf32>
    %47 = math.exp %46 : vector<64x128xf32>
    %cst_27 = arith.constant 0.000000e+00 : f32
    %48 = vector.broadcast %cst_27 : f32 to vector<64x128xf32>
    %49 = arith.select %40, %47, %48 : vector<64x128xi1>, vector<64x128xf32>
    %cst_28 = arith.constant dense<0.000000e+00> : vector<64xf32>
    %50 = vector.multi_reduction <add>, %49, %cst_28 [1] : vector<64x128xf32> to vector<64xf32>
    %51 = vector.shape_cast %50 : vector<64xf32> to vector<64x1xf32>
    %52 = vector.broadcast %51 : vector<64x1xf32> to vector<64x128xf32>
    %53 = arith.divf %49, %52 : vector<64x128xf32>
    %c0_29 = arith.constant 0 : index
    %c0_30 = arith.constant 0 : index
    %54 = vector.load %arg8[%c0_29, %c0_30] : memref<64x128xf32, #tpu.memory_space<vmem>>, vector<64x128xf32>
    tpu.vector_store %arg8[%c0_29, %c0_30], %53 {strides = array<i32>} : memref<64x128xf32, #tpu.memory_space<vmem>>, vector<64x128xf32>,
    return
  }
  func.func @transform_0(%arg0: i32) -> (i32, i32) {
    %c0_i32 = arith.constant 0 : i32
    %c0_i32_0 = arith.constant 0 : i32
    return %arg0, %c0_i32 : i32, i32
  }
  func.func @transform_1(%arg0: i32) -> (i32, i32) {
    %c0_i32 = arith.constant 0 : i32
    %c0_i32_0 = arith.constant 0 : i32
    %c0_i32_1 = arith.constant 0 : i32
    return %c0_i32, %c0_i32_0 : i32, i32
  }
  func.func @transform_2(%arg0: i32) -> (i32, i32) {
    %c0_i32 = arith.constant 0 : i32
    %c0_i32_0 = arith.constant 0 : i32
    %c0_i32_1 = arith.constant 0 : i32
    return %c0_i32, %c0_i32_0 : i32, i32
  }
  func.func @transform_3(%arg0: i32) -> (i32, i32) {
    %c0_i32 = arith.constant 0 : i32
    %c0_i32_0 = arith.constant 0 : i32
    %c0_i32_1 = arith.constant 0 : i32
    return %c0_i32, %c0_i32_0 : i32, i32
  }
  func.func @transform_4(%arg0: i32) -> (i32, i32) {
    %c0_i32 = arith.constant 0 : i32
    %c0_i32_0 = arith.constant 0 : i32
    %c0_i32_1 = arith.constant 0 : i32
    return %c0_i32, %c0_i32_0 : i32, i32
  }
  func.func @transform_5(%arg0: i32) -> (i32, i32) {
    %c0_i32 = arith.constant 0 : i32
    %c0_i32_0 = arith.constant 0 : i32
    %c0_i32_1 = arith.constant 0 : i32
    return %c0_i32, %c0_i32_0 : i32, i32
  }
  func.func @transform_6(%arg0: i32) -> (i32, i32) {
    %c0_i32 = arith.constant 0 : i32
    %c0_i32_0 = arith.constant 0 : i32
    %c0_i32_1 = arith.constant 0 : i32
    return %c0_i32, %c0_i32_0 : i32, i32
  }
  func.func @transform_7(%arg0: i32) -> (i32, i32) {
    %c0_i32 = arith.constant 0 : i32
    %c0_i32_0 = arith.constant 0 : i32
    return %arg0, %c0_i32 : i32, i32
  }
}

</mosaic_0001>

<llo_original>
// kernel: mlp_forward.1
$region0: #{mlp_forward.1}
  #allocation0 [shape = 'u32[]', space=smem, size = 0x4, offset = 0x4, fixed_abs, tag = 'smem constant byte address 0x4 - core index']
  #allocation1 [shape = 'u32[144,128]{1,0:T(1,128)}', space=vmem, size = 0x12000, scoped, tag = 'internal scratch']
  %s0 = inlined_call_operand.vmem [shape: bf16[64,128], index: 0, kind: input, shape index: {}]
  %s1 = inlined_call_operand.hbm [shape: bf16[128,2048], index: 1, kind: input, shape index: {}]
  %s2 = inlined_call_operand.hbm [shape: bf16[2048,512], index: 2, kind: input, shape index: {}]
  %s3 = inlined_call_operand.hbm [shape: bf16[512,128], index: 3, kind: input, shape index: {}]
  %s4 = inlined_call_operand.vmem [shape: bf16[128,32], index: 4, kind: input, shape index: {}]
  %s5 = inlined_call_operand.hbm [shape: bf16[32,128], index: 5, kind: input, shape index: {}]
  %s6 = inlined_call_operand.hbm [shape: f32[1,2944], index: 6, kind: input, shape index: {}]
  %s7 = inlined_call_operand.vmem [shape: f32[64,128], index: 7, kind: output, shape index: {}]
  %s8 = sld [smem:[#allocation0]]
  $region58: #{mlp_forward.1} parent=0
    _
  %s10 = ssub.s32 1, %s8
  %s11 = scalar_select 0, %s10, %s8
  $region1: #{mlp_forward.1} parent=0
    #allocation2 [shape = 'u8[524288]{0}', space=vmem, size = 0x80000, scoped, tag = 'input window, operand 1, single buffered']
    #allocation3 [shape = 's32[1]{0}', space=sflag, size = 0x4, scoped, tag = 'scoped memory for mlp_forward.1']
    #allocation4 [shape = 'u8[2097152]{0}', space=vmem, size = 0x200000, scoped, tag = 'input window, operand 2, single buffered']
    #allocation5 [shape = 's32[1]{0}', space=sflag, size = 0x4, scoped, tag = 'scoped memory for mlp_forward.1']
    #allocation6 [shape = 'u8[131072]{0}', space=vmem, size = 0x20000, scoped, tag = 'input window, operand 3, single buffered']
    #allocation7 [shape = 'u8[8192]{0}', space=vmem, size = 0x2000, scoped, tag = 'input window, operand 5, single buffered']
    #allocation8 [shape = 's32[1]{0}', space=sflag, size = 0x4, scoped, tag = 'scoped memory for mlp_forward.1']
    #allocation9 [shape = 'u8[11776]{0}', space=vmem, size = 0x3000, scoped, tag = 'input window, operand 6, single buffered']
    %12 = vsyncpa [#allocation3], 0
    %13 = vsyncpa [#allocation5], 0
    %14 = vsyncpa [#allocation8], 0
    // Predicated region
    $region2: #{mlp_forward.1} parent=1 // pred_check
      _
    $region3: #{mlp_forward.1} parent=1 // pred_check_branch
      %16 = sbr.rel (0) target = $region5
    $region4: #{mlp_forward.1} parent=1 // pred_region
      _
    $region5: #{mlp_forward.1} parent=1 // pred_fallthru
      _
    // Predicated region
    $region6: #{mlp_forward.1} parent=1 // pred_check
      _
    $region7: #{mlp_forward.1} parent=1 // pred_check_branch
      %18 = sbr.rel (0) target = $region9
    $region8: #{mlp_forward.1} parent=1 // pred_region
      %s20 = ssub.s32 16384, 16384
      %21 = vsyncadd [#allocation3], %s20
      %s22 = sshll.u32 [#allocation2], 4
      %s23 = int_to_ptr.vmem [resolvable:$true] %s22
      %28 = dma.hbm_to_vmem [thread:$0]  %s1, 16384, %s23, [#allocation3], 1024, 1024, 64
    $region9: #{mlp_forward.1} parent=1 // pred_fallthru
      _
    // Predicated region
    $region10: #{mlp_forward.1} parent=1 // pred_check
      _
    $region11: #{mlp_forward.1} parent=1 // pred_check_branch
      %30 = sbr.rel (0) target = $region13
    $region12: #{mlp_forward.1} parent=1 // pred_region
      %s32 = ssub.s32 65536, 65536
      %33 = vsyncadd [#allocation5], %s32
      %s34 = sshll.u32 [#allocation4], 4
      %s35 = int_to_ptr.vmem [resolvable:$true] %s34
      %40 = dma.hbm_to_vmem [thread:$0]  %s2, 65536, %s35, [#allocation5], 256, 256, 16
    $region13: #{mlp_forward.1} parent=1 // pred_fallthru
      _
    // Predicated region
    $region14: #{mlp_forward.1} parent=1 // pred_check
      _
    $region15: #{mlp_forward.1} parent=1 // pred_check_branch
      %42 = sbr.rel (0) target = $region17
    $region16: #{mlp_forward.1} parent=1 // pred_region
      %s44 = ssub.s32 4096, 4096
      %45 = vsyncadd [#allocation5], %s44
      %s46 = sshll.u32 [#allocation6], 4
      %s47 = int_to_ptr.vmem [resolvable:$true] %s46
      %52 = dma.hbm_to_vmem [thread:$0]  %s3, 4096, %s47, [#allocation5], 64, 64, 4
    $region17: #{mlp_forward.1} parent=1 // pred_fallthru
      _
    // Predicated region
    $region18: #{mlp_forward.1} parent=1 // pred_check
      _
    $region19: #{mlp_forward.1} parent=1 // pred_check_branch
      %54 = sbr.rel (0) target = $region21
    $region20: #{mlp_forward.1} parent=1 // pred_region
      _
    $region21: #{mlp_forward.1} parent=1 // pred_fallthru
      _
    // Predicated region
    $region22: #{mlp_forward.1} parent=1 // pred_check
      _
    $region23: #{mlp_forward.1} parent=1 // pred_check_branch
      %56 = sbr.rel (0) target = $region25
    $region24: #{mlp_forward.1} parent=1 // pred_region
      %s58 = ssub.s32 256, 256
      %59 = vsyncadd [#allocation8], %s58
      %s60 = sshll.u32 [#allocation7], 4
      %s61 = int_to_ptr.vmem [resolvable:$true] %s60
      %66 = dma.hbm_to_vmem [thread:$0]  %s5, 256, %s61, [#allocation8], 64, 64, 4
    $region25: #{mlp_forward.1} parent=1 // pred_fallthru
      _
    // Predicated region
    $region26: #{mlp_forward.1} parent=1 // pred_check
      _
    $region27: #{mlp_forward.1} parent=1 // pred_check_branch
      %68 = sbr.rel (0) target = $region29
    $region28: #{mlp_forward.1} parent=1 // pred_region
      %s70 = ssub.s32 368, 368
      %71 = vsyncadd [#allocation8], %s70
      %s73 = sshll.u32 [#allocation9], 4
      %s74 = int_to_ptr.vmem [resolvable:$true] %s73
      %76 = dma.hbm_to_vmem [thread:$0]  %s6, 368, %s74, [#allocation8]
    $region29: #{mlp_forward.1} parent=1 // pred_fallthru
      _
    // Predicated region
    $region30: #{mlp_forward.1} parent=1 // pred_check
      _
    $region31: #{mlp_forward.1} parent=1 // pred_check_branch
      %78 = sbr.rel (0) target = $region33
    $region32: #{mlp_forward.1} parent=1 // pred_region
      %79 = dma.done [#allocation3], 16384
    $region33: #{mlp_forward.1} parent=1 // pred_fallthru
      _
    // Predicated region
    $region34: #{mlp_forward.1} parent=1 // pred_check
      _
    $region35: #{mlp_forward.1} parent=1 // pred_check_branch
      %81 = sbr.rel (0) target = $region37
    $region36: #{mlp_forward.1} parent=1 // pred_region
      %82 = dma.done [#allocation5], 65536
    $region37: #{mlp_forward.1} parent=1 // pred_fallthru
      _
    // Predicated region
    $region38: #{mlp_forward.1} parent=1 // pred_check
      _
    $region39: #{mlp_forward.1} parent=1 // pred_check_branch
      %84 = sbr.rel (0) target = $region41
    $region40: #{mlp_forward.1} parent=1 // pred_region
      %85 = dma.done [#allocation5], 4096
    $region41: #{mlp_forward.1} parent=1 // pred_fallthru
      _
    // Predicated region
    $region42: #{mlp_forward.1} parent=1 // pred_check
      _
    $region43: #{mlp_forward.1} parent=1 // pred_check_branch
      %87 = sbr.rel (0) target = $region45
    $region44: #{mlp_forward.1} parent=1 // pred_region
      %88 = dma.done [#allocation8], 256
    $region45: #{mlp_forward.1} parent=1 // pred_fallthru
      _
    // Predicated region
    $region46: #{mlp_forward.1} parent=1 // pred_check
      _
    $region47: #{mlp_forward.1} parent=1 // pred_check_branch
      %90 = sbr.rel (0) target = $region49
    $region48: #{mlp_forward.1} parent=1 // pred_region
      %91 = dma.done [#allocation8], 368
    $region49: #{mlp_forward.1} parent=1 // pred_fallthru
      _
    %v93 = vld [vmem:[%s0] sm:$0xf]
    %v94 = vld [vmem:[%s0 + $0x4] sm:$0xf]
    %v95 = vld [vmem:[%s0 + $0x8] sm:$0xf]
    %v96 = vld [vmem:[%s0 + $0xc] sm:$0xf]
    %v97 = vld [vmem:[%s0 + $0x10] sm:$0xf]
    %v98 = vld [vmem:[%s0 + $0x14] sm:$0xf]
    %v99 = vld [vmem:[%s0 + $0x18] sm:$0xf]
    %v100 = vld [vmem:[%s0 + $0x1c] sm:$0xf]
    %v101 = vld [vmem:[#allocation2] sm:$0xff]
    %v102 = vld [vmem:[#allocation2 + $0x8] sm:$0xff]
    %v103 = vld [vmem:[#allocation2 + $0x10] sm:$0xff]
    %v104 = vld [vmem:[#allocation2 + $0x18] sm:$0xff]
    %v105 = vld [vmem:[#allocation2 + $0x20] sm:$0xff]
    %v106 = vld [vmem:[#allocation2 + $0x28] sm:$0xff]
    %v107 = vld [vmem:[#allocation2 + $0x30] sm:$0xff]
    %v108 = vld [vmem:[#allocation2 + $0x38] sm:$0xff]
    %v109 = vld [vmem:[#allocation2 + $0x40] sm:$0xff]
    %v110 = vld [vmem:[#allocation2 + $0x48] sm:$0xff]
    %v111 = vld [vmem:[#allocation2 + $0x50] sm:$0xff]
    %v112 = vld [vmem:[#allocation2 + $0x58] sm:$0xff]
    %v113 = vld [vmem:[#allocation2 + $0x60] sm:$0xff]
    %v114 = vld [vmem:[#allocation2 + $0x68] sm:$0xff]
    %v115 = vld [vmem:[#allocation2 + $0x70] sm:$0xff]
    %v116 = vld [vmem:[#allocation2 + $0x78] sm:$0xff]
    %v117 = vld [vmem:[#allocation2 + $0x80] sm:$0xff]
    %v118 = vld [vmem:[#allocation2 + $0x88] sm:$0xff]
    %v119 = vld [vmem:[#allocation2 + $0x90] sm:$0xff]
    %v120 = vld [vmem:[#allocation2 + $0x98] sm:$0xff]
    %v121 = vld [vmem:[#allocation2 + $0xa0] sm:$0xff]
    %v122 = vld [vmem:[#allocation2 + $0xa8] sm:$0xff]
    %v123 = vld [vmem:[#allocation2 + $0xb0] sm:$0xff]
    %v124 = vld [vmem:[#allocation2 + $0xb8] sm:$0xff]
    %v125 = vld [vmem:[#allocation2 + $0xc0] sm:$0xff]
    %v126 = vld [vmem:[#allocation2 + $0xc8] sm:$0xff]
    %v127 = vld [vmem:[#allocation2 + $0xd0] sm:$0xff]
    %v128 = vld [vmem:[#allocation2 + $0xd8] sm:$0xff]
    %v129 = vld [vmem:[#allocation2 + $0xe0] sm:$0xff]
    %v130 = vld [vmem:[#allocation2 + $0xe8] sm:$0xff]
    %v131 = vld [vmem:[#allocation2 + $0xf0] sm:$0xff]
    %v132 = vld [vmem:[#allocation2 + $0xf8] sm:$0xff]
    %v133 = vld [vmem:[#allocation2 + $0x100] sm:$0xff]
    %v134 = vld [vmem:[#allocation2 + $0x108] sm:$0xff]
    %v135 = vld [vmem:[#allocation2 + $0x110] sm:$0xff]
    %v136 = vld [vmem:[#allocation2 + $0x118] sm:$0xff]
    %v137 = vld [vmem:[#allocation2 + $0x120] sm:$0xff]
    %v138 = vld [vmem:[#allocation2 + $0x128] sm:$0xff]
    %v139 = vld [vmem:[#allocation2 + $0x130] sm:$0xff]
    %v140 = vld [vmem:[#allocation2 + $0x138] sm:$0xff]
    %v141 = vld [vmem:[#allocation2 + $0x140] sm:$0xff]
    %v142 = vld [vmem:[#allocation2 + $0x148] sm:$0xff]
    %v143 = vld [vmem:[#allocation2 + $0x150] sm:$0xff]
    %v144 = vld [vmem:[#allocation2 + $0x158] sm:$0xff]
    %v145 = vld [vmem:[#allocation2 + $0x160] sm:$0xff]
    %v146 = vld [vmem:[#allocation2 + $0x168] sm:$0xff]
    %v147 = vld [vmem:[#allocation2 + $0x170] sm:$0xff]
    %v148 = vld [vmem:[#allocation2 + $0x178] sm:$0xff]
    %v149 = vld [vmem:[#allocation2 + $0x180] sm:$0xff]
    %v150 = vld [vmem:[#allocation2 + $0x188] sm:$0xff]
    %v151 = vld [vmem:[#allocation2 + $0x190] sm:$0xff]
    %v152 = vld [vmem:[#allocation2 + $0x198] sm:$0xff]
    %v153 = vld [vmem:[#allocation2 + $0x1a0] sm:$0xff]
    %v154 = vld [vmem:[#allocation2 + $0x1a8] sm:$0xff]
    %v155 = vld [vmem:[#allocation2 + $0x1b0] sm:$0xff]
    %v156 = vld [vmem:[#allocation2 + $0x1b8] sm:$0xff]
    %v157 = vld [vmem:[#allocation2 + $0x1c0] sm:$0xff]
    %v158 = vld [vmem:[#allocation2 + $0x1c8] sm:$0xff]
    %v159 = vld [vmem:[#allocation2 + $0x1d0] sm:$0xff]
    %v160 = vld [vmem:[#allocation2 + $0x1d8] sm:$0xff]
    %v161 = vld [vmem:[#allocation2 + $0x1e0] sm:$0xff]
    %v162 = vld [vmem:[#allocation2 + $0x1e8] sm:$0xff]
    %v163 = vld [vmem:[#allocation2 + $0x1f0] sm:$0xff]
    %v164 = vld [vmem:[#allocation2 + $0x1f8] sm:$0xff]
    %v165 = vld [vmem:[#allocation2 + $0x200] sm:$0xff]
    %v166 = vld [vmem:[#allocation2 + $0x208] sm:$0xff]
    %v167 = vld [vmem:[#allocation2 + $0x210] sm:$0xff]
    %v168 = vld [vmem:[#allocation2 + $0x218] sm:$0xff]
    %v169 = vld [vmem:[#allocation2 + $0x220] sm:$0xff]
    %v170 = vld [vmem:[#allocation2 + $0x228] sm:$0xff]
    %v171 = vld [vmem:[#allocation2 + $0x230] sm:$0xff]
    %v172 = vld [vmem:[#allocation2 + $0x238] sm:$0xff]
    %v173 = vld [vmem:[#allocation2 + $0x240] sm:$0xff]
    %v174 = vld [vmem:[#allocation2 + $0x248] sm:$0xff]
    %v175 = vld [vmem:[#allocation2 + $0x250] sm:$0xff]
    %v176 = vld [vmem:[#allocation2 + $0x258] sm:$0xff]
    %v177 = vld [vmem:[#allocation2 + $0x260] sm:$0xff]
    %v178 = vld [vmem:[#allocation2 + $0x268] sm:$0xff]
    %v179 = vld [vmem:[#allocation2 + $0x270] sm:$0xff]
    %v180 = vld [vmem:[#allocation2 + $0x278] sm:$0xff]
    %v181 = vld [vmem:[#allocation2 + $0x280] sm:$0xff]
    %v182 = vld [vmem:[#allocation2 + $0x288] sm:$0xff]
    %v183 = vld [vmem:[#allocation2 + $0x290] sm:$0xff]
    %v184 = vld [vmem:[#allocation2 + $0x298] sm:$0xff]
    %v185 = vld [vmem:[#allocation2 + $0x2a0] sm:$0xff]
    %v186 = vld [vmem:[#allocation2 + $0x2a8] sm:$0xff]
    %v187 = vld [vmem:[#allocation2 + $0x2b0] sm:$0xff]
    %v188 = vld [vmem:[#allocation2 + $0x2b8] sm:$0xff]
    %v189 = vld [vmem:[#allocation2 + $0x2c0] sm:$0xff]
    %v190 = vld [vmem:[#allocation2 + $0x2c8] sm:$0xff]
    %v191 = vld [vmem:[#allocation2 + $0x2d0] sm:$0xff]
    %v192 = vld [vmem:[#allocation2 + $0x2d8] sm:$0xff]
    %v193 = vld [vmem:[#allocation2 + $0x2e0] sm:$0xff]
    %v194 = vld [vmem:[#allocation2 + $0x2e8] sm:$0xff]
    %v195 = vld [vmem:[#allocation2 + $0x2f0] sm:$0xff]
    %v196 = vld [vmem:[#allocation2 + $0x2f8] sm:$0xff]
    %v197 = vld [vmem:[#allocation2 + $0x300] sm:$0xff]
    %v198 = vld [vmem:[#allocation2 + $0x308] sm:$0xff]
    %v199 = vld [vmem:[#allocation2 + $0x310] sm:$0xff]
    %v200 = vld [vmem:[#allocation2 + $0x318] sm:$0xff]
    %v201 = vld [vmem:[#allocation2 + $0x320] sm:$0xff]
    %v202 = vld [vmem:[#allocation2 + $0x328] sm:$0xff]
    %v203 = vld [vmem:[#allocation2 + $0x330] sm:$0xff]
    %v204 = vld [vmem:[#allocation2 + $0x338] sm:$0xff]
    %v205 = vld [vmem:[#allocation2 + $0x340] sm:$0xff]
    %v206 = vld [vmem:[#allocation2 + $0x348] sm:$0xff]
    %v207 = vld [vmem:[#allocation2 + $0x350] sm:$0xff]
    %v208 = vld [vmem:[#allocation2 + $0x358] sm:$0xff]
    %v209 = vld [vmem:[#allocation2 + $0x360] sm:$0xff]
    %v210 = vld [vmem:[#allocation2 + $0x368] sm:$0xff]
    %v211 = vld [vmem:[#allocation2 + $0x370] sm:$0xff]
    %v212 = vld [vmem:[#allocation2 + $0x378] sm:$0xff]
    %v213 = vld [vmem:[#allocation2 + $0x380] sm:$0xff]
    %v214 = vld [vmem:[#allocation2 + $0x388] sm:$0xff]
    %v215 = vld [vmem:[#allocation2 + $0x390] sm:$0xff]
    %v216 = vld [vmem:[#allocation2 + $0x398] sm:$0xff]
    %v217 = vld [vmem:[#allocation2 + $0x3a0] sm:$0xff]
    %v218 = vld [vmem:[#allocation2 + $0x3a8] sm:$0xff]
    %v219 = vld [vmem:[#allocation2 + $0x3b0] sm:$0xff]
    %v220 = vld [vmem:[#allocation2 + $0x3b8] sm:$0xff]
    %v221 = vld [vmem:[#allocation2 + $0x3c0] sm:$0xff]
    %v222 = vld [vmem:[#allocation2 + $0x3c8] sm:$0xff]
    %v223 = vld [vmem:[#allocation2 + $0x3d0] sm:$0xff]
    %v224 = vld [vmem:[#allocation2 + $0x3d8] sm:$0xff]
    %v225 = vld [vmem:[#allocation2 + $0x3e0] sm:$0xff]
    %v226 = vld [vmem:[#allocation2 + $0x3e8] sm:$0xff]
    %v227 = vld [vmem:[#allocation2 + $0x3f0] sm:$0xff]
    %v228 = vld [vmem:[#allocation2 + $0x3f8] sm:$0xff]
    %v229 = vld [vmem:[#allocation9] sm:$0xff]
    %v230 = vld [vmem:[#allocation9 + $0x8] sm:$0xff]
    %v233 = vlaneseq
    %v234 = vshrl.u32 %v233, 7
    %v235 = vsub.s32 0, %v234
    %v236 = vrot.slane %v229, %v235
    %v237 = vlaneseq
    %v238 = vshrl.u32 %v237, 7
    %v239 = vsub.s32 1, %v238
    %v240 = vrot.slane %v229, %v239
    %v241 = vlaneseq
    %v242 = vshrl.u32 %v241, 7
    %v243 = vsub.s32 2, %v242
    %v244 = vrot.slane %v229, %v243
    %v245 = vlaneseq
    %v246 = vshrl.u32 %v245, 7
    %v247 = vsub.s32 3, %v246
    %v248 = vrot.slane %v229, %v247
    %v249 = vlaneseq
    %v250 = vshrl.u32 %v249, 7
    %v251 = vsub.s32 4, %v250
    %v252 = vrot.slane %v229, %v251
    %v253 = vlaneseq
    %v254 = vshrl.u32 %v253, 7
    %v255 = vsub.s32 5, %v254
    %v256 = vrot.slane %v229, %v255
    %v257 = vlaneseq
    %v258 = vshrl.u32 %v257, 7
    %v259 = vsub.s32 6, %v258
    %v260 = vrot.slane %v229, %v259
    %v261 = vlaneseq
    %v262 = vshrl.u32 %v261, 7
    %v263 = vsub.s32 7, %v262
    %v264 = vrot.slane %v229, %v263
    %v265 = vlaneseq
    %v266 = vshrl.u32 %v265, 7
    %v267 = vsub.s32 0, %v266
    %v268 = vrot.slane %v230, %v267
    %v269 = vlaneseq
    %v270 = vshrl.u32 %v269, 7
    %v271 = vsub.s32 1, %v270
    %v272 = vrot.slane %v230, %v271
    %v273 = vlaneseq
    %v274 = vshrl.u32 %v273, 7
    %v275 = vsub.s32 2, %v274
    %v276 = vrot.slane %v230, %v275
    %v277 = vlaneseq
    %v278 = vshrl.u32 %v277, 7
    %v279 = vsub.s32 3, %v278
    %v280 = vrot.slane %v230, %v279
    %v281 = vlaneseq
    %v282 = vshrl.u32 %v281, 7
    %v283 = vsub.s32 4, %v282
    %v284 = vrot.slane %v230, %v283
    %v285 = vlaneseq
    %v286 = vshrl.u32 %v285, 7
    %v287 = vsub.s32 5, %v286
    %v288 = vrot.slane %v230, %v287
    %v289 = vlaneseq
    %v290 = vshrl.u32 %v289, 7
    %v291 = vsub.s32 6, %v290
    %v292 = vrot.slane %v230, %v291
    %v293 = vlaneseq
    %v294 = vshrl.u32 %v293, 7
    %v295 = vsub.s32 7, %v294
    %v296 = vrot.slane %v230, %v295
    %v321 = vunpack.c.l.b16 %v93
    %v322 = vunpack.c.l.b16 %v94
    %v323 = vunpack.c.l.b16 %v95
    %v324 = vunpack.c.l.b16 %v96
    %v325 = vunpack.c.l.b16 %v97
    %v326 = vunpack.c.l.b16 %v98
    %v327 = vunpack.c.l.b16 %v99
    %v328 = vunpack.c.l.b16 %v100
    %v329 = vpack.c.b16 %v322, %v321
    %v330 = vpack.c.b16 %v324, %v323
    %v331 = vpack.c.b16 %v326, %v325
    %v332 = vpack.c.b16 %v328, %v327
    %v465 = vunpack.c.l.b16 %v101
    %v466 = vunpack.c.h.b16 %v101
    %v467 = vunpack.c.l.b16 %v102
    %v468 = vunpack.c.h.b16 %v102
    %v469 = vunpack.c.l.b16 %v103
    %v470 = vunpack.c.h.b16 %v103
    %v471 = vunpack.c.l.b16 %v104
    %v472 = vunpack.c.h.b16 %v104
    %v473 = vunpack.c.l.b16 %v105
    %v474 = vunpack.c.h.b16 %v105
    %v475 = vunpack.c.l.b16 %v106
    %v476 = vunpack.c.h.b16 %v106
    %v477 = vunpack.c.l.b16 %v107
    %v478 = vunpack.c.h.b16 %v107
    %v479 = vunpack.c.l.b16 %v108
    %v480 = vunpack.c.h.b16 %v108
    %v481 = vunpack.c.l.b16 %v109
    %v482 = vunpack.c.h.b16 %v109
    %v483 = vunpack.c.l.b16 %v110
    %v484 = vunpack.c.h.b16 %v110
    %v485 = vunpack.c.l.b16 %v111
    %v486 = vunpack.c.h.b16 %v111
    %v487 = vunpack.c.l.b16 %v112
    %v488 = vunpack.c.h.b16 %v112
    %v489 = vunpack.c.l.b16 %v113
    %v490 = vunpack.c.h.b16 %v113
    %v491 = vunpack.c.l.b16 %v114
    %v492 = vunpack.c.h.b16 %v114
    %v493 = vunpack.c.l.b16 %v115
    %v494 = vunpack.c.h.b16 %v115
    %v495 = vunpack.c.l.b16 %v116
    %v496 = vunpack.c.h.b16 %v116
    %v497 = vunpack.c.l.b16 %v117
    %v498 = vunpack.c.h.b16 %v117
    %v499 = vunpack.c.l.b16 %v118
    %v500 = vunpack.c.h.b16 %v118
    %v501 = vunpack.c.l.b16 %v119
    %v502 = vunpack.c.h.b16 %v119
    %v503 = vunpack.c.l.b16 %v120
    %v504 = vunpack.c.h.b16 %v120
    %v505 = vunpack.c.l.b16 %v121
    %v506 = vunpack.c.h.b16 %v121
    %v507 = vunpack.c.l.b16 %v122
    %v508 = vunpack.c.h.b16 %v122
    %v509 = vunpack.c.l.b16 %v123
    %v510 = vunpack.c.h.b16 %v123
    %v511 = vunpack.c.l.b16 %v124
    %v512 = vunpack.c.h.b16 %v124
    %v513 = vunpack.c.l.b16 %v125
    %v514 = vunpack.c.h.b16 %v125
    %v515 = vunpack.c.l.b16 %v126
    %v516 = vunpack.c.h.b16 %v126
    %v517 = vunpack.c.l.b16 %v127
    %v518 = vunpack.c.h.b16 %v127
    %v519 = vunpack.c.l.b16 %v128
    %v520 = vunpack.c.h.b16 %v128
    %v521 = vunpack.c.l.b16 %v129
    %v522 = vunpack.c.h.b16 %v129
    %v523 = vunpack.c.l.b16 %v130
    %v524 = vunpack.c.h.b16 %v130
    %v525 = vunpack.c.l.b16 %v131
    %v526 = vunpack.c.h.b16 %v131
    %v527 = vunpack.c.l.b16 %v132
    %v528 = vunpack.c.h.b16 %v132
    %v529 = vunpack.c.l.b16 %v133
    %v530 = vunpack.c.h.b16 %v133
    %v531 = vunpack.c.l.b16 %v134
    %v532 = vunpack.c.h.b16 %v134
    %v533 = vunpack.c.l.b16 %v135
    %v534 = vunpack.c.h.b16 %v135
    %v535 = vunpack.c.l.b16 %v136
    %v536 = vunpack.c.h.b16 %v136
    %v537 = vunpack.c.l.b16 %v137
    %v538 = vunpack.c.h.b16 %v137
    %v539 = vunpack.c.l.b16 %v138
    %v540 = vunpack.c.h.b16 %v138
    %v541 = vunpack.c.l.b16 %v139
    %v542 = vunpack.c.h.b16 %v139
    %v543 = vunpack.c.l.b16 %v140
    %v544 = vunpack.c.h.b16 %v140
    %v545 = vunpack.c.l.b16 %v141
    %v546 = vunpack.c.h.b16 %v141
    %v547 = vunpack.c.l.b16 %v142
    %v548 = vunpack.c.h.b16 %v142
    %v549 = vunpack.c.l.b16 %v143
    %v550 = vunpack.c.h.b16 %v143
    %v551 = vunpack.c.l.b16 %v144
    %v552 = vunpack.c.h.b16 %v144
    %v553 = vunpack.c.l.b16 %v145
    %v554 = vunpack.c.h.b16 %v145
    %v555 = vunpack.c.l.b16 %v146
    %v556 = vunpack.c.h.b16 %v146
    %v557 = vunpack.c.l.b16 %v147
    %v558 = vunpack.c.h.b16 %v147
    %v559 = vunpack.c.l.b16 %v148
    %v560 = vunpack.c.h.b16 %v148
    %v561 = vunpack.c.l.b16 %v149
    %v562 = vunpack.c.h.b16 %v149
    %v563 = vunpack.c.l.b16 %v150
    %v564 = vunpack.c.h.b16 %v150
    %v565 = vunpack.c.l.b16 %v151
    %v566 = vunpack.c.h.b16 %v151
    %v567 = vunpack.c.l.b16 %v152
    %v568 = vunpack.c.h.b16 %v152
    %v569 = vunpack.c.l.b16 %v153
    %v570 = vunpack.c.h.b16 %v153
    %v571 = vunpack.c.l.b16 %v154
    %v572 = vunpack.c.h.b16 %v154
    %v573 = vunpack.c.l.b16 %v155
    %v574 = vunpack.c.h.b16 %v155
    %v575 = vunpack.c.l.b16 %v156
    %v576 = vunpack.c.h.b16 %v156
    %v577 = vunpack.c.l.b16 %v157
    %v578 = vunpack.c.h.b16 %v157
    %v579 = vunpack.c.l.b16 %v158
    %v580 = vunpack.c.h.b16 %v158
    %v581 = vunpack.c.l.b16 %v159
    %v582 = vunpack.c.h.b16 %v159
    %v583 = vunpack.c.l.b16 %v160
    %v584 = vunpack.c.h.b16 %v160
    %v585 = vunpack.c.l.b16 %v161
    %v586 = vunpack.c.h.b16 %v161
    %v587 = vunpack.c.l.b16 %v162
    %v588 = vunpack.c.h.b16 %v162
    %v589 = vunpack.c.l.b16 %v163
    %v590 = vunpack.c.h.b16 %v163
    %v591 = vunpack.c.l.b16 %v164
    %v592 = vunpack.c.h.b16 %v164
    %v593 = vunpack.c.l.b16 %v165
    %v594 = vunpack.c.h.b16 %v165
    %v595 = vunpack.c.l.b16 %v166
    %v596 = vunpack.c.h.b16 %v166
    %v597 = vunpack.c.l.b16 %v167
    %v598 = vunpack.c.h.b16 %v167
    %v599 = vunpack.c.l.b16 %v168
    %v600 = vunpack.c.h.b16 %v168
    %v601 = vunpack.c.l.b16 %v169
    %v602 = vunpack.c.h.b16 %v169
    %v603 = vunpack.c.l.b16 %v170
    %v604 = vunpack.c.h.b16 %v170
    %v605 = vunpack.c.l.b16 %v171
    %v606 = vunpack.c.h.b16 %v171
    %v607 = vunpack.c.l.b16 %v172
    %v608 = vunpack.c.h.b16 %v172
    %v609 = vunpack.c.l.b16 %v173
    %v610 = vunpack.c.h.b16 %v173
    %v611 = vunpack.c.l.b16 %v174
    %v612 = vunpack.c.h.b16 %v174
    %v613 = vunpack.c.l.b16 %v175
    %v614 = vunpack.c.h.b16 %v175
    %v615 = vunpack.c.l.b16 %v176
    %v616 = vunpack.c.h.b16 %v176
    %v617 = vunpack.c.l.b16 %v177
    %v618 = vunpack.c.h.b16 %v177
    %v619 = vunpack.c.l.b16 %v178
    %v620 = vunpack.c.h.b16 %v178
    %v621 = vunpack.c.l.b16 %v179
    %v622 = vunpack.c.h.b16 %v179
    %v623 = vunpack.c.l.b16 %v180
    %v624 = vunpack.c.h.b16 %v180
    %v625 = vunpack.c.l.b16 %v181
    %v626 = vunpack.c.h.b16 %v181
    %v627 = vunpack.c.l.b16 %v182
    %v628 = vunpack.c.h.b16 %v182
    %v629 = vunpack.c.l.b16 %v183
    %v630 = vunpack.c.h.b16 %v183
    %v631 = vunpack.c.l.b16 %v184
    %v632 = vunpack.c.h.b16 %v184
    %v633 = vunpack.c.l.b16 %v185
    %v634 = vunpack.c.h.b16 %v185
    %v635 = vunpack.c.l.b16 %v186
    %v636 = vunpack.c.h.b16 %v186
    %v637 = vunpack.c.l.b16 %v187
    %v638 = vunpack.c.h.b16 %v187
    %v639 = vunpack.c.l.b16 %v188
    %v640 = vunpack.c.h.b16 %v188
    %v641 = vunpack.c.l.b16 %v189
    %v642 = vunpack.c.h.b16 %v189
    %v643 = vunpack.c.l.b16 %v190
    %v644 = vunpack.c.h.b16 %v190
    %v645 = vunpack.c.l.b16 %v191
    %v646 = vunpack.c.h.b16 %v191
    %v647 = vunpack.c.l.b16 %v192
    %v648 = vunpack.c.h.b16 %v192
    %v649 = vunpack.c.l.b16 %v193
    %v650 = vunpack.c.h.b16 %v193
    %v651 = vunpack.c.l.b16 %v194
    %v652 = vunpack.c.h.b16 %v194
    %v653 = vunpack.c.l.b16 %v195
    %v654 = vunpack.c.h.b16 %v195
    %v655 = vunpack.c.l.b16 %v196
    %v656 = vunpack.c.h.b16 %v196
    %v657 = vunpack.c.l.b16 %v197
    %v658 = vunpack.c.h.b16 %v197
    %v659 = vunpack.c.l.b16 %v198
    %v660 = vunpack.c.h.b16 %v198
    %v661 = vunpack.c.l.b16 %v199
    %v662 = vunpack.c.h.b16 %v199
    %v663 = vunpack.c.l.b16 %v200
    %v664 = vunpack.c.h.b16 %v200
    %v665 = vunpack.c.l.b16 %v201
    %v666 = vunpack.c.h.b16 %v201
    %v667 = vunpack.c.l.b16 %v202
    %v668 = vunpack.c.h.b16 %v202
    %v669 = vunpack.c.l.b16 %v203
    %v670 = vunpack.c.h.b16 %v203
    %v671 = vunpack.c.l.b16 %v204
    %v672 = vunpack.c.h.b16 %v204
    %v673 = vunpack.c.l.b16 %v205
    %v674 = vunpack.c.h.b16 %v205
    %v675 = vunpack.c.l.b16 %v206
    %v676 = vunpack.c.h.b16 %v206
    %v677 = vunpack.c.l.b16 %v207
    %v678 = vunpack.c.h.b16 %v207
    %v679 = vunpack.c.l.b16 %v208
    %v680 = vunpack.c.h.b16 %v208
    %v681 = vunpack.c.l.b16 %v209
    %v682 = vunpack.c.h.b16 %v209
    %v683 = vunpack.c.l.b16 %v210
    %v684 = vunpack.c.h.b16 %v210
    %v685 = vunpack.c.l.b16 %v211
    %v686 = vunpack.c.h.b16 %v211
    %v687 = vunpack.c.l.b16 %v212
    %v688 = vunpack.c.h.b16 %v212
    %v689 = vunpack.c.l.b16 %v213
    %v690 = vunpack.c.h.b16 %v213
    %v691 = vunpack.c.l.b16 %v214
    %v692 = vunpack.c.h.b16 %v214
    %v693 = vunpack.c.l.b16 %v215
    %v694 = vunpack.c.h.b16 %v215
    %v695 = vunpack.c.l.b16 %v216
    %v696 = vunpack.c.h.b16 %v216
    %v697 = vunpack.c.l.b16 %v217
    %v698 = vunpack.c.h.b16 %v217
    %v699 = vunpack.c.l.b16 %v218
    %v700 = vunpack.c.h.b16 %v218
    %v701 = vunpack.c.l.b16 %v219
    %v702 = vunpack.c.h.b16 %v219
    %v703 = vunpack.c.l.b16 %v220
    %v704 = vunpack.c.h.b16 %v220
    %v705 = vunpack.c.l.b16 %v221
    %v706 = vunpack.c.h.b16 %v221
    %v707 = vunpack.c.l.b16 %v222
    %v708 = vunpack.c.h.b16 %v222
    %v709 = vunpack.c.l.b16 %v223
    %v710 = vunpack.c.h.b16 %v223
    %v711 = vunpack.c.l.b16 %v224
    %v712 = vunpack.c.h.b16 %v224
    %v713 = vunpack.c.l.b16 %v225
    %v714 = vunpack.c.h.b16 %v225
    %v715 = vunpack.c.l.b16 %v226
    %v716 = vunpack.c.h.b16 %v226
    %v717 = vunpack.c.l.b16 %v227
    %v718 = vunpack.c.h.b16 %v227
    %v719 = vunpack.c.l.b16 %v228
    %v720 = vunpack.c.h.b16 %v228
    %v721 = vpack.c.b16 %v481, %v465
    %v722 = vpack.c.b16 %v482, %v466
    %v723 = vpack.c.b16 %v483, %v467
    %v724 = vpack.c.b16 %v484, %v468
    %v725 = vpack.c.b16 %v485, %v469
    %v726 = vpack.c.b16 %v486, %v470
    %v727 = vpack.c.b16 %v487, %v471
    %v728 = vpack.c.b16 %v488, %v472
    %v729 = vpack.c.b16 %v489, %v473
    %v730 = vpack.c.b16 %v490, %v474
    %v731 = vpack.c.b16 %v491, %v475
    %v732 = vpack.c.b16 %v492, %v476
    %v733 = vpack.c.b16 %v493, %v477
    %v734 = vpack.c.b16 %v494, %v478
    %v735 = vpack.c.b16 %v495, %v479
    %v736 = vpack.c.b16 %v496, %v480
    %v737 = vpack.c.b16 %v513, %v497
    %v738 = vpack.c.b16 %v514, %v498
    %v739 = vpack.c.b16 %v515, %v499
    %v740 = vpack.c.b16 %v516, %v500
    %v741 = vpack.c.b16 %v517, %v501
    %v742 = vpack.c.b16 %v518, %v502
    %v743 = vpack.c.b16 %v519, %v503
    %v744 = vpack.c.b16 %v520, %v504
    %v745 = vpack.c.b16 %v521, %v505
    %v746 = vpack.c.b16 %v522, %v506
    %v747 = vpack.c.b16 %v523, %v507
    %v748 = vpack.c.b16 %v524, %v508
    %v749 = vpack.c.b16 %v525, %v509
    %v750 = vpack.c.b16 %v526, %v510
    %v751 = vpack.c.b16 %v527, %v511
    %v752 = vpack.c.b16 %v528, %v512
    %v753 = vpack.c.b16 %v545, %v529
    %v754 = vpack.c.b16 %v546, %v530
    %v755 = vpack.c.b16 %v547, %v531
    %v756 = vpack.c.b16 %v548, %v532
    %v757 = vpack.c.b16 %v549, %v533
    %v758 = vpack.c.b16 %v550, %v534
    %v759 = vpack.c.b16 %v551, %v535
    %v760 = vpack.c.b16 %v552, %v536
    %v761 = vpack.c.b16 %v553, %v537
    %v762 = vpack.c.b16 %v554, %v538
    %v763 = vpack.c.b16 %v555, %v539
    %v764 = vpack.c.b16 %v556, %v540
    %v765 = vpack.c.b16 %v557, %v541
    %v766 = vpack.c.b16 %v558, %v542
    %v767 = vpack.c.b16 %v559, %v543
    %v768 = vpack.c.b16 %v560, %v544
    %v769 = vpack.c.b16 %v577, %v561
    %v770 = vpack.c.b16 %v578, %v562
    %v771 = vpack.c.b16 %v579, %v563
    %v772 = vpack.c.b16 %v580, %v564
    %v773 = vpack.c.b16 %v581, %v565
    %v774 = vpack.c.b16 %v582, %v566
    %v775 = vpack.c.b16 %v583, %v567
    %v776 = vpack.c.b16 %v584, %v568
    %v777 = vpack.c.b16 %v585, %v569
    %v778 = vpack.c.b16 %v586, %v570
    %v779 = vpack.c.b16 %v587, %v571
    %v780 = vpack.c.b16 %v588, %v572
    %v781 = vpack.c.b16 %v589, %v573
    %v782 = vpack.c.b16 %v590, %v574
    %v783 = vpack.c.b16 %v591, %v575
    %v784 = vpack.c.b16 %v592, %v576
    %v785 = vpack.c.b16 %v609, %v593
    %v786 = vpack.c.b16 %v610, %v594
    %v787 = vpack.c.b16 %v611, %v595
    %v788 = vpack.c.b16 %v612, %v596
    %v789 = vpack.c.b16 %v613, %v597
    %v790 = vpack.c.b16 %v614, %v598
    %v791 = vpack.c.b16 %v615, %v599
    %v792 = vpack.c.b16 %v616, %v600
    %v793 = vpack.c.b16 %v617, %v601
    %v794 = vpack.c.b16 %v618, %v602
    %v795 = vpack.c.b16 %v619, %v603
    %v796 = vpack.c.b16 %v620, %v604
    %v797 = vpack.c.b16 %v621, %v605
    %v798 = vpack.c.b16 %v622, %v606
    %v799 = vpack.c.b16 %v623, %v607
    %v800 = vpack.c.b16 %v624, %v608
    %v801 = vpack.c.b16 %v641, %v625
    %v802 = vpack.c.b16 %v642, %v626
    %v803 = vpack.c.b16 %v643, %v627
    %v804 = vpack.c.b16 %v644, %v628
    %v805 = vpack.c.b16 %v645, %v629
    %v806 = vpack.c.b16 %v646, %v630
    %v807 = vpack.c.b16 %v647, %v631
    %v808 = vpack.c.b16 %v648, %v632
    %v809 = vpack.c.b16 %v649, %v633
    %v810 = vpack.c.b16 %v650, %v634
    %v811 = vpack.c.b16 %v651, %v635
    %v812 = vpack.c.b16 %v652, %v636
    %v813 = vpack.c.b16 %v653, %v637
    %v814 = vpack.c.b16 %v654, %v638
    %v815 = vpack.c.b16 %v655, %v639
    %v816 = vpack.c.b16 %v656, %v640
    %v817 = vpack.c.b16 %v673, %v657
    %v818 = vpack.c.b16 %v674, %v658
    %v819 = vpack.c.b16 %v675, %v659
    %v820 = vpack.c.b16 %v676, %v660
    %v821 = vpack.c.b16 %v677, %v661
    %v822 = vpack.c.b16 %v678, %v662
    %v823 = vpack.c.b16 %v679, %v663
    %v824 = vpack.c.b16 %v680, %v664
    %v825 = vpack.c.b16 %v681, %v665
    %v826 = vpack.c.b16 %v682, %v666
    %v827 = vpack.c.b16 %v683, %v667
    %v828 = vpack.c.b16 %v684, %v668
    %v829 = vpack.c.b16 %v685, %v669
    %v830 = vpack.c.b16 %v686, %v670
    %v831 = vpack.c.b16 %v687, %v671
    %v832 = vpack.c.b16 %v688, %v672
    %v833 = vpack.c.b16 %v705, %v689
    %v834 = vpack.c.b16 %v706, %v690
    %v835 = vpack.c.b16 %v707, %v691
    %v836 = vpack.c.b16 %v708, %v692
    %v837 = vpack.c.b16 %v709, %v693
    %v838 = vpack.c.b16 %v710, %v694
    %v839 = vpack.c.b16 %v711, %v695
    %v840 = vpack.c.b16 %v712, %v696
    %v841 = vpack.c.b16 %v713, %v697
    %v842 = vpack.c.b16 %v714, %v698
    %v843 = vpack.c.b16 %v715, %v699
    %v844 = vpack.c.b16 %v716, %v700
    %v845 = vpack.c.b16 %v717, %v701
    %v846 = vpack.c.b16 %v718, %v702
    %v847 = vpack.c.b16 %v719, %v703
    %v848 = vpack.c.b16 %v720, %v704
    %977 = vmatprep.subr.bf16.mxu0 %v722
    %978 = vmatpush1.bf16.msra.mxu0 %v721
    %979 = vmatprep.subr.bf16.mxu0 %v738
    %980 = vmatpush1.bf16.msra.mxu0 %v737
    %981 = vmatprep.subr.bf16.mxu0 %v754
    %982 = vmatpush1.bf16.msra.mxu0 %v753
    %983 = vmatprep.subr.bf16.mxu0 %v770
    %984 = vmatpush1.bf16.msra.mxu0 %v769
    %985 = vmatprep.subr.bf16.mxu0 %v786
    %986 = vmatpush1.bf16.msra.mxu0 %v785
    %987 = vmatprep.subr.bf16.mxu0 %v802
    %988 = vmatpush1.bf16.msra.mxu0 %v801
    %989 = vmatprep.subr.bf16.mxu0 %v818
    %990 = vmatpush1.bf16.msra.mxu0 %v817
    %991 = vmatprep.subr.bf16.mxu0 %v834
    %992 = vmatpush1.bf16.msra.mxu0 %v833
    %993 = vmatprep.subr.bf16.mxu0 0
    %994 = vmatpush1.bf16.msra.mxu0 0
    %995 = vmatprep.subr.bf16.mxu0 0
    %996 = vmatpush1.bf16.msra.mxu0 0
    %997 = vmatprep.subr.bf16.mxu0 0
    %998 = vmatpush1.bf16.msra.mxu0 0
    %999 = vmatprep.subr.bf16.mxu0 0
    %1000 = vmatpush1.bf16.msra.mxu0 0
    %1001 = vmatprep.subr.bf16.mxu0 0
    %1002 = vmatpush1.bf16.msra.mxu0 0
    %1003 = vmatprep.subr.bf16.mxu0 0
    %1004 = vmatpush1.bf16.msra.mxu0 0
    %1005 = vmatprep.subr.bf16.mxu0 0
    %1006 = vmatpush1.bf16.msra.mxu0 0
    %1007 = vmatprep.subr.bf16.mxu0 0
    %1008 = vmatpush1.bf16.msra.mxu0 0
    %1009 = vmatprep.mubr.bf16.mxu0 0
    %1010 = vmatmul.mubr.bf16.gmra.mrb[0].mxu0 %v329
    %v1011 = vpop.f32.mrb[0].mxu0
    %v1012 = vadd.f32 %v236, %v1011
    %v1013 = vpop.f32.mrb[0].mxu0
    %v1014 = vadd.f32 %v240, %v1013
    %v1015 = vpop.f32.mrb[0].mxu0
    %v1016 = vadd.f32 %v236, %v1015
    %v1017 = vpop.f32.mrb[0].mxu0
    %v1018 = vadd.f32 %v240, %v1017
    %1019 = vmatprep.mubr.bf16.mxu0 0
    %1020 = vmatmul.mubr.bf16.gmra.mrb[0].mxu0 %v330
    %v1021 = vpop.f32.mrb[0].mxu0
    %v1022 = vadd.f32 %v236, %v1021
    %v1023 = vpop.f32.mrb[0].mxu0
    %v1024 = vadd.f32 %v240, %v1023
    %v1025 = vpop.f32.mrb[0].mxu0
    %v1026 = vadd.f32 %v236, %v1025
    %v1027 = vpop.f32.mrb[0].mxu0
    %v1028 = vadd.f32 %v240, %v1027
    %1029 = vmatprep.mubr.bf16.mxu0 0
    %1030 = vmatmul.mubr.bf16.gmra.mrb[0].mxu0 %v331
    %v1031 = vpop.f32.mrb[0].mxu0
    %v1032 = vadd.f32 %v236, %v1031
    %v1033 = vpop.f32.mrb[0].mxu0
    %v1034 = vadd.f32 %v240, %v1033
    %v1035 = vpop.f32.mrb[0].mxu0
    %v1036 = vadd.f32 %v236, %v1035
    %v1037 = vpop.f32.mrb[0].mxu0
    %v1038 = vadd.f32 %v240, %v1037
    %1039 = vmatprep.mubr.bf16.mxu0 0
    %1040 = vmatmul.mubr.bf16.gmra.mrb[0].mxu0 %v332
    %v1041 = vpop.f32.mrb[0].mxu0
    %v1042 = vadd.f32 %v236, %v1041
    %v1043 = vpop.f32.mrb[0].mxu0
    %v1044 = vadd.f32 %v240, %v1043
    %v1045 = vpop.f32.mrb[0].mxu0
    %v1046 = vadd.f32 %v236, %v1045
    %v1047 = vpop.f32.mrb[0].mxu0
    %v1048 = vadd.f32 %v240, %v1047
    %1049 = vdwg.mxu0
    %1050 = vmatprep.subr.bf16.mxu0 %v724
    %1051 = vmatpush1.bf16.msra.mxu0 %v723
    %1052 = vmatprep.subr.bf16.mxu0 %v740
    %1053 = vmatpush1.bf16.msra.mxu0 %v739
    %1054 = vmatprep.subr.bf16.mxu0 %v756
    %1055 = vmatpush1.bf16.msra.mxu0 %v755
    %1056 = vmatprep.subr.bf16.mxu0 %v772
    %1057 = vmatpush1.bf16.msra.mxu0 %v771
    %1058 = vmatprep.subr.bf16.mxu0 %v788
    %1059 = vmatpush1.bf16.msra.mxu0 %v787
    %1060 = vmatprep.subr.bf16.mxu0 %v804
    %1061 = vmatpush1.bf16.msra.mxu0 %v803
    %1062 = vmatprep.subr.bf16.mxu0 %v820
    %1063 = vmatpush1.bf16.msra.mxu0 %v819
    %1064 = vmatprep.subr.bf16.mxu0 %v836
    %1065 = vmatpush1.bf16.msra.mxu0 %v835
    %1066 = vmatprep.subr.bf16.mxu0 0
    %1067 = vmatpush1.bf16.msra.mxu0 0
    %1068 = vmatprep.subr.bf16.mxu0 0
    %1069 = vmatpush1.bf16.msra.mxu0 0
    %1070 = vmatprep.subr.bf16.mxu0 0
    %1071 = vmatpush1.bf16.msra.mxu0 0
    %1072 = vmatprep.subr.bf16.mxu0 0
    %1073 = vmatpush1.bf16.msra.mxu0 0
    %1074 = vmatprep.subr.bf16.mxu0 0
    %1075 = vmatpush1.bf16.msra.mxu0 0
    %1076 = vmatprep.subr.bf16.mxu0 0
    %1077 = vmatpush1.bf16.msra.mxu0 0
    %1078 = vmatprep.subr.bf16.mxu0 0
    %1079 = vmatpush1.bf16.msra.mxu0 0
    %1080 = vmatprep.subr.bf16.mxu0 0
    %1081 = vmatpush1.bf16.msra.mxu0 0
    %1082 = vmatprep.mubr.bf16.mxu0 0
    %1083 = vmatmul.mubr.bf16.gmra.mrb[0].mxu0 %v329
    %v1084 = vpop.f32.mrb[0].mxu0
    %v1085 = vadd.f32 %v244, %v1084
    %v1086 = vpop.f32.mrb[0].mxu0
    %v1087 = vadd.f32 %v248, %v1086
    %v1088 = vpop.f32.mrb[0].mxu0
    %v1089 = vadd.f32 %v244, %v1088
    %v1090 = vpop.f32.mrb[0].mxu0
    %v1091 = vadd.f32 %v248, %v1090
    %1092 = vmatprep.mubr.bf16.mxu0 0
    %1093 = vmatmul.mubr.bf16.gmra.mrb[0].mxu0 %v330
    %v1094 = vpop.f32.mrb[0].mxu0
    %v1095 = vadd.f32 %v244, %v1094
    %v1096 = vpop.f32.mrb[0].mxu0
    %v1097 = vadd.f32 %v248, %v1096
    %v1098 = vpop.f32.mrb[0].mxu0
    %v1099 = vadd.f32 %v244, %v1098
    %v1100 = vpop.f32.mrb[0].mxu0
    %v1101 = vadd.f32 %v248, %v1100
    %1102 = vmatprep.mubr.bf16.mxu0 0
    %1103 = vmatmul.mubr.bf16.gmra.mrb[0].mxu0 %v331
    %v1104 = vpop.f32.mrb[0].mxu0
    %v1105 = vadd.f32 %v244, %v1104
    %v1106 = vpop.f32.mrb[0].mxu0
    %v1107 = vadd.f32 %v248, %v1106
    %v1108 = vpop.f32.mrb[0].mxu0
    %v1109 = vadd.f32 %v244, %v1108
    %v1110 = vpop.f32.mrb[0].mxu0
    %v1111 = vadd.f32 %v248, %v1110
    %1112 = vmatprep.mubr.bf16.mxu0 0
    %1113 = vmatmul.mubr.bf16.gmra.mrb[0].mxu0 %v332
    %v1114 = vpop.f32.mrb[0].mxu0
    %v1115 = vadd.f32 %v244, %v1114
    %v1116 = vpop.f32.mrb[0].mxu0
    %v1117 = vadd.f32 %v248, %v1116
    %v1118 = vpop.f32.mrb[0].mxu0
    %v1119 = vadd.f32 %v244, %v1118
    %v1120 = vpop.f32.mrb[0].mxu0
    %v1121 = vadd.f32 %v248, %v1120
    %1122 = vdwg.mxu0
    %1123 = vmatprep.subr.bf16.mxu0 %v726
    %1124 = vmatpush1.bf16.msra.mxu0 %v725
    %1125 = vmatprep.subr.bf16.mxu0 %v742
    %1126 = vmatpush1.bf16.msra.mxu0 %v741
    %1127 = vmatprep.subr.bf16.mxu0 %v758
    %1128 = vmatpush1.bf16.msra.mxu0 %v757
    %1129 = vmatprep.subr.bf16.mxu0 %v774
    %1130 = vmatpush1.bf16.msra.mxu0 %v773
    %1131 = vmatprep.subr.bf16.mxu0 %v790
    %1132 = vmatpush1.bf16.msra.mxu0 %v789
    %1133 = vmatprep.subr.bf16.mxu0 %v806
    %1134 = vmatpush1.bf16.msra.mxu0 %v805
    %1135 = vmatprep.subr.bf16.mxu0 %v822
    %1136 = vmatpush1.bf16.msra.mxu0 %v821
    %1137 = vmatprep.subr.bf16.mxu0 %v838
    %1138 = vmatpush1.bf16.msra.mxu0 %v837
    %1139 = vmatprep.subr.bf16.mxu0 0
    %1140 = vmatpush1.bf16.msra.mxu0 0
    %1141 = vmatprep.subr.bf16.mxu0 0
    %1142 = vmatpush1.bf16.msra.mxu0 0
    %1143 = vmatprep.subr.bf16.mxu0 0
    %1144 = vmatpush1.bf16.msra.mxu0 0
    %1145 = vmatprep.subr.bf16.mxu0 0
    %1146 = vmatpush1.bf16.msra.mxu0 0
    %1147 = vmatprep.subr.bf16.mxu0 0
    %1148 = vmatpush1.bf16.msra.mxu0 0
    %1149 = vmatprep.subr.bf16.mxu0 0
    %1150 = vmatpush1.bf16.msra.mxu0 0
    %1151 = vmatprep.subr.bf16.mxu0 0
    %1152 = vmatpush1.bf16.msra.mxu0 0
    %1153 = vmatprep.subr.bf16.mxu0 0
    %1154 = vmatpush1.bf16.msra.mxu0 0
    %1155 = vmatprep.mubr.bf16.mxu0 0
    %1156 = vmatmul.mubr.bf16.gmra.mrb[0].mxu0 %v329
    %v1157 = vpop.f32.mrb[0].mxu0
    %v1158 = vadd.f32 %v252, %v1157
    %v1159 = vpop.f32.mrb[0].mxu0
    %v1160 = vadd.f32 %v256, %v1159
    %v1161 = vpop.f32.mrb[0].mxu0
    %v1162 = vadd.f32 %v252, %v1161
    %v1163 = vpop.f32.mrb[0].mxu0
    %v1164 = vadd.f32 %v256, %v1163
    %1165 = vmatprep.mubr.bf16.mxu0 0
    %1166 = vmatmul.mubr.bf16.gmra.mrb[0].mxu0 %v330
    %v1167 = vpop.f32.mrb[0].mxu0
    %v1168 = vadd.f32 %v252, %v1167
    %v1169 = vpop.f32.mrb[0].mxu0
    %v1170 = vadd.f32 %v256, %v1169
    %v1171 = vpop.f32.mrb[0].mxu0
    %v1172 = vadd.f32 %v252, %v1171
    %v1173 = vpop.f32.mrb[0].mxu0
    %v1174 = vadd.f32 %v256, %v1173
    %1175 = vmatprep.mubr.bf16.mxu0 0
    %1176 = vmatmul.mubr.bf16.gmra.mrb[0].mxu0 %v331
    %v1177 = vpop.f32.mrb[0].mxu0
    %v1178 = vadd.f32 %v252, %v1177
    %v1179 = vpop.f32.mrb[0].mxu0
    %v1180 = vadd.f32 %v256, %v1179
    %v1181 = vpop.f32.mrb[0].mxu0
    %v1182 = vadd.f32 %v252, %v1181
    %v1183 = vpop.f32.mrb[0].mxu0
    %v1184 = vadd.f32 %v256, %v1183
    %1185 = vmatprep.mubr.bf16.mxu0 0
    %1186 = vmatmul.mubr.bf16.gmra.mrb[0].mxu0 %v332
    %v1187 = vpop.f32.mrb[0].mxu0
    %v1188 = vadd.f32 %v252, %v1187
    %v1189 = vpop.f32.mrb[0].mxu0
    %v1190 = vadd.f32 %v256, %v1189
    %v1191 = vpop.f32.mrb[0].mxu0
    %v1192 = vadd.f32 %v252, %v1191
    %v1193 = vpop.f32.mrb[0].mxu0
    %v1194 = vadd.f32 %v256, %v1193
    %1195 = vdwg.mxu0
    %1196 = vmatprep.subr.bf16.mxu0 %v728
    %1197 = vmatpush1.bf16.msra.mxu0 %v727
    %1198 = vmatprep.subr.bf16.mxu0 %v744
    %1199 = vmatpush1.bf16.msra.mxu0 %v743
    %1200 = vmatprep.subr.bf16.mxu0 %v760
    %1201 = vmatpush1.bf16.msra.mxu0 %v759
    %1202 = vmatprep.subr.bf16.mxu0 %v776
    %1203 = vmatpush1.bf16.msra.mxu0 %v775
    %1204 = vmatprep.subr.bf16.mxu0 %v792
    %1205 = vmatpush1.bf16.msra.mxu0 %v791
    %1206 = vmatprep.subr.bf16.mxu0 %v808
    %1207 = vmatpush1.bf16.msra.mxu0 %v807
    %1208 = vmatprep.subr.bf16.mxu0 %v824
    %1209 = vmatpush1.bf16.msra.mxu0 %v823
    %1210 = vmatprep.subr.bf16.mxu0 %v840
    %1211 = vmatpush1.bf16.msra.mxu0 %v839
    %1212 = vmatprep.subr.bf16.mxu0 0
    %1213 = vmatpush1.bf16.msra.mxu0 0
    %1214 = vmatprep.subr.bf16.mxu0 0
    %1215 = vmatpush1.bf16.msra.mxu0 0
    %1216 = vmatprep.subr.bf16.mxu0 0
    %1217 = vmatpush1.bf16.msra.mxu0 0
    %1218 = vmatprep.subr.bf16.mxu0 0
    %1219 = vmatpush1.bf16.msra.mxu0 0
    %1220 = vmatprep.subr.bf16.mxu0 0
    %1221 = vmatpush1.bf16.msra.mxu0 0
    %1222 = vmatprep.subr.bf16.mxu0 0
    %1223 = vmatpush1.bf16.msra.mxu0 0
    %1224 = vmatprep.subr.bf16.mxu0 0
    %1225 = vmatpush1.bf16.msra.mxu0 0
    %1226 = vmatprep.subr.bf16.mxu0 0
    %1227 = vmatpush1.bf16.msra.mxu0 0
    %1228 = vmatprep.mubr.bf16.mxu0 0
    %1229 = vmatmul.mubr.bf16.gmra.mrb[0].mxu0 %v329
    %v1230 = vpop.f32.mrb[0].mxu0
    %v1231 = vadd.f32 %v260, %v1230
    %v1232 = vpop.f32.mrb[0].mxu0
    %v1233 = vadd.f32 %v264, %v1232
    %v1234 = vpop.f32.mrb[0].mxu0
    %v1235 = vadd.f32 %v260, %v1234
    %v1236 = vpop.f32.mrb[0].mxu0
    %v1237 = vadd.f32 %v264, %v1236
    %1238 = vmatprep.mubr.bf16.mxu0 0
    %1239 = vmatmul.mubr.bf16.gmra.mrb[0].mxu0 %v330
    %v1240 = vpop.f32.mrb[0].mxu0
    %v1241 = vadd.f32 %v260, %v1240
    %v1242 = vpop.f32.mrb[0].mxu0
    %v1243 = vadd.f32 %v264, %v1242
    %v1244 = vpop.f32.mrb[0].mxu0
    %v1245 = vadd.f32 %v260, %v1244
    %v1246 = vpop.f32.mrb[0].mxu0
    %v1247 = vadd.f32 %v264, %v1246
    %1248 = vmatprep.mubr.bf16.mxu0 0
    %1249 = vmatmul.mubr.bf16.gmra.mrb[0].mxu0 %v331
    %v1250 = vpop.f32.mrb[0].mxu0
    %v1251 = vadd.f32 %v260, %v1250
    %v1252 = vpop.f32.mrb[0].mxu0
    %v1253 = vadd.f32 %v264, %v1252
    %v1254 = vpop.f32.mrb[0].mxu0
    %v1255 = vadd.f32 %v260, %v1254
    %v1256 = vpop.f32.mrb[0].mxu0
    %v1257 = vadd.f32 %v264, %v1256
    %1258 = vmatprep.mubr.bf16.mxu0 0
    %1259 = vmatmul.mubr.bf16.gmra.mrb[0].mxu0 %v332
    %v1260 = vpop.f32.mrb[0].mxu0
    %v1261 = vadd.f32 %v260, %v1260
    %v1262 = vpop.f32.mrb[0].mxu0
    %v1263 = vadd.f32 %v264, %v1262
    %v1264 = vpop.f32.mrb[0].mxu0
    %v1265 = vadd.f32 %v260, %v1264
    %v1266 = vpop.f32.mrb[0].mxu0
    %v1267 = vadd.f32 %v264, %v1266
    %1268 = vdwg.mxu0
    %1269 = vmatprep.subr.bf16.mxu0 %v730
    %1270 = vmatpush1.bf16.msra.mxu0 %v729
    %1271 = vmatprep.subr.bf16.mxu0 %v746
    %1272 = vmatpush1.bf16.msra.mxu0 %v745
    %1273 = vmatprep.subr.bf16.mxu0 %v762
    %1274 = vmatpush1.bf16.msra.mxu0 %v761
    %1275 = vmatprep.subr.bf16.mxu0 %v778
    %1276 = vmatpush1.bf16.msra.mxu0 %v777
    %1277 = vmatprep.subr.bf16.mxu0 %v794
    %1278 = vmatpush1.bf16.msra.mxu0 %v793
    %1279 = vmatprep.subr.bf16.mxu0 %v810
    %1280 = vmatpush1.bf16.msra.mxu0 %v809
    %1281 = vmatprep.subr.bf16.mxu0 %v826
    %1282 = vmatpush1.bf16.msra.mxu0 %v825
    %1283 = vmatprep.subr.bf16.mxu0 %v842
    %1284 = vmatpush1.bf16.msra.mxu0 %v841
    %1285 = vmatprep.subr.bf16.mxu0 0
    %1286 = vmatpush1.bf16.msra.mxu0 0
    %1287 = vmatprep.subr.bf16.mxu0 0
    %1288 = vmatpush1.bf16.msra.mxu0 0
    %1289 = vmatprep.subr.bf16.mxu0 0
    %1290 = vmatpush1.bf16.msra.mxu0 0
    %1291 = vmatprep.subr.bf16.mxu0 0
    %1292 = vmatpush1.bf16.msra.mxu0 0
    %1293 = vmatprep.subr.bf16.mxu0 0
    %1294 = vmatpush1.bf16.msra.mxu0 0
    %1295 = vmatprep.subr.bf16.mxu0 0
    %1296 = vmatpush1.bf16.msra.mxu0 0
    %1297 = vmatprep.subr.bf16.mxu0 0
    %1298 = vmatpush1.bf16.msra.mxu0 0
    %1299 = vmatprep.subr.bf16.mxu0 0
    %1300 = vmatpush1.bf16.msra.mxu0 0
    %1301 = vmatprep.mubr.bf16.mxu0 0
    %1302 = vmatmul.mubr.bf16.gmra.mrb[0].mxu0 %v329
    %v1303 = vpop.f32.mrb[0].mxu0
    %v1304 = vadd.f32 %v268, %v1303
    %v1305 = vpop.f32.mrb[0].mxu0
    %v1306 = vadd.f32 %v272, %v1305
    %v1307 = vpop.f32.mrb[0].mxu0
    %v1308 = vadd.f32 %v268, %v1307
    %v1309 = vpop.f32.mrb[0].mxu0
    %v1310 = vadd.f32 %v272, %v1309
    %1311 = vmatprep.mubr.bf16.mxu0 0
    %1312 = vmatmul.mubr.bf16.gmra.mrb[0].mxu0 %v330
    %v1313 = vpop.f32.mrb[0].mxu0
    %v1314 = vadd.f32 %v268, %v1313
    %v1315 = vpop.f32.mrb[0].mxu0
    %v1316 = vadd.f32 %v272, %v1315
    %v1317 = vpop.f32.mrb[0].mxu0
    %v1318 = vadd.f32 %v268, %v1317
    %v1319 = vpop.f32.mrb[0].mxu0
    %v1320 = vadd.f32 %v272, %v1319
    %1321 = vmatprep.mubr.bf16.mxu0 0
    %1322 = vmatmul.mubr.bf16.gmra.mrb[0].mxu0 %v331
    %v1323 = vpop.f32.mrb[0].mxu0
    %v1324 = vadd.f32 %v268, %v1323
    %v1325 = vpop.f32.mrb[0].mxu0
    %v1326 = vadd.f32 %v272, %v1325
    %v1327 = vpop.f32.mrb[0].mxu0
    %v1328 = vadd.f32 %v268, %v1327
    %v1329 = vpop.f32.mrb[0].mxu0
    %v1330 = vadd.f32 %v272, %v1329
    %1331 = vmatprep.mubr.bf16.mxu0 0
    %1332 = vmatmul.mubr.bf16.gmra.mrb[0].mxu0 %v332
    %v1333 = vpop.f32.mrb[0].mxu0
    %v1334 = vadd.f32 %v268, %v1333
    %v1335 = vpop.f32.mrb[0].mxu0
    %v1336 = vadd.f32 %v272, %v1335
    %v1337 = vpop.f32.mrb[0].mxu0
    %v1338 = vadd.f32 %v268, %v1337
    %v1339 = vpop.f32.mrb[0].mxu0
    %v1340 = vadd.f32 %v272, %v1339
    %1341 = vdwg.mxu0
    %1342 = vmatprep.subr.bf16.mxu0 %v732
    %1343 = vmatpush1.bf16.msra.mxu0 %v731
    %1344 = vmatprep.subr.bf16.mxu0 %v748
    %1345 = vmatpush1.bf16.msra.mxu0 %v747
    %1346 = vmatprep.subr.bf16.mxu0 %v764
    %1347 = vmatpush1.bf16.msra.mxu0 %v763
    %1348 = vmatprep.subr.bf16.mxu0 %v780
    %1349 = vmatpush1.bf16.msra.mxu0 %v779
    %1350 = vmatprep.subr.bf16.mxu0 %v796
    %1351 = vmatpush1.bf16.msra.mxu0 %v795
    %1352 = vmatprep.subr.bf16.mxu0 %v812
    %1353 = vmatpush1.bf16.msra.mxu0 %v811
    %1354 = vmatprep.subr.bf16.mxu0 %v828
    %1355 = vmatpush1.bf16.msra.mxu0 %v827
    %1356 = vmatprep.subr.bf16.mxu0 %v844
    %1357 = vmatpush1.bf16.msra.mxu0 %v843
    %1358 = vmatprep.subr.bf16.mxu0 0
    %1359 = vmatpush1.bf16.msra.mxu0 0
    %1360 = vmatprep.subr.bf16.mxu0 0
    %1361 = vmatpush1.bf16.msra.mxu0 0
    %1362 = vmatprep.subr.bf16.mxu0 0
    %1363 = vmatpush1.bf16.msra.mxu0 0
    %1364 = vmatprep.subr.bf16.mxu0 0
    %1365 = vmatpush1.bf16.msra.mxu0 0
    %1366 = vmatprep.subr.bf16.mxu0 0
    %1367 = vmatpush1.bf16.msra.mxu0 0
    %1368 = vmatprep.subr.bf16.mxu0 0
    %1369 = vmatpush1.bf16.msra.mxu0 0
    %1370 = vmatprep.subr.bf16.mxu0 0
    %1371 = vmatpush1.bf16.msra.mxu0 0
    %1372 = vmatprep.subr.bf16.mxu0 0
    %1373 = vmatpush1.bf16.msra.mxu0 0
    %1374 = vmatprep.mubr.bf16.mxu0 0
    %1375 = vmatmul.mubr.bf16.gmra.mrb[0].mxu0 %v329
    %v1376 = vpop.f32.mrb[0].mxu0
    %v1377 = vadd.f32 %v276, %v1376
    %v1378 = vpop.f32.mrb[0].mxu0
    %v1379 = vadd.f32 %v280, %v1378
    %v1380 = vpop.f32.mrb[0].mxu0
    %v1381 = vadd.f32 %v276, %v1380
    %v1382 = vpop.f32.mrb[0].mxu0
    %v1383 = vadd.f32 %v280, %v1382
    %1384 = vmatprep.mubr.bf16.mxu0 0
    %1385 = vmatmul.mubr.bf16.gmra.mrb[0].mxu0 %v330
    %v1386 = vpop.f32.mrb[0].mxu0
    %v1387 = vadd.f32 %v276, %v1386
    %v1388 = vpop.f32.mrb[0].mxu0
    %v1389 = vadd.f32 %v280, %v1388
    %v1390 = vpop.f32.mrb[0].mxu0
    %v1391 = vadd.f32 %v276, %v1390
    %v1392 = vpop.f32.mrb[0].mxu0
    %v1393 = vadd.f32 %v280, %v1392
    %1394 = vmatprep.mubr.bf16.mxu0 0
    %1395 = vmatmul.mubr.bf16.gmra.mrb[0].mxu0 %v331
    %v1396 = vpop.f32.mrb[0].mxu0
    %v1397 = vadd.f32 %v276, %v1396
    %v1398 = vpop.f32.mrb[0].mxu0
    %v1399 = vadd.f32 %v280, %v1398
    %v1400 = vpop.f32.mrb[0].mxu0
    %v1401 = vadd.f32 %v276, %v1400
    %v1402 = vpop.f32.mrb[0].mxu0
    %v1403 = vadd.f32 %v280, %v1402
    %1404 = vmatprep.mubr.bf16.mxu0 0
    %1405 = vmatmul.mubr.bf16.gmra.mrb[0].mxu0 %v332
    %v1406 = vpop.f32.mrb[0].mxu0
    %v1407 = vadd.f32 %v276, %v1406
    %v1408 = vpop.f32.mrb[0].mxu0
    %v1409 = vadd.f32 %v280, %v1408
    %v1410 = vpop.f32.mrb[0].mxu0
    %v1411 = vadd.f32 %v276, %v1410
    %v1412 = vpop.f32.mrb[0].mxu0
    %v1413 = vadd.f32 %v280, %v1412
    %1414 = vdwg.mxu0
    %1415 = vmatprep.subr.bf16.mxu0 %v734
    %1416 = vmatpush1.bf16.msra.mxu0 %v733
    %1417 = vmatprep.subr.bf16.mxu0 %v750
    %1418 = vmatpush1.bf16.msra.mxu0 %v749
    %1419 = vmatprep.subr.bf16.mxu0 %v766
    %1420 = vmatpush1.bf16.msra.mxu0 %v765
    %1421 = vmatprep.subr.bf16.mxu0 %v782
    %1422 = vmatpush1.bf16.msra.mxu0 %v781
    %1423 = vmatprep.subr.bf16.mxu0 %v798
    %1424 = vmatpush1.bf16.msra.mxu0 %v797
    %1425 = vmatprep.subr.bf16.mxu0 %v814
    %1426 = vmatpush1.bf16.msra.mxu0 %v813
    %1427 = vmatprep.subr.bf16.mxu0 %v830
    %1428 = vmatpush1.bf16.msra.mxu0 %v829
    %1429 = vmatprep.subr.bf16.mxu0 %v846
    %1430 = vmatpush1.bf16.msra.mxu0 %v845
    %1431 = vmatprep.subr.bf16.mxu0 0
    %1432 = vmatpush1.bf16.msra.mxu0 0
    %1433 = vmatprep.subr.bf16.mxu0 0
    %1434 = vmatpush1.bf16.msra.mxu0 0
    %1435 = vmatprep.subr.bf16.mxu0 0
    %1436 = vmatpush1.bf16.msra.mxu0 0
    %1437 = vmatprep.subr.bf16.mxu0 0
    %1438 = vmatpush1.bf16.msra.mxu0 0
    %1439 = vmatprep.subr.bf16.mxu0 0
    %1440 = vmatpush1.bf16.msra.mxu0 0
    %1441 = vmatprep.subr.bf16.mxu0 0
    %1442 = vmatpush1.bf16.msra.mxu0 0
    %1443 = vmatprep.subr.bf16.mxu0 0
    %1444 = vmatpush1.bf16.msra.mxu0 0
    %1445 = vmatprep.subr.bf16.mxu0 0
    %1446 = vmatpush1.bf16.msra.mxu0 0
    %1447 = vmatprep.mubr.bf16.mxu0 0
    %1448 = vmatmul.mubr.bf16.gmra.mrb[0].mxu0 %v329
    %v1449 = vpop.f32.mrb[0].mxu0
    %v1450 = vadd.f32 %v284, %v1449
    %v1451 = vpop.f32.mrb[0].mxu0
    %v1452 = vadd.f32 %v288, %v1451
    %v1453 = vpop.f32.mrb[0].mxu0
    %v1454 = vadd.f32 %v284, %v1453
    %v1455 = vpop.f32.mrb[0].mxu0
    %v1456 = vadd.f32 %v288, %v1455
    %1457 = vmatprep.mubr.bf16.mxu0 0
    %1458 = vmatmul.mubr.bf16.gmra.mrb[0].mxu0 %v330
    %v1459 = vpop.f32.mrb[0].mxu0
    %v1460 = vadd.f32 %v284, %v1459
    %v1461 = vpop.f32.mrb[0].mxu0
    %v1462 = vadd.f32 %v288, %v1461
    %v1463 = vpop.f32.mrb[0].mxu0
    %v1464 = vadd.f32 %v284, %v1463
    %v1465 = vpop.f32.mrb[0].mxu0
    %v1466 = vadd.f32 %v288, %v1465
    %1467 = vmatprep.mubr.bf16.mxu0 0
    %1468 = vmatmul.mubr.bf16.gmra.mrb[0].mxu0 %v331
    %v1469 = vpop.f32.mrb[0].mxu0
    %v1470 = vadd.f32 %v284, %v1469
    %v1471 = vpop.f32.mrb[0].mxu0
    %v1472 = vadd.f32 %v288, %v1471
    %v1473 = vpop.f32.mrb[0].mxu0
    %v1474 = vadd.f32 %v284, %v1473
    %v1475 = vpop.f32.mrb[0].mxu0
    %v1476 = vadd.f32 %v288, %v1475
    %1477 = vmatprep.mubr.bf16.mxu0 0
    %1478 = vmatmul.mubr.bf16.gmra.mrb[0].mxu0 %v332
    %v1479 = vpop.f32.mrb[0].mxu0
    %v1480 = vadd.f32 %v284, %v1479
    %v1481 = vpop.f32.mrb[0].mxu0
    %v1482 = vadd.f32 %v288, %v1481
    %v1483 = vpop.f32.mrb[0].mxu0
    %v1484 = vadd.f32 %v284, %v1483
    %v1485 = vpop.f32.mrb[0].mxu0
    %v1486 = vadd.f32 %v288, %v1485
    %1487 = vdwg.mxu0
    %1488 = vmatprep.subr.bf16.mxu0 %v736
    %1489 = vmatpush1.bf16.msra.mxu0 %v735
    %1490 = vmatprep.subr.bf16.mxu0 %v752
    %1491 = vmatpush1.bf16.msra.mxu0 %v751
    %1492 = vmatprep.subr.bf16.mxu0 %v768
    %1493 = vmatpush1.bf16.msra.mxu0 %v767
    %1494 = vmatprep.subr.bf16.mxu0 %v784
    %1495 = vmatpush1.bf16.msra.mxu0 %v783
    %1496 = vmatprep.subr.bf16.mxu0 %v800
    %1497 = vmatpush1.bf16.msra.mxu0 %v799
    %1498 = vmatprep.subr.bf16.mxu0 %v816
    %1499 = vmatpush1.bf16.msra.mxu0 %v815
    %1500 = vmatprep.subr.bf16.mxu0 %v832
    %1501 = vmatpush1.bf16.msra.mxu0 %v831
    %1502 = vmatprep.subr.bf16.mxu0 %v848
    %1503 = vmatpush1.bf16.msra.mxu0 %v847
    %1504 = vmatprep.subr.bf16.mxu0 0
    %1505 = vmatpush1.bf16.msra.mxu0 0
    %1506 = vmatprep.subr.bf16.mxu0 0
    %1507 = vmatpush1.bf16.msra.mxu0 0
    %1508 = vmatprep.subr.bf16.mxu0 0
    %1509 = vmatpush1.bf16.msra.mxu0 0
    %1510 = vmatprep.subr.bf16.mxu0 0
    %1511 = vmatpush1.bf16.msra.mxu0 0
    %1512 = vmatprep.subr.bf16.mxu0 0
    %1513 = vmatpush1.bf16.msra.mxu0 0
    %1514 = vmatprep.subr.bf16.mxu0 0
    %1515 = vmatpush1.bf16.msra.mxu0 0
    %1516 = vmatprep.subr.bf16.mxu0 0
    %1517 = vmatpush1.bf16.msra.mxu0 0
    %1518 = vmatprep.subr.bf16.mxu0 0
    %1519 = vmatpush1.bf16.msra.mxu0 0
    %1520 = vmatprep.mubr.bf16.mxu0 0
    %1521 = vmatmul.mubr.bf16.gmra.mrb[0].mxu0 %v329
    %v1522 = vpop.f32.mrb[0].mxu0
    %v1523 = vadd.f32 %v292, %v1522
    %v1524 = vpop.f32.mrb[0].mxu0
    %v1525 = vadd.f32 %v296, %v1524
    %v1526 = vpop.f32.mrb[0].mxu0
    %v1527 = vadd.f32 %v292, %v1526
    %v1528 = vpop.f32.mrb[0].mxu0
    %v1529 = vadd.f32 %v296, %v1528
    %1530 = vmatprep.mubr.bf16.mxu0 0
    %1531 = vmatmul.mubr.bf16.gmra.mrb[0].mxu0 %v330
    %v1532 = vpop.f32.mrb[0].mxu0
    %v1533 = vadd.f32 %v292, %v1532
    %v1534 = vpop.f32.mrb[0].mxu0
    %v1535 = vadd.f32 %v296, %v1534
    %v1536 = vpop.f32.mrb[0].mxu0
    %v1537 = vadd.f32 %v292, %v1536
    %v1538 = vpop.f32.mrb[0].mxu0
    %v1539 = vadd.f32 %v296, %v1538
    %1540 = vmatprep.mubr.bf16.mxu0 0
    %1541 = vmatmul.mubr.bf16.gmra.mrb[0].mxu0 %v331
    %v1542 = vpop.f32.mrb[0].mxu0
    %v1543 = vadd.f32 %v292, %v1542
    %v1544 = vpop.f32.mrb[0].mxu0
    %v1545 = vadd.f32 %v296, %v1544
    %v1546 = vpop.f32.mrb[0].mxu0
    %v1547 = vadd.f32 %v292, %v1546
    %v1548 = vpop.f32.mrb[0].mxu0
    %v1549 = vadd.f32 %v296, %v1548
    %1550 = vmatprep.mubr.bf16.mxu0 0
    %1551 = vmatmul.mubr.bf16.gmra.mrb[0].mxu0 %v332
    %v1552 = vpop.f32.mrb[0].mxu0
    %v1553 = vadd.f32 %v292, %v1552
    %v1554 = vpop.f32.mrb[0].mxu0
    %v1555 = vadd.f32 %v296, %v1554
    %v1556 = vpop.f32.mrb[0].mxu0
    %v1557 = vadd.f32 %v292, %v1556
    %v1558 = vpop.f32.mrb[0].mxu0
    %v1559 = vadd.f32 %v296, %v1558
    %1560 = vdwg.mxu0
    %v1561 = vmax.f32 %v1012, 0.0
    %v1562 = vmax.f32 %v1014, 0.0
    %v1563 = vmax.f32 %v1085, 0.0
    %v1564 = vmax.f32 %v1087, 0.0
    %v1565 = vmax.f32 %v1158, 0.0
    %v1566 = vmax.f32 %v1160, 0.0
    %v1567 = vmax.f32 %v1231, 0.0
    %v1568 = vmax.f32 %v1233, 0.0
    %v1569 = vmax.f32 %v1304, 0.0
    %v1570 = vmax.f32 %v1306, 0.0
    %v1571 = vmax.f32 %v1377, 0.0
    %v1572 = vmax.f32 %v1379, 0.0
    %v1573 = vmax.f32 %v1450, 0.0
    %v1574 = vmax.f32 %v1452, 0.0
    %v1575 = vmax.f32 %v1523, 0.0
    %v1576 = vmax.f32 %v1525, 0.0
    %v1577 = vmax.f32 %v1016, 0.0
    %v1578 = vmax.f32 %v1018, 0.0
    %v1579 = vmax.f32 %v1089, 0.0
    %v1580 = vmax.f32 %v1091, 0.0
    %v1581 = vmax.f32 %v1162, 0.0
    %v1582 = vmax.f32 %v1164, 0.0
    %v1583 = vmax.f32 %v1235, 0.0
    %v1584 = vmax.f32 %v1237, 0.0
    %v1585 = vmax.f32 %v1308, 0.0
    %v1586 = vmax.f32 %v1310, 0.0
    %v1587 = vmax.f32 %v1381, 0.0
    %v1588 = vmax.f32 %v1383, 0.0
    %v1589 = vmax.f32 %v1454, 0.0
    %v1590 = vmax.f32 %v1456, 0.0
    %v1591 = vmax.f32 %v1527, 0.0
    %v1592 = vmax.f32 %v1529, 0.0
    %v1593 = vmax.f32 %v1022, 0.0
    %v1594 = vmax.f32 %v1024, 0.0
    %v1595 = vmax.f32 %v1095, 0.0
    %v1596 = vmax.f32 %v1097, 0.0
    %v1597 = vmax.f32 %v1168, 0.0
    %v1598 = vmax.f32 %v1170, 0.0
    %v1599 = vmax.f32 %v1241, 0.0
    %v1600 = vmax.f32 %v1243, 0.0
    %v1601 = vmax.f32 %v1314, 0.0
    %v1602 = vmax.f32 %v1316, 0.0
    %v1603 = vmax.f32 %v1387, 0.0
    %v1604 = vmax.f32 %v1389, 0.0
    %v1605 = vmax.f32 %v1460, 0.0
    %v1606 = vmax.f32 %v1462, 0.0
    %v1607 = vmax.f32 %v1533, 0.0
    %v1608 = vmax.f32 %v1535, 0.0
    %v1609 = vmax.f32 %v1026, 0.0
    %v1610 = vmax.f32 %v1028, 0.0
    %v1611 = vmax.f32 %v1099, 0.0
    %v1612 = vmax.f32 %v1101, 0.0
    %v1613 = vmax.f32 %v1172, 0.0
    %v1614 = vmax.f32 %v1174, 0.0
    %v1615 = vmax.f32 %v1245, 0.0
    %v1616 = vmax.f32 %v1247, 0.0
    %v1617 = vmax.f32 %v1318, 0.0
    %v1618 = vmax.f32 %v1320, 0.0
    %v1619 = vmax.f32 %v1391, 0.0
    %v1620 = vmax.f32 %v1393, 0.0
    %v1621 = vmax.f32 %v1464, 0.0
    %v1622 = vmax.f32 %v1466, 0.0
    %v1623 = vmax.f32 %v1537, 0.0
    %v1624 = vmax.f32 %v1539, 0.0
    %v1625 = vmax.f32 %v1032, 0.0
    %v1626 = vmax.f32 %v1034, 0.0
    %v1627 = vmax.f32 %v1105, 0.0
    %v1628 = vmax.f32 %v1107, 0.0
    %v1629 = vmax.f32 %v1178, 0.0
    %v1630 = vmax.f32 %v1180, 0.0
    %v1631 = vmax.f32 %v1251, 0.0
    %v1632 = vmax.f32 %v1253, 0.0
    %v1633 = vmax.f32 %v1324, 0.0
    %v1634 = vmax.f32 %v1326, 0.0
    %v1635 = vmax.f32 %v1397, 0.0
    %v1636 = vmax.f32 %v1399, 0.0
    %v1637 = vmax.f32 %v1470, 0.0
    %v1638 = vmax.f32 %v1472, 0.0
    %v1639 = vmax.f32 %v1543, 0.0
    %v1640 = vmax.f32 %v1545, 0.0
    %v1641 = vmax.f32 %v1036, 0.0
    %v1642 = vmax.f32 %v1038, 0.0
    %v1643 = vmax.f32 %v1109, 0.0
    %v1644 = vmax.f32 %v1111, 0.0
    %v1645 = vmax.f32 %v1182, 0.0
    %v1646 = vmax.f32 %v1184, 0.0
    %v1647 = vmax.f32 %v1255, 0.0
    %v1648 = vmax.f32 %v1257, 0.0
    %v1649 = vmax.f32 %v1328, 0.0
    %v1650 = vmax.f32 %v1330, 0.0
    %v1651 = vmax.f32 %v1401, 0.0
    %v1652 = vmax.f32 %v1403, 0.0
    %v1653 = vmax.f32 %v1474, 0.0
    %v1654 = vmax.f32 %v1476, 0.0
    %v1655 = vmax.f32 %v1547, 0.0
    %v1656 = vmax.f32 %v1549, 0.0
    %v1657 = vmax.f32 %v1042, 0.0
    %v1658 = vmax.f32 %v1044, 0.0
    %v1659 = vmax.f32 %v1115, 0.0
    %v1660 = vmax.f32 %v1117, 0.0
    %v1661 = vmax.f32 %v1188, 0.0
    %v1662 = vmax.f32 %v1190, 0.0
    %v1663 = vmax.f32 %v1261, 0.0
    %v1664 = vmax.f32 %v1263, 0.0
    %v1665 = vmax.f32 %v1334, 0.0
    %v1666 = vmax.f32 %v1336, 0.0
    %v1667 = vmax.f32 %v1407, 0.0
    %v1668 = vmax.f32 %v1409, 0.0
    %v1669 = vmax.f32 %v1480, 0.0
    %v1670 = vmax.f32 %v1482, 0.0
    %v1671 = vmax.f32 %v1553, 0.0
    %v1672 = vmax.f32 %v1555, 0.0
    %v1673 = vmax.f32 %v1046, 0.0
    %v1674 = vmax.f32 %v1048, 0.0
    %v1675 = vmax.f32 %v1119, 0.0
    %v1676 = vmax.f32 %v1121, 0.0
    %v1677 = vmax.f32 %v1192, 0.0
    %v1678 = vmax.f32 %v1194, 0.0
    %v1679 = vmax.f32 %v1265, 0.0
    %v1680 = vmax.f32 %v1267, 0.0
    %v1681 = vmax.f32 %v1338, 0.0
    %v1682 = vmax.f32 %v1340, 0.0
    %v1683 = vmax.f32 %v1411, 0.0
    %v1684 = vmax.f32 %v1413, 0.0
    %v1685 = vmax.f32 %v1484, 0.0
    %v1686 = vmax.f32 %v1486, 0.0
    %v1687 = vmax.f32 %v1557, 0.0
    %v1688 = vmax.f32 %v1559, 0.0
    %v1689 = vpack.c.bf16 %v1577, %v1561
    %v1690 = vpack.c.bf16 %v1578, %v1562
    %v1691 = vpack.c.bf16 %v1579, %v1563
    %v1692 = vpack.c.bf16 %v1580, %v1564
    %v1693 = vpack.c.bf16 %v1581, %v1565
    %v1694 = vpack.c.bf16 %v1582, %v1566
    %v1695 = vpack.c.bf16 %v1583, %v1567
    %v1696 = vpack.c.bf16 %v1584, %v1568
    %v1697 = vpack.c.bf16 %v1585, %v1569
    %v1698 = vpack.c.bf16 %v1586, %v1570
    %v1699 = vpack.c.bf16 %v1587, %v1571
    %v1700 = vpack.c.bf16 %v1588, %v1572
    %v1701 = vpack.c.bf16 %v1589, %v1573
    %v1702 = vpack.c.bf16 %v1590, %v1574
    %v1703 = vpack.c.bf16 %v1591, %v1575
    %v1704 = vpack.c.bf16 %v1592, %v1576
    %v1705 = vpack.c.bf16 %v1609, %v1593
    %v1706 = vpack.c.bf16 %v1610, %v1594
    %v1707 = vpack.c.bf16 %v1611, %v1595
    %v1708 = vpack.c.bf16 %v1612, %v1596
    %v1709 = vpack.c.bf16 %v1613, %v1597
    %v1710 = vpack.c.bf16 %v1614, %v1598
    %v1711 = vpack.c.bf16 %v1615, %v1599
    %v1712 = vpack.c.bf16 %v1616, %v1600
    %v1713 = vpack.c.bf16 %v1617, %v1601
    %v1714 = vpack.c.bf16 %v1618, %v1602
    %v1715 = vpack.c.bf16 %v1619, %v1603
    %v1716 = vpack.c.bf16 %v1620, %v1604
    %v1717 = vpack.c.bf16 %v1621, %v1605
    %v1718 = vpack.c.bf16 %v1622, %v1606
    %v1719 = vpack.c.bf16 %v1623, %v1607
    %v1720 = vpack.c.bf16 %v1624, %v1608
    %v1721 = vpack.c.bf16 %v1641, %v1625
    %v1722 = vpack.c.bf16 %v1642, %v1626
    %v1723 = vpack.c.bf16 %v1643, %v1627
    %v1724 = vpack.c.bf16 %v1644, %v1628
    %v1725 = vpack.c.bf16 %v1645, %v1629
    %v1726 = vpack.c.bf16 %v1646, %v1630
    %v1727 = vpack.c.bf16 %v1647, %v1631
    %v1728 = vpack.c.bf16 %v1648, %v1632
    %v1729 = vpack.c.bf16 %v1649, %v1633
    %v1730 = vpack.c.bf16 %v1650, %v1634
    %v1731 = vpack.c.bf16 %v1651, %v1635
    %v1732 = vpack.c.bf16 %v1652, %v1636
    %v1733 = vpack.c.bf16 %v1653, %v1637
    %v1734 = vpack.c.bf16 %v1654, %v1638
    %v1735 = vpack.c.bf16 %v1655, %v1639
    %v1736 = vpack.c.bf16 %v1656, %v1640
    %v1737 = vpack.c.bf16 %v1673, %v1657
    %v1738 = vpack.c.bf16 %v1674, %v1658
    %v1739 = vpack.c.bf16 %v1675, %v1659
    %v1740 = vpack.c.bf16 %v1676, %v1660
    %v1741 = vpack.c.bf16 %v1677, %v1661
    %v1742 = vpack.c.bf16 %v1678, %v1662
    %v1743 = vpack.c.bf16 %v1679, %v1663
    %v1744 = vpack.c.bf16 %v1680, %v1664
    %v1745 = vpack.c.bf16 %v1681, %v1665
    %v1746 = vpack.c.bf16 %v1682, %v1666
    %v1747 = vpack.c.bf16 %v1683, %v1667
    %v1748 = vpack.c.bf16 %v1684, %v1668
    %v1749 = vpack.c.bf16 %v1685, %v1669
    %v1750 = vpack.c.bf16 %v1686, %v1670
    %v1751 = vpack.c.bf16 %v1687, %v1671
    %v1752 = vpack.c.bf16 %v1688, %v1672
    %v1753 = vld [vmem:[#allocation4] sm:$0xff]
    %v1754 = vld [vmem:[#allocation4 + $0x8] sm:$0xff]
    %v1755 = vld [vmem:[#allocation4 + $0x10] sm:$0xff]
    %v1756 = vld [vmem:[#allocation4 + $0x18] sm:$0xff]
    %v1757 = vld [vmem:[#allocation4 + $0x20] sm:$0xff]
    %v1758 = vld [vmem:[#allocation4 + $0x28] sm:$0xff]
    %v1759 = vld [vmem:[#allocation4 + $0x30] sm:$0xff]
    %v1760 = vld [vmem:[#allocation4 + $0x38] sm:$0xff]
    %v1761 = vld [vmem:[#allocation4 + $0x40] sm:$0xff]
    %v1762 = vld [vmem:[#allocation4 + $0x48] sm:$0xff]
    %v1763 = vld [vmem:[#allocation4 + $0x50] sm:$0xff]
    %v1764 = vld [vmem:[#allocation4 + $0x58] sm:$0xff]
    %v1765 = vld [vmem:[#allocation4 + $0x60] sm:$0xff]
    %v1766 = vld [vmem:[#allocation4 + $0x68] sm:$0xff]
    %v1767 = vld [vmem:[#allocation4 + $0x70] sm:$0xff]
    %v1768 = vld [vmem:[#allocation4 + $0x78] sm:$0xff]
    %v1769 = vld [vmem:[#allocation4 + $0x80] sm:$0xff]
    %v1770 = vld [vmem:[#allocation4 + $0x88] sm:$0xff]
    %v1771 = vld [vmem:[#allocation4 + $0x90] sm:$0xff]
    %v1772 = vld [vmem:[#allocation4 + $0x98] sm:$0xff]
    %v1773 = vld [vmem:[#allocation4 + $0xa0] sm:$0xff]
    %v1774 = vld [vmem:[#allocation4 + $0xa8] sm:$0xff]
    %v1775 = vld [vmem:[#allocation4 + $0xb0] sm:$0xff]
    %v1776 = vld [vmem:[#allocation4 + $0xb8] sm:$0xff]
    %v1777 = vld [vmem:[#allocation4 + $0xc0] sm:$0xff]
    %v1778 = vld [vmem:[#allocation4 + $0xc8] sm:$0xff]
    %v1779 = vld [vmem:[#allocation4 + $0xd0] sm:$0xff]
    %v1780 = vld [vmem:[#allocation4 + $0xd8] sm:$0xff]
    %v1781 = vld [vmem:[#allocation4 + $0xe0] sm:$0xff]
    %v1782 = vld [vmem:[#allocation4 + $0xe8] sm:$0xff]
    %v1783 = vld [vmem:[#allocation4 + $0xf0] sm:$0xff]
    %v1784 = vld [vmem:[#allocation4 + $0xf8] sm:$0xff]
    %v1785 = vld [vmem:[#allocation4 + $0x100] sm:$0xff]
    %v1786 = vld [vmem:[#allocation4 + $0x108] sm:$0xff]
    %v1787 = vld [vmem:[#allocation4 + $0x110] sm:$0xff]
    %v1788 = vld [vmem:[#allocation4 + $0x118] sm:$0xff]
    %v1789 = vld [vmem:[#allocation4 + $0x120] sm:$0xff]
    %v1790 = vld [vmem:[#allocation4 + $0x128] sm:$0xff]
    %v1791 = vld [vmem:[#allocation4 + $0x130] sm:$0xff]
    %v1792 = vld [vmem:[#allocation4 + $0x138] sm:$0xff]
    %v1793 = vld [vmem:[#allocation4 + $0x140] sm:$0xff]
    %v1794 = vld [vmem:[#allocation4 + $0x148] sm:$0xff]
    %v1795 = vld [vmem:[#allocation4 + $0x150] sm:$0xff]
    %v1796 = vld [vmem:[#allocation4 + $0x158] sm:$0xff]
    %v1797 = vld [vmem:[#allocation4 + $0x160] sm:$0xff]
    %v1798 = vld [vmem:[#allocation4 + $0x168] sm:$0xff]
    %v1799 = vld [vmem:[#allocation4 + $0x170] sm:$0xff]
    %v1800 = vld [vmem:[#allocation4 + $0x178] sm:$0xff]
    %v1801 = vld [vmem:[#allocation4 + $0x180] sm:$0xff]
    %v1802 = vld [vmem:[#allocation4 + $0x188] sm:$0xff]
    %v1803 = vld [vmem:[#allocation4 + $0x190] sm:$0xff]
    %v1804 = vld [vmem:[#allocation4 + $0x198] sm:$0xff]
    %v1805 = vld [vmem:[#allocation4 + $0x1a0] sm:$0xff]
    %v1806 = vld [vmem:[#allocation4 + $0x1a8] sm:$0xff]
    %v1807 = vld [vmem:[#allocation4 + $0x1b0] sm:$0xff]
    %v1808 = vld [vmem:[#allocation4 + $0x1b8] sm:$0xff]
    %v1809 = vld [vmem:[#allocation4 + $0x1c0] sm:$0xff]
    %v1810 = vld [vmem:[#allocation4 + $0x1c8] sm:$0xff]
    %v1811 = vld [vmem:[#allocation4 + $0x1d0] sm:$0xff]
    %v1812 = vld [vmem:[#allocation4 + $0x1d8] sm:$0xff]
    %v1813 = vld [vmem:[#allocation4 + $0x1e0] sm:$0xff]
    %v1814 = vld [vmem:[#allocation4 + $0x1e8] sm:$0xff]
    %v1815 = vld [vmem:[#allocation4 + $0x1f0] sm:$0xff]
    %v1816 = vld [vmem:[#allocation4 + $0x1f8] sm:$0xff]
    %v1817 = vld [vmem:[#allocation4 + $0x200] sm:$0xff]
    %v1818 = vld [vmem:[#allocation4 + $0x208] sm:$0xff]
    %v1819 = vld [vmem:[#allocation4 + $0x210] sm:$0xff]
    %v1820 = vld [vmem:[#allocation4 + $0x218] sm:$0xff]
    %v1821 = vld [vmem:[#allocation4 + $0x220] sm:$0xff]
    %v1822 = vld [vmem:[#allocation4 + $0x228] sm:$0xff]
    %v1823 = vld [vmem:[#allocation4 + $0x230] sm:$0xff]
    %v1824 = vld [vmem:[#allocation4 + $0x238] sm:$0xff]
    %v1825 = vld [vmem:[#allocation4 + $0x240] sm:$0xff]
    %v1826 = vld [vmem:[#allocation4 + $0x248] sm:$0xff]
    %v1827 = vld [vmem:[#allocation4 + $0x250] sm:$0xff]
    %v1828 = vld [vmem:[#allocation4 + $0x258] sm:$0xff]
    %v1829 = vld [vmem:[#allocation4 + $0x260] sm:$0xff]
    %v1830 = vld [vmem:[#allocation4 + $0x268] sm:$0xff]
    %v1831 = vld [vmem:[#allocation4 + $0x270] sm:$0xff]
    %v1832 = vld [vmem:[#allocation4 + $0x278] sm:$0xff]
    %v1833 = vld [vmem:[#allocation4 + $0x280] sm:$0xff]
    %v1834 = vld [vmem:[#allocation4 + $0x288] sm:$0xff]
    %v1835 = vld [vmem:[#allocation4 + $0x290] sm:$0xff]
    %v1836 = vld [vmem:[#allocation4 + $0x298] sm:$0xff]
    %v1837 = vld [vmem:[#allocation4 + $0x2a0] sm:$0xff]
    %v1838 = vld [vmem:[#allocation4 + $0x2a8] sm:$0xff]
    %v1839 = vld [vmem:[#allocation4 + $0x2b0] sm:$0xff]
    %v1840 = vld [vmem:[#allocation4 + $0x2b8] sm:$0xff]
    %v1841 = vld [vmem:[#allocation4 + $0x2c0] sm:$0xff]
    %v1842 = vld [vmem:[#allocation4 + $0x2c8] sm:$0xff]
    %v1843 = vld [vmem:[#allocation4 + $0x2d0] sm:$0xff]
    %v1844 = vld [vmem:[#allocation4 + $0x2d8] sm:$0xff]
    %v1845 = vld [vmem:[#allocation4 + $0x2e0] sm:$0xff]
    %v1846 = vld [vmem:[#allocation4 + $0x2e8] sm:$0xff]
    %v1847 = vld [vmem:[#allocation4 + $0x2f0] sm:$0xff]
    %v1848 = vld [vmem:[#allocation4 + $0x2f8] sm:$0xff]
    %v1849 = vld [vmem:[#allocation4 + $0x300] sm:$0xff]
    %v1850 = vld [vmem:[#allocation4 + $0x308] sm:$0xff]
    %v1851 = vld [vmem:[#allocation4 + $0x310] sm:$0xff]
    %v1852 = vld [vmem:[#allocation4 + $0x318] sm:$0xff]
    %v1853 = vld [vmem:[#allocation4 + $0x320] sm:$0xff]
    %v1854 = vld [vmem:[#allocation4 + $0x328] sm:$0xff]
    %v1855 = vld [vmem:[#allocation4 + $0x330] sm:$0xff]
    %v1856 = vld [vmem:[#allocation4 + $0x338] sm:$0xff]
    %v1857 = vld [vmem:[#allocation4 + $0x340] sm:$0xff]
    %v1858 = vld [vmem:[#allocation4 + $0x348] sm:$0xff]
    %v1859 = vld [vmem:[#allocation4 + $0x350] sm:$0xff]
    %v1860 = vld [vmem:[#allocation4 + $0x358] sm:$0xff]
    %v1861 = vld [vmem:[#allocation4 + $0x360] sm:$0xff]
    %v1862 = vld [vmem:[#allocation4 + $0x368] sm:$0xff]
    %v1863 = vld [vmem:[#allocation4 + $0x370] sm:$0xff]
    %v1864 = vld [vmem:[#allocation4 + $0x378] sm:$0xff]
    %v1865 = vld [vmem:[#allocation4 + $0x380] sm:$0xff]
    %v1866 = vld [vmem:[#allocation4 + $0x388] sm:$0xff]
    %v1867 = vld [vmem:[#allocation4 + $0x390] sm:$0xff]
    %v1868 = vld [vmem:[#allocation4 + $0x398] sm:$0xff]
    %v1869 = vld [vmem:[#allocation4 + $0x3a0] sm:$0xff]
    %v1870 = vld [vmem:[#allocation4 + $0x3a8] sm:$0xff]
    %v1871 = vld [vmem:[#allocation4 + $0x3b0] sm:$0xff]
    %v1872 = vld [vmem:[#allocation4 + $0x3b8] sm:$0xff]
    %v1873 = vld [vmem:[#allocation4 + $0x3c0] sm:$0xff]
    %v1874 = vld [vmem:[#allocation4 + $0x3c8] sm:$0xff]
    %v1875 = vld [vmem:[#allocation4 + $0x3d0] sm:$0xff]
    %v1876 = vld [vmem:[#allocation4 + $0x3d8] sm:$0xff]
    %v1877 = vld [vmem:[#allocation4 + $0x3e0] sm:$0xff]
    %v1878 = vld [vmem:[#allocation4 + $0x3e8] sm:$0xff]
    %v1879 = vld [vmem:[#allocation4 + $0x3f0] sm:$0xff]
    %v1880 = vld [vmem:[#allocation4 + $0x3f8] sm:$0xff]
    %v1881 = vld [vmem:[#allocation4 + $0x400] sm:$0xff]
    %v1882 = vld [vmem:[#allocation4 + $0x408] sm:$0xff]
    %v1883 = vld [vmem:[#allocation4 + $0x410] sm:$0xff]
    %v1884 = vld [vmem:[#allocation4 + $0x418] sm:$0xff]
    %v1885 = vld [vmem:[#allocation4 + $0x420] sm:$0xff]
    %v1886 = vld [vmem:[#allocation4 + $0x428] sm:$0xff]
    %v1887 = vld [vmem:[#allocation4 + $0x430] sm:$0xff]
    %v1888 = vld [vmem:[#allocation4 + $0x438] sm:$0xff]
    %v1889 = vld [vmem:[#allocation4 + $0x440] sm:$0xff]
    %v1890 = vld [vmem:[#allocation4 + $0x448] sm:$0xff]
    %v1891 = vld [vmem:[#allocation4 + $0x450] sm:$0xff]
    %v1892 = vld [vmem:[#allocation4 + $0x458] sm:$0xff]
    %v1893 = vld [vmem:[#allocation4 + $0x460] sm:$0xff]
    %v1894 = vld [vmem:[#allocation4 + $0x468] sm:$0xff]
    %v1895 = vld [vmem:[#allocation4 + $0x470] sm:$0xff]
    %v1896 = vld [vmem:[#allocation4 + $0x478] sm:$0xff]
    %v1897 = vld [vmem:[#allocation4 + $0x480] sm:$0xff]
    %v1898 = vld [vmem:[#allocation4 + $0x488] sm:$0xff]
    %v1899 = vld [vmem:[#allocation4 + $0x490] sm:$0xff]
    %v1900 = vld [vmem:[#allocation4 + $0x498] sm:$0xff]
    %v1901 = vld [vmem:[#allocation4 + $0x4a0] sm:$0xff]
    %v1902 = vld [vmem:[#allocation4 + $0x4a8] sm:$0xff]
    %v1903 = vld [vmem:[#allocation4 + $0x4b0] sm:$0xff]
    %v1904 = vld [vmem:[#allocation4 + $0x4b8] sm:$0xff]
    %v1905 = vld [vmem:[#allocation4 + $0x4c0] sm:$0xff]
    %v1906 = vld [vmem:[#allocation4 + $0x4c8] sm:$0xff]
    %v1907 = vld [vmem:[#allocation4 + $0x4d0] sm:$0xff]
    %v1908 = vld [vmem:[#allocation4 + $0x4d8] sm:$0xff]
    %v1909 = vld [vmem:[#allocation4 + $0x4e0] sm:$0xff]
    %v1910 = vld [vmem:[#allocation4 + $0x4e8] sm:$0xff]
    %v1911 = vld [vmem:[#allocation4 + $0x4f0] sm:$0xff]
    %v1912 = vld [vmem:[#allocation4 + $0x4f8] sm:$0xff]
    %v1913 = vld [vmem:[#allocation4 + $0x500] sm:$0xff]
    %v1914 = vld [vmem:[#allocation4 + $0x508] sm:$0xff]
    %v1915 = vld [vmem:[#allocation4 + $0x510] sm:$0xff]
    %v1916 = vld [vmem:[#allocation4 + $0x518] sm:$0xff]
    %v1917 = vld [vmem:[#allocation4 + $0x520] sm:$0xff]
    %v1918 = vld [vmem:[#allocation4 + $0x528] sm:$0xff]
    %v1919 = vld [vmem:[#allocation4 + $0x530] sm:$0xff]
    %v1920 = vld [vmem:[#allocation4 + $0x538] sm:$0xff]
    %v1921 = vld [vmem:[#allocation4 + $0x540] sm:$0xff]
    %v1922 = vld [vmem:[#allocation4 + $0x548] sm:$0xff]
    %v1923 = vld [vmem:[#allocation4 + $0x550] sm:$0xff]
    %v1924 = vld [vmem:[#allocation4 + $0x558] sm:$0xff]
    %v1925 = vld [vmem:[#allocation4 + $0x560] sm:$0xff]
    %v1926 = vld [vmem:[#allocation4 + $0x568] sm:$0xff]
    %v1927 = vld [vmem:[#allocation4 + $0x570] sm:$0xff]
    %v1928 = vld [vmem:[#allocation4 + $0x578] sm:$0xff]
    %v1929 = vld [vmem:[#allocation4 + $0x580] sm:$0xff]
    %v1930 = vld [vmem:[#allocation4 + $0x588] sm:$0xff]
    %v1931 = vld [vmem:[#allocation4 + $0x590] sm:$0xff]
    %v1932 = vld [vmem:[#allocation4 + $0x598] sm:$0xff]
    %v1933 = vld [vmem:[#allocation4 + $0x5a0] sm:$0xff]
    %v1934 = vld [vmem:[#allocation4 + $0x5a8] sm:$0xff]
    %v1935 = vld [vmem:[#allocation4 + $0x5b0] sm:$0xff]
    %v1936 = vld [vmem:[#allocation4 + $0x5b8] sm:$0xff]
    %v1937 = vld [vmem:[#allocation4 + $0x5c0] sm:$0xff]
    %v1938 = vld [vmem:[#allocation4 + $0x5c8] sm:$0xff]
    %v1939 = vld [vmem:[#allocation4 + $0x5d0] sm:$0xff]
    %v1940 = vld [vmem:[#allocation4 + $0x5d8] sm:$0xff]
    %v1941 = vld [vmem:[#allocation4 + $0x5e0] sm:$0xff]
    %v1942 = vld [vmem:[#allocation4 + $0x5e8] sm:$0xff]
    %v1943 = vld [vmem:[#allocation4 + $0x5f0] sm:$0xff]
    %v1944 = vld [vmem:[#allocation4 + $0x5f8] sm:$0xff]
    %v1945 = vld [vmem:[#allocation4 + $0x600] sm:$0xff]
    %v1946 = vld [vmem:[#allocation4 + $0x608] sm:$0xff]
    %v1947 = vld [vmem:[#allocation4 + $0x610] sm:$0xff]
    %v1948 = vld [vmem:[#allocation4 + $0x618] sm:$0xff]
    %v1949 = vld [vmem:[#allocation4 + $0x620] sm:$0xff]
    %v1950 = vld [vmem:[#allocation4 + $0x628] sm:$0xff]
    %v1951 = vld [vmem:[#allocation4 + $0x630] sm:$0xff]
    %v1952 = vld [vmem:[#allocation4 + $0x638] sm:$0xff]
    %v1953 = vld [vmem:[#allocation4 + $0x640] sm:$0xff]
    %v1954 = vld [vmem:[#allocation4 + $0x648] sm:$0xff]
    %v1955 = vld [vmem:[#allocation4 + $0x650] sm:$0xff]
    %v1956 = vld [vmem:[#allocation4 + $0x658] sm:$0xff]
    %v1957 = vld [vmem:[#allocation4 + $0x660] sm:$0xff]
    %v1958 = vld [vmem:[#allocation4 + $0x668] sm:$0xff]
    %v1959 = vld [vmem:[#allocation4 + $0x670] sm:$0xff]
    %v1960 = vld [vmem:[#allocation4 + $0x678] sm:$0xff]
    %v1961 = vld [vmem:[#allocation4 + $0x680] sm:$0xff]
    %v1962 = vld [vmem:[#allocation4 + $0x688] sm:$0xff]
    %v1963 = vld [vmem:[#allocation4 + $0x690] sm:$0xff]
    %v1964 = vld [vmem:[#allocation4 + $0x698] sm:$0xff]
    %v1965 = vld [vmem:[#allocation4 + $0x6a0] sm:$0xff]
    %v1966 = vld [vmem:[#allocation4 + $0x6a8] sm:$0xff]
    %v1967 = vld [vmem:[#allocation4 + $0x6b0] sm:$0xff]
    %v1968 = vld [vmem:[#allocation4 + $0x6b8] sm:$0xff]
    %v1969 = vld [vmem:[#allocation4 + $0x6c0] sm:$0xff]
    %v1970 = vld [vmem:[#allocation4 + $0x6c8] sm:$0xff]
    %v1971 = vld [vmem:[#allocation4 + $0x6d0] sm:$0xff]
    %v1972 = vld [vmem:[#allocation4 + $0x6d8] sm:$0xff]
    %v1973 = vld [vmem:[#allocation4 + $0x6e0] sm:$0xff]
    %v1974 = vld [vmem:[#allocation4 + $0x6e8] sm:$0xff]
    %v1975 = vld [vmem:[#allocation4 + $0x6f0] sm:$0xff]
    %v1976 = vld [vmem:[#allocation4 + $0x6f8] sm:$0xff]
    %v1977 = vld [vmem:[#allocation4 + $0x700] sm:$0xff]
    %v1978 = vld [vmem:[#allocation4 + $0x708] sm:$0xff]
    %v1979 = vld [vmem:[#allocation4 + $0x710] sm:$0xff]
    %v1980 = vld [vmem:[#allocation4 + $0x718] sm:$0xff]
    %v1981 = vld [vmem:[#allocation4 + $0x720] sm:$0xff]
    %v1982 = vld [vmem:[#allocation4 + $0x728] sm:$0xff]
    %v1983 = vld [vmem:[#allocation4 + $0x730] sm:$0xff]
    %v1984 = vld [vmem:[#allocation4 + $0x738] sm:$0xff]
    %v1985 = vld [vmem:[#allocation4 + $0x740] sm:$0xff]
    %v1986 = vld [vmem:[#allocation4 + $0x748] sm:$0xff]
    %v1987 = vld [vmem:[#allocation4 + $0x750] sm:$0xff]
    %v1988 = vld [vmem:[#allocation4 + $0x758] sm:$0xff]
    %v1989 = vld [vmem:[#allocation4 + $0x760] sm:$0xff]
    %v1990 = vld [vmem:[#allocation4 + $0x768] sm:$0xff]
    %v1991 = vld [vmem:[#allocation4 + $0x770] sm:$0xff]
    %v1992 = vld [vmem:[#allocation4 + $0x778] sm:$0xff]
    %v1993 = vld [vmem:[#allocation4 + $0x780] sm:$0xff]
    %v1994 = vld [vmem:[#allocation4 + $0x788] sm:$0xff]
    %v1995 = vld [vmem:[#allocation4 + $0x790] sm:$0xff]
    %v1996 = vld [vmem:[#allocation4 + $0x798] sm:$0xff]
    %v1997 = vld [vmem:[#allocation4 + $0x7a0] sm:$0xff]
    %v1998 = vld [vmem:[#allocation4 + $0x7a8] sm:$0xff]
    %v1999 = vld [vmem:[#allocation4 + $0x7b0] sm:$0xff]
    %v2000 = vld [vmem:[#allocation4 + $0x7b8] sm:$0xff]
    %v2001 = vld [vmem:[#allocation4 + $0x7c0] sm:$0xff]
    %v2002 = vld [vmem:[#allocation4 + $0x7c8] sm:$0xff]
    %v2003 = vld [vmem:[#allocation4 + $0x7d0] sm:$0xff]
    %v2004 = vld [vmem:[#allocation4 + $0x7d8] sm:$0xff]
    %v2005 = vld [vmem:[#allocation4 + $0x7e0] sm:$0xff]
    %v2006 = vld [vmem:[#allocation4 + $0x7e8] sm:$0xff]
    %v2007 = vld [vmem:[#allocation4 + $0x7f0] sm:$0xff]
    %v2008 = vld [vmem:[#allocation4 + $0x7f8] sm:$0xff]
    %v2009 = vld [vmem:[#allocation4 + $0x800] sm:$0xff]
    %v2010 = vld [vmem:[#allocation4 + $0x808] sm:$0xff]
    %v2011 = vld [vmem:[#allocation4 + $0x810] sm:$0xff]
    %v2012 = vld [vmem:[#allocation4 + $0x818] sm:$0xff]
    %v2013 = vld [vmem:[#allocation4 + $0x820] sm:$0xff]
    %v2014 = vld [vmem:[#allocation4 + $0x828] sm:$0xff]
    %v2015 = vld [vmem:[#allocation4 + $0x830] sm:$0xff]
    %v2016 = vld [vmem:[#allocation4 + $0x838] sm:$0xff]
    %v2017 = vld [vmem:[#allocation4 + $0x840] sm:$0xff]
    %v2018 = vld [vmem:[#allocation4 + $0x848] sm:$0xff]
    %v2019 = vld [vmem:[#allocation4 + $0x850] sm:$0xff]
    %v2020 = vld [vmem:[#allocation4 + $0x858] sm:$0xff]
    %v2021 = vld [vmem:[#allocation4 + $0x860] sm:$0xff]
    %v2022 = vld [vmem:[#allocation4 + $0x868] sm:$0xff]
    %v2023 = vld [vmem:[#allocation4 + $0x870] sm:$0xff]
    %v2024 = vld [vmem:[#allocation4 + $0x878] sm:$0xff]
    %v2025 = vld [vmem:[#allocation4 + $0x880] sm:$0xff]
    %v2026 = vld [vmem:[#allocation4 + $0x888] sm:$0xff]
    %v2027 = vld [vmem:[#allocation4 + $0x890] sm:$0xff]
    %v2028 = vld [vmem:[#allocation4 + $0x898] sm:$0xff]
    %v2029 = vld [vmem:[#allocation4 + $0x8a0] sm:$0xff]
    %v2030 = vld [vmem:[#allocation4 + $0x8a8] sm:$0xff]
    %v2031 = vld [vmem:[#allocation4 + $0x8b0] sm:$0xff]
    %v2032 = vld [vmem:[#allocation4 + $0x8b8] sm:$0xff]
    %v2033 = vld [vmem:[#allocation4 + $0x8c0] sm:$0xff]
    %v2034 = vld [vmem:[#allocation4 + $0x8c8] sm:$0xff]
    %v2035 = vld [vmem:[#allocation4 + $0x8d0] sm:$0xff]
    %v2036 = vld [vmem:[#allocation4 + $0x8d8] sm:$0xff]
    %v2037 = vld [vmem:[#allocation4 + $0x8e0] sm:$0xff]
    %v2038 = vld [vmem:[#allocation4 + $0x8e8] sm:$0xff]
    %v2039 = vld [vmem:[#allocation4 + $0x8f0] sm:$0xff]
    %v2040 = vld [vmem:[#allocation4 + $0x8f8] sm:$0xff]
    %v2041 = vld [vmem:[#allocation4 + $0x900] sm:$0xff]
    %v2042 = vld [vmem:[#allocation4 + $0x908] sm:$0xff]
    %v2043 = vld [vmem:[#allocation4 + $0x910] sm:$0xff]
    %v2044 = vld [vmem:[#allocation4 + $0x918] sm:$0xff]
    %v2045 = vld [vmem:[#allocation4 + $0x920] sm:$0xff]
    %v2046 = vld [vmem:[#allocation4 + $0x928] sm:$0xff]
    %v2047 = vld [vmem:[#allocation4 + $0x930] sm:$0xff]
    %v2048 = vld [vmem:[#allocation4 + $0x938] sm:$0xff]
    %v2049 = vld [vmem:[#allocation4 + $0x940] sm:$0xff]
    %v2050 = vld [vmem:[#allocation4 + $0x948] sm:$0xff]
    %v2051 = vld [vmem:[#allocation4 + $0x950] sm:$0xff]
    %v2052 = vld [vmem:[#allocation4 + $0x958] sm:$0xff]
    %v2053 = vld [vmem:[#allocation4 + $0x960] sm:$0xff]
    %v2054 = vld [vmem:[#allocation4 + $0x968] sm:$0xff]
    %v2055 = vld [vmem:[#allocation4 + $0x970] sm:$0xff]
    %v2056 = vld [vmem:[#allocation4 + $0x978] sm:$0xff]
    %v2057 = vld [vmem:[#allocation4 + $0x980] sm:$0xff]
    %v2058 = vld [vmem:[#allocation4 + $0x988] sm:$0xff]
    %v2059 = vld [vmem:[#allocation4 + $0x990] sm:$0xff]
    %v2060 = vld [vmem:[#allocation4 + $0x998] sm:$0xff]
    %v2061 = vld [vmem:[#allocation4 + $0x9a0] sm:$0xff]
    %v2062 = vld [vmem:[#allocation4 + $0x9a8] sm:$0xff]
    %v2063 = vld [vmem:[#allocation4 + $0x9b0] sm:$0xff]
    %v2064 = vld [vmem:[#allocation4 + $0x9b8] sm:$0xff]
    %v2065 = vld [vmem:[#allocation4 + $0x9c0] sm:$0xff]
    %v2066 = vld [vmem:[#allocation4 + $0x9c8] sm:$0xff]
    %v2067 = vld [vmem:[#allocation4 + $0x9d0] sm:$0xff]
    %v2068 = vld [vmem:[#allocation4 + $0x9d8] sm:$0xff]
    %v2069 = vld [vmem:[#allocation4 + $0x9e0] sm:$0xff]
    %v2070 = vld [vmem:[#allocation4 + $0x9e8] sm:$0xff]
    %v2071 = vld [vmem:[#allocation4 + $0x9f0] sm:$0xff]
    %v2072 = vld [vmem:[#allocation4 + $0x9f8] sm:$0xff]
    %v2073 = vld [vmem:[#allocation4 + $0xa00] sm:$0xff]
    %v2074 = vld [vmem:[#allocation4 + $0xa08] sm:$0xff]
    %v2075 = vld [vmem:[#allocation4 + $0xa10] sm:$0xff]
    %v2076 = vld [vmem:[#allocation4 + $0xa18] sm:$0xff]
    %v2077 = vld [vmem:[#allocation4 + $0xa20] sm:$0xff]
    %v2078 = vld [vmem:[#allocation4 + $0xa28] sm:$0xff]
    %v2079 = vld [vmem:[#allocation4 + $0xa30] sm:$0xff]
    %v2080 = vld [vmem:[#allocation4 + $0xa38] sm:$0xff]
    %v2081 = vld [vmem:[#allocation4 + $0xa40] sm:$0xff]
    %v2082 = vld [vmem:[#allocation4 + $0xa48] sm:$0xff]
    %v2083 = vld [vmem:[#allocation4 + $0xa50] sm:$0xff]
    %v2084 = vld [vmem:[#allocation4 + $0xa58] sm:$0xff]
    %v2085 = vld [vmem:[#allocation4 + $0xa60] sm:$0xff]
    %v2086 = vld [vmem:[#allocation4 + $0xa68] sm:$0xff]
    %v2087 = vld [vmem:[#allocation4 + $0xa70] sm:$0xff]
    %v2088 = vld [vmem:[#allocation4 + $0xa78] sm:$0xff]
    %v2089 = vld [vmem:[#allocation4 + $0xa80] sm:$0xff]
    %v2090 = vld [vmem:[#allocation4 + $0xa88] sm:$0xff]
    %v2091 = vld [vmem:[#allocation4 + $0xa90] sm:$0xff]
    %v2092 = vld [vmem:[#allocation4 + $0xa98] sm:$0xff]
    %v2093 = vld [vmem:[#allocation4 + $0xaa0] sm:$0xff]
    %v2094 = vld [vmem:[#allocation4 + $0xaa8] sm:$0xff]
    %v2095 = vld [vmem:[#allocation4 + $0xab0] sm:$0xff]
    %v2096 = vld [vmem:[#allocation4 + $0xab8] sm:$0xff]
    %v2097 = vld [vmem:[#allocation4 + $0xac0] sm:$0xff]
    %v2098 = vld [vmem:[#allocation4 + $0xac8] sm:$0xff]
    %v2099 = vld [vmem:[#allocation4 + $0xad0] sm:$0xff]
    %v2100 = vld [vmem:[#allocation4 + $0xad8] sm:$0xff]
    %v2101 = vld [vmem:[#allocation4 + $0xae0] sm:$0xff]
    %v2102 = vld [vmem:[#allocation4 + $0xae8] sm:$0xff]
    %v2103 = vld [vmem:[#allocation4 + $0xaf0] sm:$0xff]
    %v2104 = vld [vmem:[#allocation4 + $0xaf8] sm:$0xff]
    %v2105 = vld [vmem:[#allocation4 + $0xb00] sm:$0xff]
    %v2106 = vld [vmem:[#allocation4 + $0xb08] sm:$0xff]
    %v2107 = vld [vmem:[#allocation4 + $0xb10] sm:$0xff]
    %v2108 = vld [vmem:[#allocation4 + $0xb18] sm:$0xff]
    %v2109 = vld [vmem:[#allocation4 + $0xb20] sm:$0xff]
    %v2110 = vld [vmem:[#allocation4 + $0xb28] sm:$0xff]
    %v2111 = vld [vmem:[#allocation4 + $0xb30] sm:$0xff]
    %v2112 = vld [vmem:[#allocation4 + $0xb38] sm:$0xff]
    %v2113 = vld [vmem:[#allocation4 + $0xb40] sm:$0xff]
    %v2114 = vld [vmem:[#allocation4 + $0xb48] sm:$0xff]
    %v2115 = vld [vmem:[#allocation4 + $0xb50] sm:$0xff]
    %v2116 = vld [vmem:[#allocation4 + $0xb58] sm:$0xff]
    %v2117 = vld [vmem:[#allocation4 + $0xb60] sm:$0xff]
    %v2118 = vld [vmem:[#allocation4 + $0xb68] sm:$0xff]
    %v2119 = vld [vmem:[#allocation4 + $0xb70] sm:$0xff]
    %v2120 = vld [vmem:[#allocation4 + $0xb78] sm:$0xff]
    %v2121 = vld [vmem:[#allocation4 + $0xb80] sm:$0xff]
    %v2122 = vld [vmem:[#allocation4 + $0xb88] sm:$0xff]
    %v2123 = vld [vmem:[#allocation4 + $0xb90] sm:$0xff]
    %v2124 = vld [vmem:[#allocation4 + $0xb98] sm:$0xff]
    %v2125 = vld [vmem:[#allocation4 + $0xba0] sm:$0xff]
    %v2126 = vld [vmem:[#allocation4 + $0xba8] sm:$0xff]
    %v2127 = vld [vmem:[#allocation4 + $0xbb0] sm:$0xff]
    %v2128 = vld [vmem:[#allocation4 + $0xbb8] sm:$0xff]
    %v2129 = vld [vmem:[#allocation4 + $0xbc0] sm:$0xff]
    %v2130 = vld [vmem:[#allocation4 + $0xbc8] sm:$0xff]
    %v2131 = vld [vmem:[#allocation4 + $0xbd0] sm:$0xff]
    %v2132 = vld [vmem:[#allocation4 + $0xbd8] sm:$0xff]
    %v2133 = vld [vmem:[#allocation4 + $0xbe0] sm:$0xff]
    %v2134 = vld [vmem:[#allocation4 + $0xbe8] sm:$0xff]
    %v2135 = vld [vmem:[#allocation4 + $0xbf0] sm:$0xff]
    %v2136 = vld [vmem:[#allocation4 + $0xbf8] sm:$0xff]
    %v2137 = vld [vmem:[#allocation4 + $0xc00] sm:$0xff]
    %v2138 = vld [vmem:[#allocation4 + $0xc08] sm:$0xff]
    %v2139 = vld [vmem:[#allocation4 + $0xc10] sm:$0xff]
    %v2140 = vld [vmem:[#allocation4 + $0xc18] sm:$0xff]
    %v2141 = vld [vmem:[#allocation4 + $0xc20] sm:$0xff]
    %v2142 = vld [vmem:[#allocation4 + $0xc28] sm:$0xff]
    %v2143 = vld [vmem:[#allocation4 + $0xc30] sm:$0xff]
    %v2144 = vld [vmem:[#allocation4 + $0xc38] sm:$0xff]
    %v2145 = vld [vmem:[#allocation4 + $0xc40] sm:$0xff]
    %v2146 = vld [vmem:[#allocation4 + $0xc48] sm:$0xff]
    %v2147 = vld [vmem:[#allocation4 + $0xc50] sm:$0xff]
    %v2148 = vld [vmem:[#allocation4 + $0xc58] sm:$0xff]
    %v2149 = vld [vmem:[#allocation4 + $0xc60] sm:$0xff]
    %v2150 = vld [vmem:[#allocation4 + $0xc68] sm:$0xff]
    %v2151 = vld [vmem:[#allocation4 + $0xc70] sm:$0xff]
    %v2152 = vld [vmem:[#allocation4 + $0xc78] sm:$0xff]
    %v2153 = vld [vmem:[#allocation4 + $0xc80] sm:$0xff]
    %v2154 = vld [vmem:[#allocation4 + $0xc88] sm:$0xff]
    %v2155 = vld [vmem:[#allocation4 + $0xc90] sm:$0xff]
    %v2156 = vld [vmem:[#allocation4 + $0xc98] sm:$0xff]
    %v2157 = vld [vmem:[#allocation4 + $0xca0] sm:$0xff]
    %v2158 = vld [vmem:[#allocation4 + $0xca8] sm:$0xff]
    %v2159 = vld [vmem:[#allocation4 + $0xcb0] sm:$0xff]
    %v2160 = vld [vmem:[#allocation4 + $0xcb8] sm:$0xff]
    %v2161 = vld [vmem:[#allocation4 + $0xcc0] sm:$0xff]
    %v2162 = vld [vmem:[#allocation4 + $0xcc8] sm:$0xff]
    %v2163 = vld [vmem:[#allocation4 + $0xcd0] sm:$0xff]
    %v2164 = vld [vmem:[#allocation4 + $0xcd8] sm:$0xff]
    %v2165 = vld [vmem:[#allocation4 + $0xce0] sm:$0xff]
    %v2166 = vld [vmem:[#allocation4 + $0xce8] sm:$0xff]
    %v2167 = vld [vmem:[#allocation4 + $0xcf0] sm:$0xff]
    %v2168 = vld [vmem:[#allocation4 + $0xcf8] sm:$0xff]
    %v2169 = vld [vmem:[#allocation4 + $0xd00] sm:$0xff]
    %v2170 = vld [vmem:[#allocation4 + $0xd08] sm:$0xff]
    %v2171 = vld [vmem:[#allocation4 + $0xd10] sm:$0xff]
    %v2172 = vld [vmem:[#allocation4 + $0xd18] sm:$0xff]
    %v2173 = vld [vmem:[#allocation4 + $0xd20] sm:$0xff]
    %v2174 = vld [vmem:[#allocation4 + $0xd28] sm:$0xff]
    %v2175 = vld [vmem:[#allocation4 + $0xd30] sm:$0xff]
    %v2176 = vld [vmem:[#allocation4 + $0xd38] sm:$0xff]
    %v2177 = vld [vmem:[#allocation4 + $0xd40] sm:$0xff]
    %v2178 = vld [vmem:[#allocation4 + $0xd48] sm:$0xff]
    %v2179 = vld [vmem:[#allocation4 + $0xd50] sm:$0xff]
    %v2180 = vld [vmem:[#allocation4 + $0xd58] sm:$0xff]
    %v2181 = vld [vmem:[#allocation4 + $0xd60] sm:$0xff]
    %v2182 = vld [vmem:[#allocation4 + $0xd68] sm:$0xff]
    %v2183 = vld [vmem:[#allocation4 + $0xd70] sm:$0xff]
    %v2184 = vld [vmem:[#allocation4 + $0xd78] sm:$0xff]
    %v2185 = vld [vmem:[#allocation4 + $0xd80] sm:$0xff]
    %v2186 = vld [vmem:[#allocation4 + $0xd88] sm:$0xff]
    %v2187 = vld [vmem:[#allocation4 + $0xd90] sm:$0xff]
    %v2188 = vld [vmem:[#allocation4 + $0xd98] sm:$0xff]
    %v2189 = vld [vmem:[#allocation4 + $0xda0] sm:$0xff]
    %v2190 = vld [vmem:[#allocation4 + $0xda8] sm:$0xff]
    %v2191 = vld [vmem:[#allocation4 + $0xdb0] sm:$0xff]
    %v2192 = vld [vmem:[#allocation4 + $0xdb8] sm:$0xff]
    %v2193 = vld [vmem:[#allocation4 + $0xdc0] sm:$0xff]
    %v2194 = vld [vmem:[#allocation4 + $0xdc8] sm:$0xff]
    %v2195 = vld [vmem:[#allocation4 + $0xdd0] sm:$0xff]
    %v2196 = vld [vmem:[#allocation4 + $0xdd8] sm:$0xff]
    %v2197 = vld [vmem:[#allocation4 + $0xde0] sm:$0xff]
    %v2198 = vld [vmem:[#allocation4 + $0xde8] sm:$0xff]
    %v2199 = vld [vmem:[#allocation4 + $0xdf0] sm:$0xff]
    %v2200 = vld [vmem:[#allocation4 + $0xdf8] sm:$0xff]
    %v2201 = vld [vmem:[#allocation4 + $0xe00] sm:$0xff]
    %v2202 = vld [vmem:[#allocation4 + $0xe08] sm:$0xff]
    %v2203 = vld [vmem:[#allocation4 + $0xe10] sm:$0xff]
    %v2204 = vld [vmem:[#allocation4 + $0xe18] sm:$0xff]
    %v2205 = vld [vmem:[#allocation4 + $0xe20] sm:$0xff]
    %v2206 = vld [vmem:[#allocation4 + $0xe28] sm:$0xff]
    %v2207 = vld [vmem:[#allocation4 + $0xe30] sm:$0xff]
    %v2208 = vld [vmem:[#allocation4 + $0xe38] sm:$0xff]
    %v2209 = vld [vmem:[#allocation4 + $0xe40] sm:$0xff]
    %v2210 = vld [vmem:[#allocation4 + $0xe48] sm:$0xff]
    %v2211 = vld [vmem:[#allocation4 + $0xe50] sm:$0xff]
    %v2212 = vld [vmem:[#allocation4 + $0xe58] sm:$0xff]
    %v2213 = vld [vmem:[#allocation4 + $0xe60] sm:$0xff]
    %v2214 = vld [vmem:[#allocation4 + $0xe68] sm:$0xff]
    %v2215 = vld [vmem:[#allocation4 + $0xe70] sm:$0xff]
    %v2216 = vld [vmem:[#allocation4 + $0xe78] sm:$0xff]
    %v2217 = vld [vmem:[#allocation4 + $0xe80] sm:$0xff]
    %v2218 = vld [vmem:[#allocation4 + $0xe88] sm:$0xff]
    %v2219 = vld [vmem:[#allocation4 + $0xe90] sm:$0xff]
    %v2220 = vld [vmem:[#allocation4 + $0xe98] sm:$0xff]
    %v2221 = vld [vmem:[#allocation4 + $0xea0] sm:$0xff]
    %v2222 = vld [vmem:[#allocation4 + $0xea8] sm:$0xff]
    %v2223 = vld [vmem:[#allocation4 + $0xeb0] sm:$0xff]
    %v2224 = vld [vmem:[#allocation4 + $0xeb8] sm:$0xff]
    %v2225 = vld [vmem:[#allocation4 + $0xec0] sm:$0xff]
    %v2226 = vld [vmem:[#allocation4 + $0xec8] sm:$0xff]
    %v2227 = vld [vmem:[#allocation4 + $0xed0] sm:$0xff]
    %v2228 = vld [vmem:[#allocation4 + $0xed8] sm:$0xff]
    %v2229 = vld [vmem:[#allocation4 + $0xee0] sm:$0xff]
    %v2230 = vld [vmem:[#allocation4 + $0xee8] sm:$0xff]
    %v2231 = vld [vmem:[#allocation4 + $0xef0] sm:$0xff]
    %v2232 = vld [vmem:[#allocation4 + $0xef8] sm:$0xff]
    %v2233 = vld [vmem:[#allocation4 + $0xf00] sm:$0xff]
    %v2234 = vld [vmem:[#allocation4 + $0xf08] sm:$0xff]
    %v2235 = vld [vmem:[#allocation4 + $0xf10] sm:$0xff]
    %v2236 = vld [vmem:[#allocation4 + $0xf18] sm:$0xff]
    %v2237 = vld [vmem:[#allocation4 + $0xf20] sm:$0xff]
    %v2238 = vld [vmem:[#allocation4 + $0xf28] sm:$0xff]
    %v2239 = vld [vmem:[#allocation4 + $0xf30] sm:$0xff]
    %v2240 = vld [vmem:[#allocation4 + $0xf38] sm:$0xff]
    %v2241 = vld [vmem:[#allocation4 + $0xf40] sm:$0xff]
    %v2242 = vld [vmem:[#allocation4 + $0xf48] sm:$0xff]
    %v2243 = vld [vmem:[#allocation4 + $0xf50] sm:$0xff]
    %v2244 = vld [vmem:[#allocation4 + $0xf58] sm:$0xff]
    %v2245 = vld [vmem:[#allocation4 + $0xf60] sm:$0xff]
    %v2246 = vld [vmem:[#allocation4 + $0xf68] sm:$0xff]
    %v2247 = vld [vmem:[#allocation4 + $0xf70] sm:$0xff]
    %v2248 = vld [vmem:[#allocation4 + $0xf78] sm:$0xff]
    %v2249 = vld [vmem:[#allocation4 + $0xf80] sm:$0xff]
    %v2250 = vld [vmem:[#allocation4 + $0xf88] sm:$0xff]
    %v2251 = vld [vmem:[#allocation4 + $0xf90] sm:$0xff]
    %v2252 = vld [vmem:[#allocation4 + $0xf98] sm:$0xff]
    %v2253 = vld [vmem:[#allocation4 + $0xfa0] sm:$0xff]
    %v2254 = vld [vmem:[#allocation4 + $0xfa8] sm:$0xff]
    %v2255 = vld [vmem:[#allocation4 + $0xfb0] sm:$0xff]
    %v2256 = vld [vmem:[#allocation4 + $0xfb8] sm:$0xff]
    %v2257 = vld [vmem:[#allocation4 + $0xfc0] sm:$0xff]
    %v2258 = vld [vmem:[#allocation4 + $0xfc8] sm:$0xff]
    %v2259 = vld [vmem:[#allocation4 + $0xfd0] sm:$0xff]
    %v2260 = vld [vmem:[#allocation4 + $0xfd8] sm:$0xff]
    %v2261 = vld [vmem:[#allocation4 + $0xfe0] sm:$0xff]
    %v2262 = vld [vmem:[#allocation4 + $0xfe8] sm:$0xff]
    %v2263 = vld [vmem:[#allocation4 + $0xff0] sm:$0xff]
    %v2264 = vld [vmem:[#allocation4 + $0xff8] sm:$0xff]
    %v2265 = vld [vmem:[#allocation9 + $0x10] sm:$0xf]
    %v2267 = vlaneseq
    %v2268 = vshrl.u32 %v2267, 7
    %v2269 = vsub.s32 0, %v2268
    %v2270 = vrot.slane %v2265, %v2269
    %v2271 = vlaneseq
    %v2272 = vshrl.u32 %v2271, 7
    %v2273 = vsub.s32 1, %v2272
    %v2274 = vrot.slane %v2265, %v2273
    %v2275 = vlaneseq
    %v2276 = vshrl.u32 %v2275, 7
    %v2277 = vsub.s32 2, %v2276
    %v2278 = vrot.slane %v2265, %v2277
    %v2279 = vlaneseq
    %v2280 = vshrl.u32 %v2279, 7
    %v2281 = vsub.s32 3, %v2280
    %v2282 = vrot.slane %v2265, %v2281
    %v2799 = vunpack.c.l.b16 %v1753
    %v2800 = vunpack.c.h.b16 %v1753
    %v2801 = vunpack.c.l.b16 %v1754
    %v2802 = vunpack.c.h.b16 %v1754
    %v2803 = vunpack.c.l.b16 %v1755
    %v2804 = vunpack.c.h.b16 %v1755
    %v2805 = vunpack.c.l.b16 %v1756
    %v2806 = vunpack.c.h.b16 %v1756
    %v2807 = vunpack.c.l.b16 %v1757
    %v2808 = vunpack.c.h.b16 %v1757
    %v2809 = vunpack.c.l.b16 %v1758
    %v2810 = vunpack.c.h.b16 %v1758
    %v2811 = vunpack.c.l.b16 %v1759
    %v2812 = vunpack.c.h.b16 %v1759
    %v2813 = vunpack.c.l.b16 %v1760
    %v2814 = vunpack.c.h.b16 %v1760
    %v2815 = vunpack.c.l.b16 %v1761
    %v2816 = vunpack.c.h.b16 %v1761
    %v2817 = vunpack.c.l.b16 %v1762
    %v2818 = vunpack.c.h.b16 %v1762
    %v2819 = vunpack.c.l.b16 %v1763
    %v2820 = vunpack.c.h.b16 %v1763
    %v2821 = vunpack.c.l.b16 %v1764
    %v2822 = vunpack.c.h.b16 %v1764
    %v2823 = vunpack.c.l.b16 %v1765
    %v2824 = vunpack.c.h.b16 %v1765
    %v2825 = vunpack.c.l.b16 %v1766
    %v2826 = vunpack.c.h.b16 %v1766
    %v2827 = vunpack.c.l.b16 %v1767
    %v2828 = vunpack.c.h.b16 %v1767
    %v2829 = vunpack.c.l.b16 %v1768
    %v2830 = vunpack.c.h.b16 %v1768
    %v2831 = vunpack.c.l.b16 %v1769
    %v2832 = vunpack.c.h.b16 %v1769
    %v2833 = vunpack.c.l.b16 %v1770
    %v2834 = vunpack.c.h.b16 %v1770
    %v2835 = vunpack.c.l.b16 %v1771
    %v2836 = vunpack.c.h.b16 %v1771
    %v2837 = vunpack.c.l.b16 %v1772
    %v2838 = vunpack.c.h.b16 %v1772
    %v2839 = vunpack.c.l.b16 %v1773
    %v2840 = vunpack.c.h.b16 %v1773
    %v2841 = vunpack.c.l.b16 %v1774
    %v2842 = vunpack.c.h.b16 %v1774
    %v2843 = vunpack.c.l.b16 %v1775
    %v2844 = vunpack.c.h.b16 %v1775
    %v2845 = vunpack.c.l.b16 %v1776
    %v2846 = vunpack.c.h.b16 %v1776
    %v2847 = vunpack.c.l.b16 %v1777
    %v2848 = vunpack.c.h.b16 %v1777
    %v2849 = vunpack.c.l.b16 %v1778
    %v2850 = vunpack.c.h.b16 %v1778
    %v2851 = vunpack.c.l.b16 %v1779
    %v2852 = vunpack.c.h.b16 %v1779
    %v2853 = vunpack.c.l.b16 %v1780
    %v2854 = vunpack.c.h.b16 %v1780
    %v2855 = vunpack.c.l.b16 %v1781
    %v2856 = vunpack.c.h.b16 %v1781
    %v2857 = vunpack.c.l.b16 %v1782
    %v2858 = vunpack.c.h.b16 %v1782
    %v2859 = vunpack.c.l.b16 %v1783
    %v2860 = vunpack.c.h.b16 %v1783
    %v2861 = vunpack.c.l.b16 %v1784
    %v2862 = vunpack.c.h.b16 %v1784
    %v2863 = vunpack.c.l.b16 %v1785
    %v2864 = vunpack.c.h.b16 %v1785
    %v2865 = vunpack.c.l.b16 %v1786
    %v2866 = vunpack.c.h.b16 %v1786
    %v2867 = vunpack.c.l.b16 %v1787
    %v2868 = vunpack.c.h.b16 %v1787
    %v2869 = vunpack.c.l.b16 %v1788
    %v2870 = vunpack.c.h.b16 %v1788
    %v2871 = vunpack.c.l.b16 %v1789
    %v2872 = vunpack.c.h.b16 %v1789
    %v2873 = vunpack.c.l.b16 %v1790
    %v2874 = vunpack.c.h.b16 %v1790
    %v2875 = vunpack.c.l.b16 %v1791
    %v2876 = vunpack.c.h.b16 %v1791
    %v2877 = vunpack.c.l.b16 %v1792
    %v2878 = vunpack.c.h.b16 %v1792
    %v2879 = vunpack.c.l.b16 %v1793
    %v2880 = vunpack.c.h.b16 %v1793
    %v2881 = vunpack.c.l.b16 %v1794
    %v2882 = vunpack.c.h.b16 %v1794
    %v2883 = vunpack.c.l.b16 %v1795
    %v2884 = vunpack.c.h.b16 %v1795
    %v2885 = vunpack.c.l.b16 %v1796
    %v2886 = vunpack.c.h.b16 %v1796
    %v2887 = vunpack.c.l.b16 %v1797
    %v2888 = vunpack.c.h.b16 %v1797
    %v2889 = vunpack.c.l.b16 %v1798
    %v2890 = vunpack.c.h.b16 %v1798
    %v2891 = vunpack.c.l.b16 %v1799
    %v2892 = vunpack.c.h.b16 %v1799
    %v2893 = vunpack.c.l.b16 %v1800
    %v2894 = vunpack.c.h.b16 %v1800
    %v2895 = vunpack.c.l.b16 %v1801
    %v2896 = vunpack.c.h.b16 %v1801
    %v2897 = vunpack.c.l.b16 %v1802
    %v2898 = vunpack.c.h.b16 %v1802
    %v2899 = vunpack.c.l.b16 %v1803
    %v2900 = vunpack.c.h.b16 %v1803
    %v2901 = vunpack.c.l.b16 %v1804
    %v2902 = vunpack.c.h.b16 %v1804
    %v2903 = vunpack.c.l.b16 %v1805
    %v2904 = vunpack.c.h.b16 %v1805
    %v2905 = vunpack.c.l.b16 %v1806
    %v2906 = vunpack.c.h.b16 %v1806
    %v2907 = vunpack.c.l.b16 %v1807
    %v2908 = vunpack.c.h.b16 %v1807
    %v2909 = vunpack.c.l.b16 %v1808
    %v2910 = vunpack.c.h.b16 %v1808
    %v2911 = vunpack.c.l.b16 %v1809
    %v2912 = vunpack.c.h.b16 %v1809
    %v2913 = vunpack.c.l.b16 %v1810
    %v2914 = vunpack.c.h.b16 %v1810
    %v2915 = vunpack.c.l.b16 %v1811
    %v2916 = vunpack.c.h.b16 %v1811
    %v2917 = vunpack.c.l.b16 %v1812
    %v2918 = vunpack.c.h.b16 %v1812
    %v2919 = vunpack.c.l.b16 %v1813
    %v2920 = vunpack.c.h.b16 %v1813
    %v2921 = vunpack.c.l.b16 %v1814
    %v2922 = vunpack.c.h.b16 %v1814
    %v2923 = vunpack.c.l.b16 %v1815
    %v2924 = vunpack.c.h.b16 %v1815
    %v2925 = vunpack.c.l.b16 %v1816
    %v2926 = vunpack.c.h.b16 %v1816
    %v2927 = vunpack.c.l.b16 %v1817
    %v2928 = vunpack.c.h.b16 %v1817
    %v2929 = vunpack.c.l.b16 %v1818
    %v2930 = vunpack.c.h.b16 %v1818
    %v2931 = vunpack.c.l.b16 %v1819
    %v2932 = vunpack.c.h.b16 %v1819
    %v2933 = vunpack.c.l.b16 %v1820
    %v2934 = vunpack.c.h.b16 %v1820
    %v2935 = vunpack.c.l.b16 %v1821
    %v2936 = vunpack.c.h.b16 %v1821
    %v2937 = vunpack.c.l.b16 %v1822
    %v2938 = vunpack.c.h.b16 %v1822
    %v2939 = vunpack.c.l.b16 %v1823
    %v2940 = vunpack.c.h.b16 %v1823
    %v2941 = vunpack.c.l.b16 %v1824
    %v2942 = vunpack.c.h.b16 %v1824
    %v2943 = vunpack.c.l.b16 %v1825
    %v2944 = vunpack.c.h.b16 %v1825
    %v2945 = vunpack.c.l.b16 %v1826
    %v2946 = vunpack.c.h.b16 %v1826
    %v2947 = vunpack.c.l.b16 %v1827
    %v2948 = vunpack.c.h.b16 %v1827
    %v2949 = vunpack.c.l.b16 %v1828
    %v2950 = vunpack.c.h.b16 %v1828
    %v2951 = vunpack.c.l.b16 %v1829
    %v2952 = vunpack.c.h.b16 %v1829
    %v2953 = vunpack.c.l.b16 %v1830
    %v2954 = vunpack.c.h.b16 %v1830
    %v2955 = vunpack.c.l.b16 %v1831
    %v2956 = vunpack.c.h.b16 %v1831
    %v2957 = vunpack.c.l.b16 %v1832
    %v2958 = vunpack.c.h.b16 %v1832
    %v2959 = vunpack.c.l.b16 %v1833
    %v2960 = vunpack.c.h.b16 %v1833
    %v2961 = vunpack.c.l.b16 %v1834
    %v2962 = vunpack.c.h.b16 %v1834
    %v2963 = vunpack.c.l.b16 %v1835
    %v2964 = vunpack.c.h.b16 %v1835
    %v2965 = vunpack.c.l.b16 %v1836
    %v2966 = vunpack.c.h.b16 %v1836
    %v2967 = vunpack.c.l.b16 %v1837
    %v2968 = vunpack.c.h.b16 %v1837
    %v2969 = vunpack.c.l.b16 %v1838
    %v2970 = vunpack.c.h.b16 %v1838
    %v2971 = vunpack.c.l.b16 %v1839
    %v2972 = vunpack.c.h.b16 %v1839
    %v2973 = vunpack.c.l.b16 %v1840
    %v2974 = vunpack.c.h.b16 %v1840
    %v2975 = vunpack.c.l.b16 %v1841
    %v2976 = vunpack.c.h.b16 %v1841
    %v2977 = vunpack.c.l.b16 %v1842
    %v2978 = vunpack.c.h.b16 %v1842
    %v2979 = vunpack.c.l.b16 %v1843
    %v2980 = vunpack.c.h.b16 %v1843
    %v2981 = vunpack.c.l.b16 %v1844
    %v2982 = vunpack.c.h.b16 %v1844
    %v2983 = vunpack.c.l.b16 %v1845
    %v2984 = vunpack.c.h.b16 %v1845
    %v2985 = vunpack.c.l.b16 %v1846
    %v2986 = vunpack.c.h.b16 %v1846
    %v2987 = vunpack.c.l.b16 %v1847
    %v2988 = vunpack.c.h.b16 %v1847
    %v2989 = vunpack.c.l.b16 %v1848
    %v2990 = vunpack.c.h.b16 %v1848
    %v2991 = vunpack.c.l.b16 %v1849
    %v2992 = vunpack.c.h.b16 %v1849
    %v2993 = vunpack.c.l.b16 %v1850
    %v2994 = vunpack.c.h.b16 %v1850
    %v2995 = vunpack.c.l.b16 %v1851
    %v2996 = vunpack.c.h.b16 %v1851
    %v2997 = vunpack.c.l.b16 %v1852
    %v2998 = vunpack.c.h.b16 %v1852
    %v2999 = vunpack.c.l.b16 %v1853
    %v3000 = vunpack.c.h.b16 %v1853
    %v3001 = vunpack.c.l.b16 %v1854
    %v3002 = vunpack.c.h.b16 %v1854
    %v3003 = vunpack.c.l.b16 %v1855
    %v3004 = vunpack.c.h.b16 %v1855
    %v3005 = vunpack.c.l.b16 %v1856
    %v3006 = vunpack.c.h.b16 %v1856
    %v3007 = vunpack.c.l.b16 %v1857
    %v3008 = vunpack.c.h.b16 %v1857
    %v3009 = vunpack.c.l.b16 %v1858
    %v3010 = vunpack.c.h.b16 %v1858
    %v3011 = vunpack.c.l.b16 %v1859
    %v3012 = vunpack.c.h.b16 %v1859
    %v3013 = vunpack.c.l.b16 %v1860
    %v3014 = vunpack.c.h.b16 %v1860
    %v3015 = vunpack.c.l.b16 %v1861
    %v3016 = vunpack.c.h.b16 %v1861
    %v3017 = vunpack.c.l.b16 %v1862
    %v3018 = vunpack.c.h.b16 %v1862
    %v3019 = vunpack.c.l.b16 %v1863
    %v3020 = vunpack.c.h.b16 %v1863
    %v3021 = vunpack.c.l.b16 %v1864
    %v3022 = vunpack.c.h.b16 %v1864
    %v3023 = vunpack.c.l.b16 %v1865
    %v3024 = vunpack.c.h.b16 %v1865
    %v3025 = vunpack.c.l.b16 %v1866
    %v3026 = vunpack.c.h.b16 %v1866
    %v3027 = vunpack.c.l.b16 %v1867
    %v3028 = vunpack.c.h.b16 %v1867
    %v3029 = vunpack.c.l.b16 %v1868
    %v3030 = vunpack.c.h.b16 %v1868
    %v3031 = vunpack.c.l.b16 %v1869
    %v3032 = vunpack.c.h.b16 %v1869
    %v3033 = vunpack.c.l.b16 %v1870
    %v3034 = vunpack.c.h.b16 %v1870
    %v3035 = vunpack.c.l.b16 %v1871
    %v3036 = vunpack.c.h.b16 %v1871
    %v3037 = vunpack.c.l.b16 %v1872
    %v3038 = vunpack.c.h.b16 %v1872
    %v3039 = vunpack.c.l.b16 %v1873
    %v3040 = vunpack.c.h.b16 %v1873
    %v3041 = vunpack.c.l.b16 %v1874
    %v3042 = vunpack.c.h.b16 %v1874
    %v3043 = vunpack.c.l.b16 %v1875
    %v3044 = vunpack.c.h.b16 %v1875
    %v3045 = vunpack.c.l.b16 %v1876
    %v3046 = vunpack.c.h.b16 %v1876
    %v3047 = vunpack.c.l.b16 %v1877
    %v3048 = vunpack.c.h.b16 %v1877
    %v3049 = vunpack.c.l.b16 %v1878
    %v3050 = vunpack.c.h.b16 %v1878
    %v3051 = vunpack.c.l.b16 %v1879
    %v3052 = vunpack.c.h.b16 %v1879
    %v3053 = vunpack.c.l.b16 %v1880
    %v3054 = vunpack.c.h.b16 %v1880
    %v3055 = vunpack.c.l.b16 %v1881
    %v3056 = vunpack.c.h.b16 %v1881
    %v3057 = vunpack.c.l.b16 %v1882
    %v3058 = vunpack.c.h.b16 %v1882
    %v3059 = vunpack.c.l.b16 %v1883
    %v3060 = vunpack.c.h.b16 %v1883
    %v3061 = vunpack.c.l.b16 %v1884
    %v3062 = vunpack.c.h.b16 %v1884
    %v3063 = vunpack.c.l.b16 %v1885
    %v3064 = vunpack.c.h.b16 %v1885
    %v3065 = vunpack.c.l.b16 %v1886
    %v3066 = vunpack.c.h.b16 %v1886
    %v3067 = vunpack.c.l.b16 %v1887
    %v3068 = vunpack.c.h.b16 %v1887
    %v3069 = vunpack.c.l.b16 %v1888
    %v3070 = vunpack.c.h.b16 %v1888
    %v3071 = vunpack.c.l.b16 %v1889
    %v3072 = vunpack.c.h.b16 %v1889
    %v3073 = vunpack.c.l.b16 %v1890
    %v3074 = vunpack.c.h.b16 %v1890
    %v3075 = vunpack.c.l.b16 %v1891
    %v3076 = vunpack.c.h.b16 %v1891
    %v3077 = vunpack.c.l.b16 %v1892
    %v3078 = vunpack.c.h.b16 %v1892
    %v3079 = vunpack.c.l.b16 %v1893
    %v3080 = vunpack.c.h.b16 %v1893
    %v3081 = vunpack.c.l.b16 %v1894
    %v3082 = vunpack.c.h.b16 %v1894
    %v3083 = vunpack.c.l.b16 %v1895
    %v3084 = vunpack.c.h.b16 %v1895
    %v3085 = vunpack.c.l.b16 %v1896
    %v3086 = vunpack.c.h.b16 %v1896
    %v3087 = vunpack.c.l.b16 %v1897
    %v3088 = vunpack.c.h.b16 %v1897
    %v3089 = vunpack.c.l.b16 %v1898
    %v3090 = vunpack.c.h.b16 %v1898
    %v3091 = vunpack.c.l.b16 %v1899
    %v3092 = vunpack.c.h.b16 %v1899
    %v3093 = vunpack.c.l.b16 %v1900
    %v3094 = vunpack.c.h.b16 %v1900
    %v3095 = vunpack.c.l.b16 %v1901
    %v3096 = vunpack.c.h.b16 %v1901
    %v3097 = vunpack.c.l.b16 %v1902
    %v3098 = vunpack.c.h.b16 %v1902
    %v3099 = vunpack.c.l.b16 %v1903
    %v3100 = vunpack.c.h.b16 %v1903
    %v3101 = vunpack.c.l.b16 %v1904
    %v3102 = vunpack.c.h.b16 %v1904
    %v3103 = vunpack.c.l.b16 %v1905
    %v3104 = vunpack.c.h.b16 %v1905
    %v3105 = vunpack.c.l.b16 %v1906
    %v3106 = vunpack.c.h.b16 %v1906
    %v3107 = vunpack.c.l.b16 %v1907
    %v3108 = vunpack.c.h.b16 %v1907
    %v3109 = vunpack.c.l.b16 %v1908
    %v3110 = vunpack.c.h.b16 %v1908
    %v3111 = vunpack.c.l.b16 %v1909
    %v3112 = vunpack.c.h.b16 %v1909
    %v3113 = vunpack.c.l.b16 %v1910
    %v3114 = vunpack.c.h.b16 %v1910
    %v3115 = vunpack.c.l.b16 %v1911
    %v3116 = vunpack.c.h.b16 %v1911
    %v3117 = vunpack.c.l.b16 %v1912
    %v3118 = vunpack.c.h.b16 %v1912
    %v3119 = vunpack.c.l.b16 %v1913
    %v3120 = vunpack.c.h.b16 %v1913
    %v3121 = vunpack.c.l.b16 %v1914
    %v3122 = vunpack.c.h.b16 %v1914
    %v3123 = vunpack.c.l.b16 %v1915
    %v3124 = vunpack.c.h.b16 %v1915
    %v3125 = vunpack.c.l.b16 %v1916
    %v3126 = vunpack.c.h.b16 %v1916
    %v3127 = vunpack.c.l.b16 %v1917
    %v3128 = vunpack.c.h.b16 %v1917
    %v3129 = vunpack.c.l.b16 %v1918
    %v3130 = vunpack.c.h.b16 %v1918
    %v3131 = vunpack.c.l.b16 %v1919
    %v3132 = vunpack.c.h.b16 %v1919
    %v3133 = vunpack.c.l.b16 %v1920
    %v3134 = vunpack.c.h.b16 %v1920
    %v3135 = vunpack.c.l.b16 %v1921
    %v3136 = vunpack.c.h.b16 %v1921
    %v3137 = vunpack.c.l.b16 %v1922
    %v3138 = vunpack.c.h.b16 %v1922
    %v3139 = vunpack.c.l.b16 %v1923
    %v3140 = vunpack.c.h.b16 %v1923
    %v3141 = vunpack.c.l.b16 %v1924
    %v3142 = vunpack.c.h.b16 %v1924
    %v3143 = vunpack.c.l.b16 %v1925
    %v3144 = vunpack.c.h.b16 %v1925
    %v3145 = vunpack.c.l.b16 %v1926
    %v3146 = vunpack.c.h.b16 %v1926
    %v3147 = vunpack.c.l.b16 %v1927
    %v3148 = vunpack.c.h.b16 %v1927
    %v3149 = vunpack.c.l.b16 %v1928
    %v3150 = vunpack.c.h.b16 %v1928
    %v3151 = vunpack.c.l.b16 %v1929
    %v3152 = vunpack.c.h.b16 %v1929
    %v3153 = vunpack.c.l.b16 %v1930
    %v3154 = vunpack.c.h.b16 %v1930
    %v3155 = vunpack.c.l.b16 %v1931
    %v3156 = vunpack.c.h.b16 %v1931
    %v3157 = vunpack.c.l.b16 %v1932
    %v3158 = vunpack.c.h.b16 %v1932
    %v3159 = vunpack.c.l.b16 %v1933
    %v3160 = vunpack.c.h.b16 %v1933
    %v3161 = vunpack.c.l.b16 %v1934
    %v3162 = vunpack.c.h.b16 %v1934
    %v3163 = vunpack.c.l.b16 %v1935
    %v3164 = vunpack.c.h.b16 %v1935
    %v3165 = vunpack.c.l.b16 %v1936
    %v3166 = vunpack.c.h.b16 %v1936
    %v3167 = vunpack.c.l.b16 %v1937
    %v3168 = vunpack.c.h.b16 %v1937
    %v3169 = vunpack.c.l.b16 %v1938
    %v3170 = vunpack.c.h.b16 %v1938
    %v3171 = vunpack.c.l.b16 %v1939
    %v3172 = vunpack.c.h.b16 %v1939
    %v3173 = vunpack.c.l.b16 %v1940
    %v3174 = vunpack.c.h.b16 %v1940
    %v3175 = vunpack.c.l.b16 %v1941
    %v3176 = vunpack.c.h.b16 %v1941
    %v3177 = vunpack.c.l.b16 %v1942
    %v3178 = vunpack.c.h.b16 %v1942
    %v3179 = vunpack.c.l.b16 %v1943
    %v3180 = vunpack.c.h.b16 %v1943
    %v3181 = vunpack.c.l.b16 %v1944
    %v3182 = vunpack.c.h.b16 %v1944
    %v3183 = vunpack.c.l.b16 %v1945
    %v3184 = vunpack.c.h.b16 %v1945
    %v3185 = vunpack.c.l.b16 %v1946
    %v3186 = vunpack.c.h.b16 %v1946
    %v3187 = vunpack.c.l.b16 %v1947
    %v3188 = vunpack.c.h.b16 %v1947
    %v3189 = vunpack.c.l.b16 %v1948
    %v3190 = vunpack.c.h.b16 %v1948
    %v3191 = vunpack.c.l.b16 %v1949
    %v3192 = vunpack.c.h.b16 %v1949
    %v3193 = vunpack.c.l.b16 %v1950
    %v3194 = vunpack.c.h.b16 %v1950
    %v3195 = vunpack.c.l.b16 %v1951
    %v3196 = vunpack.c.h.b16 %v1951
    %v3197 = vunpack.c.l.b16 %v1952
    %v3198 = vunpack.c.h.b16 %v1952
    %v3199 = vunpack.c.l.b16 %v1953
    %v3200 = vunpack.c.h.b16 %v1953
    %v3201 = vunpack.c.l.b16 %v1954
    %v3202 = vunpack.c.h.b16 %v1954
    %v3203 = vunpack.c.l.b16 %v1955
    %v3204 = vunpack.c.h.b16 %v1955
    %v3205 = vunpack.c.l.b16 %v1956
    %v3206 = vunpack.c.h.b16 %v1956
    %v3207 = vunpack.c.l.b16 %v1957
    %v3208 = vunpack.c.h.b16 %v1957
    %v3209 = vunpack.c.l.b16 %v1958
    %v3210 = vunpack.c.h.b16 %v1958
    %v3211 = vunpack.c.l.b16 %v1959
    %v3212 = vunpack.c.h.b16 %v1959
    %v3213 = vunpack.c.l.b16 %v1960
    %v3214 = vunpack.c.h.b16 %v1960
    %v3215 = vunpack.c.l.b16 %v1961
    %v3216 = vunpack.c.h.b16 %v1961
    %v3217 = vunpack.c.l.b16 %v1962
    %v3218 = vunpack.c.h.b16 %v1962
    %v3219 = vunpack.c.l.b16 %v1963
    %v3220 = vunpack.c.h.b16 %v1963
    %v3221 = vunpack.c.l.b16 %v1964
    %v3222 = vunpack.c.h.b16 %v1964
    %v3223 = vunpack.c.l.b16 %v1965
    %v3224 = vunpack.c.h.b16 %v1965
    %v3225 = vunpack.c.l.b16 %v1966
    %v3226 = vunpack.c.h.b16 %v1966
    %v3227 = vunpack.c.l.b16 %v1967
    %v3228 = vunpack.c.h.b16 %v1967
    %v3229 = vunpack.c.l.b16 %v1968
    %v3230 = vunpack.c.h.b16 %v1968
    %v3231 = vunpack.c.l.b16 %v1969
    %v3232 = vunpack.c.h.b16 %v1969
    %v3233 = vunpack.c.l.b16 %v1970
    %v3234 = vunpack.c.h.b16 %v1970
    %v3235 = vunpack.c.l.b16 %v1971
    %v3236 = vunpack.c.h.b16 %v1971
    %v3237 = vunpack.c.l.b16 %v1972
    %v3238 = vunpack.c.h.b16 %v1972
    %v3239 = vunpack.c.l.b16 %v1973
    %v3240 = vunpack.c.h.b16 %v1973
    %v3241 = vunpack.c.l.b16 %v1974
    %v3242 = vunpack.c.h.b16 %v1974
    %v3243 = vunpack.c.l.b16 %v1975
    %v3244 = vunpack.c.h.b16 %v1975
    %v3245 = vunpack.c.l.b16 %v1976
    %v3246 = vunpack.c.h.b16 %v1976
    %v3247 = vunpack.c.l.b16 %v1977
    %v3248 = vunpack.c.h.b16 %v1977
    %v3249 = vunpack.c.l.b16 %v1978
    %v3250 = vunpack.c.h.b16 %v1978
    %v3251 = vunpack.c.l.b16 %v1979
    %v3252 = vunpack.c.h.b16 %v1979
    %v3253 = vunpack.c.l.b16 %v1980
    %v3254 = vunpack.c.h.b16 %v1980
    %v3255 = vunpack.c.l.b16 %v1981
    %v3256 = vunpack.c.h.b16 %v1981
    %v3257 = vunpack.c.l.b16 %v1982
    %v3258 = vunpack.c.h.b16 %v1982
    %v3259 = vunpack.c.l.b16 %v1983
    %v3260 = vunpack.c.h.b16 %v1983
    %v3261 = vunpack.c.l.b16 %v1984
    %v3262 = vunpack.c.h.b16 %v1984
    %v3263 = vunpack.c.l.b16 %v1985
    %v3264 = vunpack.c.h.b16 %v1985
    %v3265 = vunpack.c.l.b16 %v1986
    %v3266 = vunpack.c.h.b16 %v1986
    %v3267 = vunpack.c.l.b16 %v1987
    %v3268 = vunpack.c.h.b16 %v1987
    %v3269 = vunpack.c.l.b16 %v1988
    %v3270 = vunpack.c.h.b16 %v1988
    %v3271 = vunpack.c.l.b16 %v1989
    %v3272 = vunpack.c.h.b16 %v1989
    %v3273 = vunpack.c.l.b16 %v1990
    %v3274 = vunpack.c.h.b16 %v1990
    %v3275 = vunpack.c.l.b16 %v1991
    %v3276 = vunpack.c.h.b16 %v1991
    %v3277 = vunpack.c.l.b16 %v1992
    %v3278 = vunpack.c.h.b16 %v1992
    %v3279 = vunpack.c.l.b16 %v1993
    %v3280 = vunpack.c.h.b16 %v1993
    %v3281 = vunpack.c.l.b16 %v1994
    %v3282 = vunpack.c.h.b16 %v1994
    %v3283 = vunpack.c.l.b16 %v1995
    %v3284 = vunpack.c.h.b16 %v1995
    %v3285 = vunpack.c.l.b16 %v1996
    %v3286 = vunpack.c.h.b16 %v1996
    %v3287 = vunpack.c.l.b16 %v1997
    %v3288 = vunpack.c.h.b16 %v1997
    %v3289 = vunpack.c.l.b16 %v1998
    %v3290 = vunpack.c.h.b16 %v1998
    %v3291 = vunpack.c.l.b16 %v1999
    %v3292 = vunpack.c.h.b16 %v1999
    %v3293 = vunpack.c.l.b16 %v2000
    %v3294 = vunpack.c.h.b16 %v2000
    %v3295 = vunpack.c.l.b16 %v2001
    %v3296 = vunpack.c.h.b16 %v2001
    %v3297 = vunpack.c.l.b16 %v2002
    %v3298 = vunpack.c.h.b16 %v2002
    %v3299 = vunpack.c.l.b16 %v2003
    %v3300 = vunpack.c.h.b16 %v2003
    %v3301 = vunpack.c.l.b16 %v2004
    %v3302 = vunpack.c.h.b16 %v2004
    %v3303 = vunpack.c.l.b16 %v2005
    %v3304 = vunpack.c.h.b16 %v2005
    %v3305 = vunpack.c.l.b16 %v2006
    %v3306 = vunpack.c.h.b16 %v2006
    %v3307 = vunpack.c.l.b16 %v2007
    %v3308 = vunpack.c.h.b16 %v2007
    %v3309 = vunpack.c.l.b16 %v2008
    %v3310 = vunpack.c.h.b16 %v2008
    %v3311 = vunpack.c.l.b16 %v2009
    %v3312 = vunpack.c.h.b16 %v2009
    %v3313 = vunpack.c.l.b16 %v2010
    %v3314 = vunpack.c.h.b16 %v2010
    %v3315 = vunpack.c.l.b16 %v2011
    %v3316 = vunpack.c.h.b16 %v2011
    %v3317 = vunpack.c.l.b16 %v2012
    %v3318 = vunpack.c.h.b16 %v2012
    %v3319 = vunpack.c.l.b16 %v2013
    %v3320 = vunpack.c.h.b16 %v2013
    %v3321 = vunpack.c.l.b16 %v2014
    %v3322 = vunpack.c.h.b16 %v2014
    %v3323 = vunpack.c.l.b16 %v2015
    %v3324 = vunpack.c.h.b16 %v2015
    %v3325 = vunpack.c.l.b16 %v2016
    %v3326 = vunpack.c.h.b16 %v2016
    %v3327 = vunpack.c.l.b16 %v2017
    %v3328 = vunpack.c.h.b16 %v2017
    %v3329 = vunpack.c.l.b16 %v2018
    %v3330 = vunpack.c.h.b16 %v2018
    %v3331 = vunpack.c.l.b16 %v2019
    %v3332 = vunpack.c.h.b16 %v2019
    %v3333 = vunpack.c.l.b16 %v2020
    %v3334 = vunpack.c.h.b16 %v2020
    %v3335 = vunpack.c.l.b16 %v2021
    %v3336 = vunpack.c.h.b16 %v2021
    %v3337 = vunpack.c.l.b16 %v2022
    %v3338 = vunpack.c.h.b16 %v2022
    %v3339 = vunpack.c.l.b16 %v2023
    %v3340 = vunpack.c.h.b16 %v2023
    %v3341 = vunpack.c.l.b16 %v2024
    %v3342 = vunpack.c.h.b16 %v2024
    %v3343 = vunpack.c.l.b16 %v2025
    %v3344 = vunpack.c.h.b16 %v2025
    %v3345 = vunpack.c.l.b16 %v2026
    %v3346 = vunpack.c.h.b16 %v2026
    %v3347 = vunpack.c.l.b16 %v2027
    %v3348 = vunpack.c.h.b16 %v2027
    %v3349 = vunpack.c.l.b16 %v2028
    %v3350 = vunpack.c.h.b16 %v2028
    %v3351 = vunpack.c.l.b16 %v2029
    %v3352 = vunpack.c.h.b16 %v2029
    %v3353 = vunpack.c.l.b16 %v2030
    %v3354 = vunpack.c.h.b16 %v2030
    %v3355 = vunpack.c.l.b16 %v2031
    %v3356 = vunpack.c.h.b16 %v2031
    %v3357 = vunpack.c.l.b16 %v2032
    %v3358 = vunpack.c.h.b16 %v2032
    %v3359 = vunpack.c.l.b16 %v2033
    %v3360 = vunpack.c.h.b16 %v2033
    %v3361 = vunpack.c.l.b16 %v2034
    %v3362 = vunpack.c.h.b16 %v2034
    %v3363 = vunpack.c.l.b16 %v2035
    %v3364 = vunpack.c.h.b16 %v2035
    %v3365 = vunpack.c.l.b16 %v2036
    %v3366 = vunpack.c.h.b16 %v2036
    %v3367 = vunpack.c.l.b16 %v2037
    %v3368 = vunpack.c.h.b16 %v2037
    %v3369 = vunpack.c.l.b16 %v2038
    %v3370 = vunpack.c.h.b16 %v2038
    %v3371 = vunpack.c.l.b16 %v2039
    %v3372 = vunpack.c.h.b16 %v2039
    %v3373 = vunpack.c.l.b16 %v2040
    %v3374 = vunpack.c.h.b16 %v2040
    %v3375 = vunpack.c.l.b16 %v2041
    %v3376 = vunpack.c.h.b16 %v2041
    %v3377 = vunpack.c.l.b16 %v2042
    %v3378 = vunpack.c.h.b16 %v2042
    %v3379 = vunpack.c.l.b16 %v2043
    %v3380 = vunpack.c.h.b16 %v2043
    %v3381 = vunpack.c.l.b16 %v2044
    %v3382 = vunpack.c.h.b16 %v2044
    %v3383 = vunpack.c.l.b16 %v2045
    %v3384 = vunpack.c.h.b16 %v2045
    %v3385 = vunpack.c.l.b16 %v2046
    %v3386 = vunpack.c.h.b16 %v2046
    %v3387 = vunpack.c.l.b16 %v2047
    %v3388 = vunpack.c.h.b16 %v2047
    %v3389 = vunpack.c.l.b16 %v2048
    %v3390 = vunpack.c.h.b16 %v2048
    %v3391 = vunpack.c.l.b16 %v2049
    %v3392 = vunpack.c.h.b16 %v2049
    %v3393 = vunpack.c.l.b16 %v2050
    %v3394 = vunpack.c.h.b16 %v2050
    %v3395 = vunpack.c.l.b16 %v2051
    %v3396 = vunpack.c.h.b16 %v2051
    %v3397 = vunpack.c.l.b16 %v2052
    %v3398 = vunpack.c.h.b16 %v2052
    %v3399 = vunpack.c.l.b16 %v2053
    %v3400 = vunpack.c.h.b16 %v2053
    %v3401 = vunpack.c.l.b16 %v2054
    %v3402 = vunpack.c.h.b16 %v2054
    %v3403 = vunpack.c.l.b16 %v2055
    %v3404 = vunpack.c.h.b16 %v2055
    %v3405 = vunpack.c.l.b16 %v2056
    %v3406 = vunpack.c.h.b16 %v2056
    %v3407 = vunpack.c.l.b16 %v2057
    %v3408 = vunpack.c.h.b16 %v2057
    %v3409 = vunpack.c.l.b16 %v2058
    %v3410 = vunpack.c.h.b16 %v2058
    %v3411 = vunpack.c.l.b16 %v2059
    %v3412 = vunpack.c.h.b16 %v2059
    %v3413 = vunpack.c.l.b16 %v2060
    %v3414 = vunpack.c.h.b16 %v2060
    %v3415 = vunpack.c.l.b16 %v2061
    %v3416 = vunpack.c.h.b16 %v2061
    %v3417 = vunpack.c.l.b16 %v2062
    %v3418 = vunpack.c.h.b16 %v2062
    %v3419 = vunpack.c.l.b16 %v2063
    %v3420 = vunpack.c.h.b16 %v2063
    %v3421 = vunpack.c.l.b16 %v2064
    %v3422 = vunpack.c.h.b16 %v2064
    %v3423 = vunpack.c.l.b16 %v2065
    %v3424 = vunpack.c.h.b16 %v2065
    %v3425 = vunpack.c.l.b16 %v2066
    %v3426 = vunpack.c.h.b16 %v2066
    %v3427 = vunpack.c.l.b16 %v2067
    %v3428 = vunpack.c.h.b16 %v2067
    %v3429 = vunpack.c.l.b16 %v2068
    %v3430 = vunpack.c.h.b16 %v2068
    %v3431 = vunpack.c.l.b16 %v2069
    %v3432 = vunpack.c.h.b16 %v2069
    %v3433 = vunpack.c.l.b16 %v2070
    %v3434 = vunpack.c.h.b16 %v2070
    %v3435 = vunpack.c.l.b16 %v2071
    %v3436 = vunpack.c.h.b16 %v2071
    %v3437 = vunpack.c.l.b16 %v2072
    %v3438 = vunpack.c.h.b16 %v2072
    %v3439 = vunpack.c.l.b16 %v2073
    %v3440 = vunpack.c.h.b16 %v2073
    %v3441 = vunpack.c.l.b16 %v2074
    %v3442 = vunpack.c.h.b16 %v2074
    %v3443 = vunpack.c.l.b16 %v2075
    %v3444 = vunpack.c.h.b16 %v2075
    %v3445 = vunpack.c.l.b16 %v2076
    %v3446 = vunpack.c.h.b16 %v2076
    %v3447 = vunpack.c.l.b16 %v2077
    %v3448 = vunpack.c.h.b16 %v2077
    %v3449 = vunpack.c.l.b16 %v2078
    %v3450 = vunpack.c.h.b16 %v2078
    %v3451 = vunpack.c.l.b16 %v2079
    %v3452 = vunpack.c.h.b16 %v2079
    %v3453 = vunpack.c.l.b16 %v2080
    %v3454 = vunpack.c.h.b16 %v2080
    %v3455 = vunpack.c.l.b16 %v2081
    %v3456 = vunpack.c.h.b16 %v2081
    %v3457 = vunpack.c.l.b16 %v2082
    %v3458 = vunpack.c.h.b16 %v2082
    %v3459 = vunpack.c.l.b16 %v2083
    %v3460 = vunpack.c.h.b16 %v2083
    %v3461 = vunpack.c.l.b16 %v2084
    %v3462 = vunpack.c.h.b16 %v2084
    %v3463 = vunpack.c.l.b16 %v2085
    %v3464 = vunpack.c.h.b16 %v2085
    %v3465 = vunpack.c.l.b16 %v2086
    %v3466 = vunpack.c.h.b16 %v2086
    %v3467 = vunpack.c.l.b16 %v2087
    %v3468 = vunpack.c.h.b16 %v2087
    %v3469 = vunpack.c.l.b16 %v2088
    %v3470 = vunpack.c.h.b16 %v2088
    %v3471 = vunpack.c.l.b16 %v2089
    %v3472 = vunpack.c.h.b16 %v2089
    %v3473 = vunpack.c.l.b16 %v2090
    %v3474 = vunpack.c.h.b16 %v2090
    %v3475 = vunpack.c.l.b16 %v2091
    %v3476 = vunpack.c.h.b16 %v2091
    %v3477 = vunpack.c.l.b16 %v2092
    %v3478 = vunpack.c.h.b16 %v2092
    %v3479 = vunpack.c.l.b16 %v2093
    %v3480 = vunpack.c.h.b16 %v2093
    %v3481 = vunpack.c.l.b16 %v2094
    %v3482 = vunpack.c.h.b16 %v2094
    %v3483 = vunpack.c.l.b16 %v2095
    %v3484 = vunpack.c.h.b16 %v2095
    %v3485 = vunpack.c.l.b16 %v2096
    %v3486 = vunpack.c.h.b16 %v2096
    %v3487 = vunpack.c.l.b16 %v2097
    %v3488 = vunpack.c.h.b16 %v2097
    %v3489 = vunpack.c.l.b16 %v2098
    %v3490 = vunpack.c.h.b16 %v2098
    %v3491 = vunpack.c.l.b16 %v2099
    %v3492 = vunpack.c.h.b16 %v2099
    %v3493 = vunpack.c.l.b16 %v2100
    %v3494 = vunpack.c.h.b16 %v2100
    %v3495 = vunpack.c.l.b16 %v2101
    %v3496 = vunpack.c.h.b16 %v2101
    %v3497 = vunpack.c.l.b16 %v2102
    %v3498 = vunpack.c.h.b16 %v2102
    %v3499 = vunpack.c.l.b16 %v2103
    %v3500 = vunpack.c.h.b16 %v2103
    %v3501 = vunpack.c.l.b16 %v2104
    %v3502 = vunpack.c.h.b16 %v2104
    %v3503 = vunpack.c.l.b16 %v2105
    %v3504 = vunpack.c.h.b16 %v2105
    %v3505 = vunpack.c.l.b16 %v2106
    %v3506 = vunpack.c.h.b16 %v2106
    %v3507 = vunpack.c.l.b16 %v2107
    %v3508 = vunpack.c.h.b16 %v2107
    %v3509 = vunpack.c.l.b16 %v2108
    %v3510 = vunpack.c.h.b16 %v2108
    %v3511 = vunpack.c.l.b16 %v2109
    %v3512 = vunpack.c.h.b16 %v2109
    %v3513 = vunpack.c.l.b16 %v2110
    %v3514 = vunpack.c.h.b16 %v2110
    %v3515 = vunpack.c.l.b16 %v2111
    %v3516 = vunpack.c.h.b16 %v2111
    %v3517 = vunpack.c.l.b16 %v2112
    %v3518 = vunpack.c.h.b16 %v2112
    %v3519 = vunpack.c.l.b16 %v2113
    %v3520 = vunpack.c.h.b16 %v2113
    %v3521 = vunpack.c.l.b16 %v2114
    %v3522 = vunpack.c.h.b16 %v2114
    %v3523 = vunpack.c.l.b16 %v2115
    %v3524 = vunpack.c.h.b16 %v2115
    %v3525 = vunpack.c.l.b16 %v2116
    %v3526 = vunpack.c.h.b16 %v2116
    %v3527 = vunpack.c.l.b16 %v2117
    %v3528 = vunpack.c.h.b16 %v2117
    %v3529 = vunpack.c.l.b16 %v2118
    %v3530 = vunpack.c.h.b16 %v2118
    %v3531 = vunpack.c.l.b16 %v2119
    %v3532 = vunpack.c.h.b16 %v2119
    %v3533 = vunpack.c.l.b16 %v2120
    %v3534 = vunpack.c.h.b16 %v2120
    %v3535 = vunpack.c.l.b16 %v2121
    %v3536 = vunpack.c.h.b16 %v2121
    %v3537 = vunpack.c.l.b16 %v2122
    %v3538 = vunpack.c.h.b16 %v2122
    %v3539 = vunpack.c.l.b16 %v2123
    %v3540 = vunpack.c.h.b16 %v2123
    %v3541 = vunpack.c.l.b16 %v2124
    %v3542 = vunpack.c.h.b16 %v2124
    %v3543 = vunpack.c.l.b16 %v2125
    %v3544 = vunpack.c.h.b16 %v2125
    %v3545 = vunpack.c.l.b16 %v2126
    %v3546 = vunpack.c.h.b16 %v2126
    %v3547 = vunpack.c.l.b16 %v2127
    %v3548 = vunpack.c.h.b16 %v2127
    %v3549 = vunpack.c.l.b16 %v2128
    %v3550 = vunpack.c.h.b16 %v2128
    %v3551 = vunpack.c.l.b16 %v2129
    %v3552 = vunpack.c.h.b16 %v2129
    %v3553 = vunpack.c.l.b16 %v2130
    %v3554 = vunpack.c.h.b16 %v2130
    %v3555 = vunpack.c.l.b16 %v2131
    %v3556 = vunpack.c.h.b16 %v2131
    %v3557 = vunpack.c.l.b16 %v2132
    %v3558 = vunpack.c.h.b16 %v2132
    %v3559 = vunpack.c.l.b16 %v2133
    %v3560 = vunpack.c.h.b16 %v2133
    %v3561 = vunpack.c.l.b16 %v2134
    %v3562 = vunpack.c.h.b16 %v2134
    %v3563 = vunpack.c.l.b16 %v2135
    %v3564 = vunpack.c.h.b16 %v2135
    %v3565 = vunpack.c.l.b16 %v2136
    %v3566 = vunpack.c.h.b16 %v2136
    %v3567 = vunpack.c.l.b16 %v2137
    %v3568 = vunpack.c.h.b16 %v2137
    %v3569 = vunpack.c.l.b16 %v2138
    %v3570 = vunpack.c.h.b16 %v2138
    %v3571 = vunpack.c.l.b16 %v2139
    %v3572 = vunpack.c.h.b16 %v2139
    %v3573 = vunpack.c.l.b16 %v2140
    %v3574 = vunpack.c.h.b16 %v2140
    %v3575 = vunpack.c.l.b16 %v2141
    %v3576 = vunpack.c.h.b16 %v2141
    %v3577 = vunpack.c.l.b16 %v2142
    %v3578 = vunpack.c.h.b16 %v2142
    %v3579 = vunpack.c.l.b16 %v2143
    %v3580 = vunpack.c.h.b16 %v2143
    %v3581 = vunpack.c.l.b16 %v2144
    %v3582 = vunpack.c.h.b16 %v2144
    %v3583 = vunpack.c.l.b16 %v2145
    %v3584 = vunpack.c.h.b16 %v2145
    %v3585 = vunpack.c.l.b16 %v2146
    %v3586 = vunpack.c.h.b16 %v2146
    %v3587 = vunpack.c.l.b16 %v2147
    %v3588 = vunpack.c.h.b16 %v2147
    %v3589 = vunpack.c.l.b16 %v2148
    %v3590 = vunpack.c.h.b16 %v2148
    %v3591 = vunpack.c.l.b16 %v2149
    %v3592 = vunpack.c.h.b16 %v2149
    %v3593 = vunpack.c.l.b16 %v2150
    %v3594 = vunpack.c.h.b16 %v2150
    %v3595 = vunpack.c.l.b16 %v2151
    %v3596 = vunpack.c.h.b16 %v2151
    %v3597 = vunpack.c.l.b16 %v2152
    %v3598 = vunpack.c.h.b16 %v2152
    %v3599 = vunpack.c.l.b16 %v2153
    %v3600 = vunpack.c.h.b16 %v2153
    %v3601 = vunpack.c.l.b16 %v2154
    %v3602 = vunpack.c.h.b16 %v2154
    %v3603 = vunpack.c.l.b16 %v2155
    %v3604 = vunpack.c.h.b16 %v2155
    %v3605 = vunpack.c.l.b16 %v2156
    %v3606 = vunpack.c.h.b16 %v2156
    %v3607 = vunpack.c.l.b16 %v2157
    %v3608 = vunpack.c.h.b16 %v2157
    %v3609 = vunpack.c.l.b16 %v2158
    %v3610 = vunpack.c.h.b16 %v2158
    %v3611 = vunpack.c.l.b16 %v2159
    %v3612 = vunpack.c.h.b16 %v2159
    %v3613 = vunpack.c.l.b16 %v2160
    %v3614 = vunpack.c.h.b16 %v2160
    %v3615 = vunpack.c.l.b16 %v2161
    %v3616 = vunpack.c.h.b16 %v2161
    %v3617 = vunpack.c.l.b16 %v2162
    %v3618 = vunpack.c.h.b16 %v2162
    %v3619 = vunpack.c.l.b16 %v2163
    %v3620 = vunpack.c.h.b16 %v2163
    %v3621 = vunpack.c.l.b16 %v2164
    %v3622 = vunpack.c.h.b16 %v2164
    %v3623 = vunpack.c.l.b16 %v2165
    %v3624 = vunpack.c.h.b16 %v2165
    %v3625 = vunpack.c.l.b16 %v2166
    %v3626 = vunpack.c.h.b16 %v2166
    %v3627 = vunpack.c.l.b16 %v2167
    %v3628 = vunpack.c.h.b16 %v2167
    %v3629 = vunpack.c.l.b16 %v2168
    %v3630 = vunpack.c.h.b16 %v2168
    %v3631 = vunpack.c.l.b16 %v2169
    %v3632 = vunpack.c.h.b16 %v2169
    %v3633 = vunpack.c.l.b16 %v2170
    %v3634 = vunpack.c.h.b16 %v2170
    %v3635 = vunpack.c.l.b16 %v2171
    %v3636 = vunpack.c.h.b16 %v2171
    %v3637 = vunpack.c.l.b16 %v2172
    %v3638 = vunpack.c.h.b16 %v2172
    %v3639 = vunpack.c.l.b16 %v2173
    %v3640 = vunpack.c.h.b16 %v2173
    %v3641 = vunpack.c.l.b16 %v2174
    %v3642 = vunpack.c.h.b16 %v2174
    %v3643 = vunpack.c.l.b16 %v2175
    %v3644 = vunpack.c.h.b16 %v2175
    %v3645 = vunpack.c.l.b16 %v2176
    %v3646 = vunpack.c.h.b16 %v2176
    %v3647 = vunpack.c.l.b16 %v2177
    %v3648 = vunpack.c.h.b16 %v2177
    %v3649 = vunpack.c.l.b16 %v2178
    %v3650 = vunpack.c.h.b16 %v2178
    %v3651 = vunpack.c.l.b16 %v2179
    %v3652 = vunpack.c.h.b16 %v2179
    %v3653 = vunpack.c.l.b16 %v2180
    %v3654 = vunpack.c.h.b16 %v2180
    %v3655 = vunpack.c.l.b16 %v2181
    %v3656 = vunpack.c.h.b16 %v2181
    %v3657 = vunpack.c.l.b16 %v2182
    %v3658 = vunpack.c.h.b16 %v2182
    %v3659 = vunpack.c.l.b16 %v2183
    %v3660 = vunpack.c.h.b16 %v2183
    %v3661 = vunpack.c.l.b16 %v2184
    %v3662 = vunpack.c.h.b16 %v2184
    %v3663 = vunpack.c.l.b16 %v2185
    %v3664 = vunpack.c.h.b16 %v2185
    %v3665 = vunpack.c.l.b16 %v2186
    %v3666 = vunpack.c.h.b16 %v2186
    %v3667 = vunpack.c.l.b16 %v2187
    %v3668 = vunpack.c.h.b16 %v2187
    %v3669 = vunpack.c.l.b16 %v2188
    %v3670 = vunpack.c.h.b16 %v2188
    %v3671 = vunpack.c.l.b16 %v2189
    %v3672 = vunpack.c.h.b16 %v2189
    %v3673 = vunpack.c.l.b16 %v2190
    %v3674 = vunpack.c.h.b16 %v2190
    %v3675 = vunpack.c.l.b16 %v2191
    %v3676 = vunpack.c.h.b16 %v2191
    %v3677 = vunpack.c.l.b16 %v2192
    %v3678 = vunpack.c.h.b16 %v2192
    %v3679 = vunpack.c.l.b16 %v2193
    %v3680 = vunpack.c.h.b16 %v2193
    %v3681 = vunpack.c.l.b16 %v2194
    %v3682 = vunpack.c.h.b16 %v2194
    %v3683 = vunpack.c.l.b16 %v2195
    %v3684 = vunpack.c.h.b16 %v2195
    %v3685 = vunpack.c.l.b16 %v2196
    %v3686 = vunpack.c.h.b16 %v2196
    %v3687 = vunpack.c.l.b16 %v2197
    %v3688 = vunpack.c.h.b16 %v2197
    %v3689 = vunpack.c.l.b16 %v2198
    %v3690 = vunpack.c.h.b16 %v2198
    %v3691 = vunpack.c.l.b16 %v2199
    %v3692 = vunpack.c.h.b16 %v2199
    %v3693 = vunpack.c.l.b16 %v2200
    %v3694 = vunpack.c.h.b16 %v2200
    %v3695 = vunpack.c.l.b16 %v2201
    %v3696 = vunpack.c.h.b16 %v2201
    %v3697 = vunpack.c.l.b16 %v2202
    %v3698 = vunpack.c.h.b16 %v2202
    %v3699 = vunpack.c.l.b16 %v2203
    %v3700 = vunpack.c.h.b16 %v2203
    %v3701 = vunpack.c.l.b16 %v2204
    %v3702 = vunpack.c.h.b16 %v2204
    %v3703 = vunpack.c.l.b16 %v2205
    %v3704 = vunpack.c.h.b16 %v2205
    %v3705 = vunpack.c.l.b16 %v2206
    %v3706 = vunpack.c.h.b16 %v2206
    %v3707 = vunpack.c.l.b16 %v2207
    %v3708 = vunpack.c.h.b16 %v2207
    %v3709 = vunpack.c.l.b16 %v2208
    %v3710 = vunpack.c.h.b16 %v2208
    %v3711 = vunpack.c.l.b16 %v2209
    %v3712 = vunpack.c.h.b16 %v2209
    %v3713 = vunpack.c.l.b16 %v2210
    %v3714 = vunpack.c.h.b16 %v2210
    %v3715 = vunpack.c.l.b16 %v2211
    %v3716 = vunpack.c.h.b16 %v2211
    %v3717 = vunpack.c.l.b16 %v2212
    %v3718 = vunpack.c.h.b16 %v2212
    %v3719 = vunpack.c.l.b16 %v2213
    %v3720 = vunpack.c.h.b16 %v2213
    %v3721 = vunpack.c.l.b16 %v2214
    %v3722 = vunpack.c.h.b16 %v2214
    %v3723 = vunpack.c.l.b16 %v2215
    %v3724 = vunpack.c.h.b16 %v2215
    %v3725 = vunpack.c.l.b16 %v2216
    %v3726 = vunpack.c.h.b16 %v2216
    %v3727 = vunpack.c.l.b16 %v2217
    %v3728 = vunpack.c.h.b16 %v2217
    %v3729 = vunpack.c.l.b16 %v2218
    %v3730 = vunpack.c.h.b16 %v2218
    %v3731 = vunpack.c.l.b16 %v2219
    %v3732 = vunpack.c.h.b16 %v2219
    %v3733 = vunpack.c.l.b16 %v2220
    %v3734 = vunpack.c.h.b16 %v2220
    %v3735 = vunpack.c.l.b16 %v2221
    %v3736 = vunpack.c.h.b16 %v2221
    %v3737 = vunpack.c.l.b16 %v2222
    %v3738 = vunpack.c.h.b16 %v2222
    %v3739 = vunpack.c.l.b16 %v2223
    %v3740 = vunpack.c.h.b16 %v2223
    %v3741 = vunpack.c.l.b16 %v2224
    %v3742 = vunpack.c.h.b16 %v2224
    %v3743 = vunpack.c.l.b16 %v2225
    %v3744 = vunpack.c.h.b16 %v2225
    %v3745 = vunpack.c.l.b16 %v2226
    %v3746 = vunpack.c.h.b16 %v2226
    %v3747 = vunpack.c.l.b16 %v2227
    %v3748 = vunpack.c.h.b16 %v2227
    %v3749 = vunpack.c.l.b16 %v2228
    %v3750 = vunpack.c.h.b16 %v2228
    %v3751 = vunpack.c.l.b16 %v2229
    %v3752 = vunpack.c.h.b16 %v2229
    %v3753 = vunpack.c.l.b16 %v2230
    %v3754 = vunpack.c.h.b16 %v2230
    %v3755 = vunpack.c.l.b16 %v2231
    %v3756 = vunpack.c.h.b16 %v2231
    %v3757 = vunpack.c.l.b16 %v2232
    %v3758 = vunpack.c.h.b16 %v2232
    %v3759 = vunpack.c.l.b16 %v2233
    %v3760 = vunpack.c.h.b16 %v2233
    %v3761 = vunpack.c.l.b16 %v2234
    %v3762 = vunpack.c.h.b16 %v2234
    %v3763 = vunpack.c.l.b16 %v2235
    %v3764 = vunpack.c.h.b16 %v2235
    %v3765 = vunpack.c.l.b16 %v2236
    %v3766 = vunpack.c.h.b16 %v2236
    %v3767 = vunpack.c.l.b16 %v2237
    %v3768 = vunpack.c.h.b16 %v2237
    %v3769 = vunpack.c.l.b16 %v2238
    %v3770 = vunpack.c.h.b16 %v2238
    %v3771 = vunpack.c.l.b16 %v2239
    %v3772 = vunpack.c.h.b16 %v2239
    %v3773 = vunpack.c.l.b16 %v2240
    %v3774 = vunpack.c.h.b16 %v2240
    %v3775 = vunpack.c.l.b16 %v2241
    %v3776 = vunpack.c.h.b16 %v2241
    %v3777 = vunpack.c.l.b16 %v2242
    %v3778 = vunpack.c.h.b16 %v2242
    %v3779 = vunpack.c.l.b16 %v2243
    %v3780 = vunpack.c.h.b16 %v2243
    %v3781 = vunpack.c.l.b16 %v2244
    %v3782 = vunpack.c.h.b16 %v2244
    %v3783 = vunpack.c.l.b16 %v2245
    %v3784 = vunpack.c.h.b16 %v2245
    %v3785 = vunpack.c.l.b16 %v2246
    %v3786 = vunpack.c.h.b16 %v2246
    %v3787 = vunpack.c.l.b16 %v2247
    %v3788 = vunpack.c.h.b16 %v2247
    %v3789 = vunpack.c.l.b16 %v2248
    %v3790 = vunpack.c.h.b16 %v2248
    %v3791 = vunpack.c.l.b16 %v2249
    %v3792 = vunpack.c.h.b16 %v2249
    %v3793 = vunpack.c.l.b16 %v2250
    %v3794 = vunpack.c.h.b16 %v2250
    %v3795 = vunpack.c.l.b16 %v2251
    %v3796 = vunpack.c.h.b16 %v2251
    %v3797 = vunpack.c.l.b16 %v2252
    %v3798 = vunpack.c.h.b16 %v2252
    %v3799 = vunpack.c.l.b16 %v2253
    %v3800 = vunpack.c.h.b16 %v2253
    %v3801 = vunpack.c.l.b16 %v2254
    %v3802 = vunpack.c.h.b16 %v2254
    %v3803 = vunpack.c.l.b16 %v2255
    %v3804 = vunpack.c.h.b16 %v2255
    %v3805 = vunpack.c.l.b16 %v2256
    %v3806 = vunpack.c.h.b16 %v2256
    %v3807 = vunpack.c.l.b16 %v2257
    %v3808 = vunpack.c.h.b16 %v2257
    %v3809 = vunpack.c.l.b16 %v2258
    %v3810 = vunpack.c.h.b16 %v2258
    %v3811 = vunpack.c.l.b16 %v2259
    %v3812 = vunpack.c.h.b16 %v2259
    %v3813 = vunpack.c.l.b16 %v2260
    %v3814 = vunpack.c.h.b16 %v2260
    %v3815 = vunpack.c.l.b16 %v2261
    %v3816 = vunpack.c.h.b16 %v2261
    %v3817 = vunpack.c.l.b16 %v2262
    %v3818 = vunpack.c.h.b16 %v2262
    %v3819 = vunpack.c.l.b16 %v2263
    %v3820 = vunpack.c.h.b16 %v2263
    %v3821 = vunpack.c.l.b16 %v2264
    %v3822 = vunpack.c.h.b16 %v2264
    %v3823 = vpack.c.b16 %v2803, %v2799
    %v3824 = vpack.c.b16 %v2804, %v2800
    %v3825 = vpack.c.b16 %v2805, %v2801
    %v3826 = vpack.c.b16 %v2806, %v2802
    %v3827 = vpack.c.b16 %v2811, %v2807
    %v3828 = vpack.c.b16 %v2812, %v2808
    %v3829 = vpack.c.b16 %v2813, %v2809
    %v3830 = vpack.c.b16 %v2814, %v2810
    %v3831 = vpack.c.b16 %v2819, %v2815
    %v3832 = vpack.c.b16 %v2820, %v2816
    %v3833 = vpack.c.b16 %v2821, %v2817
    %v3834 = vpack.c.b16 %v2822, %v2818
    %v3835 = vpack.c.b16 %v2827, %v2823
    %v3836 = vpack.c.b16 %v2828, %v2824
    %v3837 = vpack.c.b16 %v2829, %v2825
    %v3838 = vpack.c.b16 %v2830, %v2826
    %v3839 = vpack.c.b16 %v2835, %v2831
    %v3840 = vpack.c.b16 %v2836, %v2832
    %v3841 = vpack.c.b16 %v2837, %v2833
    %v3842 = vpack.c.b16 %v2838, %v2834
    %v3843 = vpack.c.b16 %v2843, %v2839
    %v3844 = vpack.c.b16 %v2844, %v2840
    %v3845 = vpack.c.b16 %v2845, %v2841
    %v3846 = vpack.c.b16 %v2846, %v2842
    %v3847 = vpack.c.b16 %v2851, %v2847
    %v3848 = vpack.c.b16 %v2852, %v2848
    %v3849 = vpack.c.b16 %v2853, %v2849
    %v3850 = vpack.c.b16 %v2854, %v2850
    %v3851 = vpack.c.b16 %v2859, %v2855
    %v3852 = vpack.c.b16 %v2860, %v2856
    %v3853 = vpack.c.b16 %v2861, %v2857
    %v3854 = vpack.c.b16 %v2862, %v2858
    %v3855 = vpack.c.b16 %v2867, %v2863
    %v3856 = vpack.c.b16 %v2868, %v2864
    %v3857 = vpack.c.b16 %v2869, %v2865
    %v3858 = vpack.c.b16 %v2870, %v2866
    %v3859 = vpack.c.b16 %v2875, %v2871
    %v3860 = vpack.c.b16 %v2876, %v2872
    %v3861 = vpack.c.b16 %v2877, %v2873
    %v3862 = vpack.c.b16 %v2878, %v2874
    %v3863 = vpack.c.b16 %v2883, %v2879
    %v3864 = vpack.c.b16 %v2884, %v2880
    %v3865 = vpack.c.b16 %v2885, %v2881
    %v3866 = vpack.c.b16 %v2886, %v2882
    %v3867 = vpack.c.b16 %v2891, %v2887
    %v3868 = vpack.c.b16 %v2892, %v2888
    %v3869 = vpack.c.b16 %v2893, %v2889
    %v3870 = vpack.c.b16 %v2894, %v2890
    %v3871 = vpack.c.b16 %v2899, %v2895
    %v3872 = vpack.c.b16 %v2900, %v2896
    %v3873 = vpack.c.b16 %v2901, %v2897
    %v3874 = vpack.c.b16 %v2902, %v2898
    %v3875 = vpack.c.b16 %v2907, %v2903
    %v3876 = vpack.c.b16 %v2908, %v2904
    %v3877 = vpack.c.b16 %v2909, %v2905
    %v3878 = vpack.c.b16 %v2910, %v2906
    %v3879 = vpack.c.b16 %v2915, %v2911
    %v3880 = vpack.c.b16 %v2916, %v2912
    %v3881 = vpack.c.b16 %v2917, %v2913
    %v3882 = vpack.c.b16 %v2918, %v2914
    %v3883 = vpack.c.b16 %v2923, %v2919
    %v3884 = vpack.c.b16 %v2924, %v2920
    %v3885 = vpack.c.b16 %v2925, %v2921
    %v3886 = vpack.c.b16 %v2926, %v2922
    %v3887 = vpack.c.b16 %v2931, %v2927
    %v3888 = vpack.c.b16 %v2932, %v2928
    %v3889 = vpack.c.b16 %v2933, %v2929
    %v3890 = vpack.c.b16 %v2934, %v2930
    %v3891 = vpack.c.b16 %v2939, %v2935
    %v3892 = vpack.c.b16 %v2940, %v2936
    %v3893 = vpack.c.b16 %v2941, %v2937
    %v3894 = vpack.c.b16 %v2942, %v2938
    %v3895 = vpack.c.b16 %v2947, %v2943
    %v3896 = vpack.c.b16 %v2948, %v2944
    %v3897 = vpack.c.b16 %v2949, %v2945
    %v3898 = vpack.c.b16 %v2950, %v2946
    %v3899 = vpack.c.b16 %v2955, %v2951
    %v3900 = vpack.c.b16 %v2956, %v2952
    %v3901 = vpack.c.b16 %v2957, %v2953
    %v3902 = vpack.c.b16 %v2958, %v2954
    %v3903 = vpack.c.b16 %v2963, %v2959
    %v3904 = vpack.c.b16 %v2964, %v2960
    %v3905 = vpack.c.b16 %v2965, %v2961
    %v3906 = vpack.c.b16 %v2966, %v2962
    %v3907 = vpack.c.b16 %v2971, %v2967
    %v3908 = vpack.c.b16 %v2972, %v2968
    %v3909 = vpack.c.b16 %v2973, %v2969
    %v3910 = vpack.c.b16 %v2974, %v2970
    %v3911 = vpack.c.b16 %v2979, %v2975
    %v3912 = vpack.c.b16 %v2980, %v2976
    %v3913 = vpack.c.b16 %v2981, %v2977
    %v3914 = vpack.c.b16 %v2982, %v2978
    %v3915 = vpack.c.b16 %v2987, %v2983
    %v3916 = vpack.c.b16 %v2988, %v2984
    %v3917 = vpack.c.b16 %v2989, %v2985
    %v3918 = vpack.c.b16 %v2990, %v2986
    %v3919 = vpack.c.b16 %v2995, %v2991
    %v3920 = vpack.c.b16 %v2996, %v2992
    %v3921 = vpack.c.b16 %v2997, %v2993
    %v3922 = vpack.c.b16 %v2998, %v2994
    %v3923 = vpack.c.b16 %v3003, %v2999
    %v3924 = vpack.c.b16 %v3004, %v3000
    %v3925 = vpack.c.b16 %v3005, %v3001
    %v3926 = vpack.c.b16 %v3006, %v3002
    %v3927 = vpack.c.b16 %v3011, %v3007
    %v3928 = vpack.c.b16 %v3012, %v3008
    %v3929 = vpack.c.b16 %v3013, %v3009
    %v3930 = vpack.c.b16 %v3014, %v3010
    %v3931 = vpack.c.b16 %v3019, %v3015
    %v3932 = vpack.c.b16 %v3020, %v3016
    %v3933 = vpack.c.b16 %v3021, %v3017
    %v3934 = vpack.c.b16 %v3022, %v3018
    %v3935 = vpack.c.b16 %v3027, %v3023
    %v3936 = vpack.c.b16 %v3028, %v3024
    %v3937 = vpack.c.b16 %v3029, %v3025
    %v3938 = vpack.c.b16 %v3030, %v3026
    %v3939 = vpack.c.b16 %v3035, %v3031
    %v3940 = vpack.c.b16 %v3036, %v3032
    %v3941 = vpack.c.b16 %v3037, %v3033
    %v3942 = vpack.c.b16 %v3038, %v3034
    %v3943 = vpack.c.b16 %v3043, %v3039
    %v3944 = vpack.c.b16 %v3044, %v3040
    %v3945 = vpack.c.b16 %v3045, %v3041
    %v3946 = vpack.c.b16 %v3046, %v3042
    %v3947 = vpack.c.b16 %v3051, %v3047
    %v3948 = vpack.c.b16 %v3052, %v3048
    %v3949 = vpack.c.b16 %v3053, %v3049
    %v3950 = vpack.c.b16 %v3054, %v3050
    %v3951 = vpack.c.b16 %v3059, %v3055
    %v3952 = vpack.c.b16 %v3060, %v3056
    %v3953 = vpack.c.b16 %v3061, %v3057
    %v3954 = vpack.c.b16 %v3062, %v3058
    %v3955 = vpack.c.b16 %v3067, %v3063
    %v3956 = vpack.c.b16 %v3068, %v3064
    %v3957 = vpack.c.b16 %v3069, %v3065
    %v3958 = vpack.c.b16 %v3070, %v3066
    %v3959 = vpack.c.b16 %v3075, %v3071
    %v3960 = vpack.c.b16 %v3076, %v3072
    %v3961 = vpack.c.b16 %v3077, %v3073
    %v3962 = vpack.c.b16 %v3078, %v3074
    %v3963 = vpack.c.b16 %v3083, %v3079
    %v3964 = vpack.c.b16 %v3084, %v3080
    %v3965 = vpack.c.b16 %v3085, %v3081
    %v3966 = vpack.c.b16 %v3086, %v3082
    %v3967 = vpack.c.b16 %v3091, %v3087
    %v3968 = vpack.c.b16 %v3092, %v3088
    %v3969 = vpack.c.b16 %v3093, %v3089
    %v3970 = vpack.c.b16 %v3094, %v3090
    %v3971 = vpack.c.b16 %v3099, %v3095
    %v3972 = vpack.c.b16 %v3100, %v3096
    %v3973 = vpack.c.b16 %v3101, %v3097
    %v3974 = vpack.c.b16 %v3102, %v3098
    %v3975 = vpack.c.b16 %v3107, %v3103
    %v3976 = vpack.c.b16 %v3108, %v3104
    %v3977 = vpack.c.b16 %v3109, %v3105
    %v3978 = vpack.c.b16 %v3110, %v3106
    %v3979 = vpack.c.b16 %v3115, %v3111
    %v3980 = vpack.c.b16 %v3116, %v3112
    %v3981 = vpack.c.b16 %v3117, %v3113
    %v3982 = vpack.c.b16 %v3118, %v3114
    %v3983 = vpack.c.b16 %v3123, %v3119
    %v3984 = vpack.c.b16 %v3124, %v3120
    %v3985 = vpack.c.b16 %v3125, %v3121
    %v3986 = vpack.c.b16 %v3126, %v3122
    %v3987 = vpack.c.b16 %v3131, %v3127
    %v3988 = vpack.c.b16 %v3132, %v3128
    %v3989 = vpack.c.b16 %v3133, %v3129
    %v3990 = vpack.c.b16 %v3134, %v3130
    %v3991 = vpack.c.b16 %v3139, %v3135
    %v3992 = vpack.c.b16 %v3140, %v3136
    %v3993 = vpack.c.b16 %v3141, %v3137
    %v3994 = vpack.c.b16 %v3142, %v3138
    %v3995 = vpack.c.b16 %v3147, %v3143
    %v3996 = vpack.c.b16 %v3148, %v3144
    %v3997 = vpack.c.b16 %v3149, %v3145
    %v3998 = vpack.c.b16 %v3150, %v3146
    %v3999 = vpack.c.b16 %v3155, %v3151
    %v4000 = vpack.c.b16 %v3156, %v3152
    %v4001 = vpack.c.b16 %v3157, %v3153
    %v4002 = vpack.c.b16 %v3158, %v3154
    %v4003 = vpack.c.b16 %v3163, %v3159
    %v4004 = vpack.c.b16 %v3164, %v3160
    %v4005 = vpack.c.b16 %v3165, %v3161
    %v4006 = vpack.c.b16 %v3166, %v3162
    %v4007 = vpack.c.b16 %v3171, %v3167
    %v4008 = vpack.c.b16 %v3172, %v3168
    %v4009 = vpack.c.b16 %v3173, %v3169
    %v4010 = vpack.c.b16 %v3174, %v3170
    %v4011 = vpack.c.b16 %v3179, %v3175
    %v4012 = vpack.c.b16 %v3180, %v3176
    %v4013 = vpack.c.b16 %v3181, %v3177
    %v4014 = vpack.c.b16 %v3182, %v3178
    %v4015 = vpack.c.b16 %v3187, %v3183
    %v4016 = vpack.c.b16 %v3188, %v3184
    %v4017 = vpack.c.b16 %v3189, %v3185
    %v4018 = vpack.c.b16 %v3190, %v3186
    %v4019 = vpack.c.b16 %v3195, %v3191
    %v4020 = vpack.c.b16 %v3196, %v3192
    %v4021 = vpack.c.b16 %v3197, %v3193
    %v4022 = vpack.c.b16 %v3198, %v3194
    %v4023 = vpack.c.b16 %v3203, %v3199
    %v4024 = vpack.c.b16 %v3204, %v3200
    %v4025 = vpack.c.b16 %v3205, %v3201
    %v4026 = vpack.c.b16 %v3206, %v3202
    %v4027 = vpack.c.b16 %v3211, %v3207
    %v4028 = vpack.c.b16 %v3212, %v3208
    %v4029 = vpack.c.b16 %v3213, %v3209
    %v4030 = vpack.c.b16 %v3214, %v3210
    %v4031 = vpack.c.b16 %v3219, %v3215
    %v4032 = vpack.c.b16 %v3220, %v3216
    %v4033 = vpack.c.b16 %v3221, %v3217
    %v4034 = vpack.c.b16 %v3222, %v3218
    %v4035 = vpack.c.b16 %v3227, %v3223
    %v4036 = vpack.c.b16 %v3228, %v3224
    %v4037 = vpack.c.b16 %v3229, %v3225
    %v4038 = vpack.c.b16 %v3230, %v3226
    %v4039 = vpack.c.b16 %v3235, %v3231
    %v4040 = vpack.c.b16 %v3236, %v3232
    %v4041 = vpack.c.b16 %v3237, %v3233
    %v4042 = vpack.c.b16 %v3238, %v3234
    %v4043 = vpack.c.b16 %v3243, %v3239
    %v4044 = vpack.c.b16 %v3244, %v3240
    %v4045 = vpack.c.b16 %v3245, %v3241
    %v4046 = vpack.c.b16 %v3246, %v3242
    %v4047 = vpack.c.b16 %v3251, %v3247
    %v4048 = vpack.c.b16 %v3252, %v3248
    %v4049 = vpack.c.b16 %v3253, %v3249
    %v4050 = vpack.c.b16 %v3254, %v3250
    %v4051 = vpack.c.b16 %v3259, %v3255
    %v4052 = vpack.c.b16 %v3260, %v3256
    %v4053 = vpack.c.b16 %v3261, %v3257
    %v4054 = vpack.c.b16 %v3262, %v3258
    %v4055 = vpack.c.b16 %v3267, %v3263
    %v4056 = vpack.c.b16 %v3268, %v3264
    %v4057 = vpack.c.b16 %v3269, %v3265
    %v4058 = vpack.c.b16 %v3270, %v3266
    %v4059 = vpack.c.b16 %v3275, %v3271
    %v4060 = vpack.c.b16 %v3276, %v3272
    %v4061 = vpack.c.b16 %v3277, %v3273
    %v4062 = vpack.c.b16 %v3278, %v3274
    %v4063 = vpack.c.b16 %v3283, %v3279
    %v4064 = vpack.c.b16 %v3284, %v3280
    %v4065 = vpack.c.b16 %v3285, %v3281
    %v4066 = vpack.c.b16 %v3286, %v3282
    %v4067 = vpack.c.b16 %v3291, %v3287
    %v4068 = vpack.c.b16 %v3292, %v3288
    %v4069 = vpack.c.b16 %v3293, %v3289
    %v4070 = vpack.c.b16 %v3294, %v3290
    %v4071 = vpack.c.b16 %v3299, %v3295
    %v4072 = vpack.c.b16 %v3300, %v3296
    %v4073 = vpack.c.b16 %v3301, %v3297
    %v4074 = vpack.c.b16 %v3302, %v3298
    %v4075 = vpack.c.b16 %v3307, %v3303
    %v4076 = vpack.c.b16 %v3308, %v3304
    %v4077 = vpack.c.b16 %v3309, %v3305
    %v4078 = vpack.c.b16 %v3310, %v3306
    %v4079 = vpack.c.b16 %v3315, %v3311
    %v4080 = vpack.c.b16 %v3316, %v3312
    %v4081 = vpack.c.b16 %v3317, %v3313
    %v4082 = vpack.c.b16 %v3318, %v3314
    %v4083 = vpack.c.b16 %v3323, %v3319
    %v4084 = vpack.c.b16 %v3324, %v3320
    %v4085 = vpack.c.b16 %v3325, %v3321
    %v4086 = vpack.c.b16 %v3326, %v3322
    %v4087 = vpack.c.b16 %v3331, %v3327
    %v4088 = vpack.c.b16 %v3332, %v3328
    %v4089 = vpack.c.b16 %v3333, %v3329
    %v4090 = vpack.c.b16 %v3334, %v3330
    %v4091 = vpack.c.b16 %v3339, %v3335
    %v4092 = vpack.c.b16 %v3340, %v3336
    %v4093 = vpack.c.b16 %v3341, %v3337
    %v4094 = vpack.c.b16 %v3342, %v3338
    %v4095 = vpack.c.b16 %v3347, %v3343
    %v4096 = vpack.c.b16 %v3348, %v3344
    %v4097 = vpack.c.b16 %v3349, %v3345
    %v4098 = vpack.c.b16 %v3350, %v3346
    %v4099 = vpack.c.b16 %v3355, %v3351
    %v4100 = vpack.c.b16 %v3356, %v3352
    %v4101 = vpack.c.b16 %v3357, %v3353
    %v4102 = vpack.c.b16 %v3358, %v3354
    %v4103 = vpack.c.b16 %v3363, %v3359
    %v4104 = vpack.c.b16 %v3364, %v3360
    %v4105 = vpack.c.b16 %v3365, %v3361
    %v4106 = vpack.c.b16 %v3366, %v3362
    %v4107 = vpack.c.b16 %v3371, %v3367
    %v4108 = vpack.c.b16 %v3372, %v3368
    %v4109 = vpack.c.b16 %v3373, %v3369
    %v4110 = vpack.c.b16 %v3374, %v3370
    %v4111 = vpack.c.b16 %v3379, %v3375
    %v4112 = vpack.c.b16 %v3380, %v3376
    %v4113 = vpack.c.b16 %v3381, %v3377
    %v4114 = vpack.c.b16 %v3382, %v3378
    %v4115 = vpack.c.b16 %v3387, %v3383
    %v4116 = vpack.c.b16 %v3388, %v3384
    %v4117 = vpack.c.b16 %v3389, %v3385
    %v4118 = vpack.c.b16 %v3390, %v3386
    %v4119 = vpack.c.b16 %v3395, %v3391
    %v4120 = vpack.c.b16 %v3396, %v3392
    %v4121 = vpack.c.b16 %v3397, %v3393
    %v4122 = vpack.c.b16 %v3398, %v3394
    %v4123 = vpack.c.b16 %v3403, %v3399
    %v4124 = vpack.c.b16 %v3404, %v3400
    %v4125 = vpack.c.b16 %v3405, %v3401
    %v4126 = vpack.c.b16 %v3406, %v3402
    %v4127 = vpack.c.b16 %v3411, %v3407
    %v4128 = vpack.c.b16 %v3412, %v3408
    %v4129 = vpack.c.b16 %v3413, %v3409
    %v4130 = vpack.c.b16 %v3414, %v3410
    %v4131 = vpack.c.b16 %v3419, %v3415
    %v4132 = vpack.c.b16 %v3420, %v3416
    %v4133 = vpack.c.b16 %v3421, %v3417
    %v4134 = vpack.c.b16 %v3422, %v3418
    %v4135 = vpack.c.b16 %v3427, %v3423
    %v4136 = vpack.c.b16 %v3428, %v3424
    %v4137 = vpack.c.b16 %v3429, %v3425
    %v4138 = vpack.c.b16 %v3430, %v3426
    %v4139 = vpack.c.b16 %v3435, %v3431
    %v4140 = vpack.c.b16 %v3436, %v3432
    %v4141 = vpack.c.b16 %v3437, %v3433
    %v4142 = vpack.c.b16 %v3438, %v3434
    %v4143 = vpack.c.b16 %v3443, %v3439
    %v4144 = vpack.c.b16 %v3444, %v3440
    %v4145 = vpack.c.b16 %v3445, %v3441
    %v4146 = vpack.c.b16 %v3446, %v3442
    %v4147 = vpack.c.b16 %v3451, %v3447
    %v4148 = vpack.c.b16 %v3452, %v3448
    %v4149 = vpack.c.b16 %v3453, %v3449
    %v4150 = vpack.c.b16 %v3454, %v3450
    %v4151 = vpack.c.b16 %v3459, %v3455
    %v4152 = vpack.c.b16 %v3460, %v3456
    %v4153 = vpack.c.b16 %v3461, %v3457
    %v4154 = vpack.c.b16 %v3462, %v3458
    %v4155 = vpack.c.b16 %v3467, %v3463
    %v4156 = vpack.c.b16 %v3468, %v3464
    %v4157 = vpack.c.b16 %v3469, %v3465
    %v4158 = vpack.c.b16 %v3470, %v3466
    %v4159 = vpack.c.b16 %v3475, %v3471
    %v4160 = vpack.c.b16 %v3476, %v3472
    %v4161 = vpack.c.b16 %v3477, %v3473
    %v4162 = vpack.c.b16 %v3478, %v3474
    %v4163 = vpack.c.b16 %v3483, %v3479
    %v4164 = vpack.c.b16 %v3484, %v3480
    %v4165 = vpack.c.b16 %v3485, %v3481
    %v4166 = vpack.c.b16 %v3486, %v3482
    %v4167 = vpack.c.b16 %v3491, %v3487
    %v4168 = vpack.c.b16 %v3492, %v3488
    %v4169 = vpack.c.b16 %v3493, %v3489
    %v4170 = vpack.c.b16 %v3494, %v3490
    %v4171 = vpack.c.b16 %v3499, %v3495
    %v4172 = vpack.c.b16 %v3500, %v3496
    %v4173 = vpack.c.b16 %v3501, %v3497
    %v4174 = vpack.c.b16 %v3502, %v3498
    %v4175 = vpack.c.b16 %v3507, %v3503
    %v4176 = vpack.c.b16 %v3508, %v3504
    %v4177 = vpack.c.b16 %v3509, %v3505
    %v4178 = vpack.c.b16 %v3510, %v3506
    %v4179 = vpack.c.b16 %v3515, %v3511
    %v4180 = vpack.c.b16 %v3516, %v3512
    %v4181 = vpack.c.b16 %v3517, %v3513
    %v4182 = vpack.c.b16 %v3518, %v3514
    %v4183 = vpack.c.b16 %v3523, %v3519
    %v4184 = vpack.c.b16 %v3524, %v3520
    %v4185 = vpack.c.b16 %v3525, %v3521
    %v4186 = vpack.c.b16 %v3526, %v3522
    %v4187 = vpack.c.b16 %v3531, %v3527
    %v4188 = vpack.c.b16 %v3532, %v3528
    %v4189 = vpack.c.b16 %v3533, %v3529
    %v4190 = vpack.c.b16 %v3534, %v3530
    %v4191 = vpack.c.b16 %v3539, %v3535
    %v4192 = vpack.c.b16 %v3540, %v3536
    %v4193 = vpack.c.b16 %v3541, %v3537
    %v4194 = vpack.c.b16 %v3542, %v3538
    %v4195 = vpack.c.b16 %v3547, %v3543
    %v4196 = vpack.c.b16 %v3548, %v3544
    %v4197 = vpack.c.b16 %v3549, %v3545
    %v4198 = vpack.c.b16 %v3550, %v3546
    %v4199 = vpack.c.b16 %v3555, %v3551
    %v4200 = vpack.c.b16 %v3556, %v3552
    %v4201 = vpack.c.b16 %v3557, %v3553
    %v4202 = vpack.c.b16 %v3558, %v3554
    %v4203 = vpack.c.b16 %v3563, %v3559
    %v4204 = vpack.c.b16 %v3564, %v3560
    %v4205 = vpack.c.b16 %v3565, %v3561
    %v4206 = vpack.c.b16 %v3566, %v3562
    %v4207 = vpack.c.b16 %v3571, %v3567
    %v4208 = vpack.c.b16 %v3572, %v3568
    %v4209 = vpack.c.b16 %v3573, %v3569
    %v4210 = vpack.c.b16 %v3574, %v3570
    %v4211 = vpack.c.b16 %v3579, %v3575
    %v4212 = vpack.c.b16 %v3580, %v3576
    %v4213 = vpack.c.b16 %v3581, %v3577
    %v4214 = vpack.c.b16 %v3582, %v3578
    %v4215 = vpack.c.b16 %v3587, %v3583
    %v4216 = vpack.c.b16 %v3588, %v3584
    %v4217 = vpack.c.b16 %v3589, %v3585
    %v4218 = vpack.c.b16 %v3590, %v3586
    %v4219 = vpack.c.b16 %v3595, %v3591
    %v4220 = vpack.c.b16 %v3596, %v3592
    %v4221 = vpack.c.b16 %v3597, %v3593
    %v4222 = vpack.c.b16 %v3598, %v3594
    %v4223 = vpack.c.b16 %v3603, %v3599
    %v4224 = vpack.c.b16 %v3604, %v3600
    %v4225 = vpack.c.b16 %v3605, %v3601
    %v4226 = vpack.c.b16 %v3606, %v3602
    %v4227 = vpack.c.b16 %v3611, %v3607
    %v4228 = vpack.c.b16 %v3612, %v3608
    %v4229 = vpack.c.b16 %v3613, %v3609
    %v4230 = vpack.c.b16 %v3614, %v3610
    %v4231 = vpack.c.b16 %v3619, %v3615
    %v4232 = vpack.c.b16 %v3620, %v3616
    %v4233 = vpack.c.b16 %v3621, %v3617
    %v4234 = vpack.c.b16 %v3622, %v3618
    %v4235 = vpack.c.b16 %v3627, %v3623
    %v4236 = vpack.c.b16 %v3628, %v3624
    %v4237 = vpack.c.b16 %v3629, %v3625
    %v4238 = vpack.c.b16 %v3630, %v3626
    %v4239 = vpack.c.b16 %v3635, %v3631
    %v4240 = vpack.c.b16 %v3636, %v3632
    %v4241 = vpack.c.b16 %v3637, %v3633
    %v4242 = vpack.c.b16 %v3638, %v3634
    %v4243 = vpack.c.b16 %v3643, %v3639
    %v4244 = vpack.c.b16 %v3644, %v3640
    %v4245 = vpack.c.b16 %v3645, %v3641
    %v4246 = vpack.c.b16 %v3646, %v3642
    %v4247 = vpack.c.b16 %v3651, %v3647
    %v4248 = vpack.c.b16 %v3652, %v3648
    %v4249 = vpack.c.b16 %v3653, %v3649
    %v4250 = vpack.c.b16 %v3654, %v3650
    %v4251 = vpack.c.b16 %v3659, %v3655
    %v4252 = vpack.c.b16 %v3660, %v3656
    %v4253 = vpack.c.b16 %v3661, %v3657
    %v4254 = vpack.c.b16 %v3662, %v3658
    %v4255 = vpack.c.b16 %v3667, %v3663
    %v4256 = vpack.c.b16 %v3668, %v3664
    %v4257 = vpack.c.b16 %v3669, %v3665
    %v4258 = vpack.c.b16 %v3670, %v3666
    %v4259 = vpack.c.b16 %v3675, %v3671
    %v4260 = vpack.c.b16 %v3676, %v3672
    %v4261 = vpack.c.b16 %v3677, %v3673
    %v4262 = vpack.c.b16 %v3678, %v3674
    %v4263 = vpack.c.b16 %v3683, %v3679
    %v4264 = vpack.c.b16 %v3684, %v3680
    %v4265 = vpack.c.b16 %v3685, %v3681
    %v4266 = vpack.c.b16 %v3686, %v3682
    %v4267 = vpack.c.b16 %v3691, %v3687
    %v4268 = vpack.c.b16 %v3692, %v3688
    %v4269 = vpack.c.b16 %v3693, %v3689
    %v4270 = vpack.c.b16 %v3694, %v3690
    %v4271 = vpack.c.b16 %v3699, %v3695
    %v4272 = vpack.c.b16 %v3700, %v3696
    %v4273 = vpack.c.b16 %v3701, %v3697
    %v4274 = vpack.c.b16 %v3702, %v3698
    %v4275 = vpack.c.b16 %v3707, %v3703
    %v4276 = vpack.c.b16 %v3708, %v3704
    %v4277 = vpack.c.b16 %v3709, %v3705
    %v4278 = vpack.c.b16 %v3710, %v3706
    %v4279 = vpack.c.b16 %v3715, %v3711
    %v4280 = vpack.c.b16 %v3716, %v3712
    %v4281 = vpack.c.b16 %v3717, %v3713
    %v4282 = vpack.c.b16 %v3718, %v3714
    %v4283 = vpack.c.b16 %v3723, %v3719
    %v4284 = vpack.c.b16 %v3724, %v3720
    %v4285 = vpack.c.b16 %v3725, %v3721
    %v4286 = vpack.c.b16 %v3726, %v3722
    %v4287 = vpack.c.b16 %v3731, %v3727
    %v4288 = vpack.c.b16 %v3732, %v3728
    %v4289 = vpack.c.b16 %v3733, %v3729
    %v4290 = vpack.c.b16 %v3734, %v3730
    %v4291 = vpack.c.b16 %v3739, %v3735
    %v4292 = vpack.c.b16 %v3740, %v3736
    %v4293 = vpack.c.b16 %v3741, %v3737
    %v4294 = vpack.c.b16 %v3742, %v3738
    %v4295 = vpack.c.b16 %v3747, %v3743
    %v4296 = vpack.c.b16 %v3748, %v3744
    %v4297 = vpack.c.b16 %v3749, %v3745
    %v4298 = vpack.c.b16 %v3750, %v3746
    %v4299 = vpack.c.b16 %v3755, %v3751
    %v4300 = vpack.c.b16 %v3756, %v3752
    %v4301 = vpack.c.b16 %v3757, %v3753
    %v4302 = vpack.c.b16 %v3758, %v3754
    %v4303 = vpack.c.b16 %v3763, %v3759
    %v4304 = vpack.c.b16 %v3764, %v3760
    %v4305 = vpack.c.b16 %v3765, %v3761
    %v4306 = vpack.c.b16 %v3766, %v3762
    %v4307 = vpack.c.b16 %v3771, %v3767
    %v4308 = vpack.c.b16 %v3772, %v3768
    %v4309 = vpack.c.b16 %v3773, %v3769
    %v4310 = vpack.c.b16 %v3774, %v3770
    %v4311 = vpack.c.b16 %v3779, %v3775
    %v4312 = vpack.c.b16 %v3780, %v3776
    %v4313 = vpack.c.b16 %v3781, %v3777
    %v4314 = vpack.c.b16 %v3782, %v3778
    %v4315 = vpack.c.b16 %v3787, %v3783
    %v4316 = vpack.c.b16 %v3788, %v3784
    %v4317 = vpack.c.b16 %v3789, %v3785
    %v4318 = vpack.c.b16 %v3790, %v3786
    %v4319 = vpack.c.b16 %v3795, %v3791
    %v4320 = vpack.c.b16 %v3796, %v3792
    %v4321 = vpack.c.b16 %v3797, %v3793
    %v4322 = vpack.c.b16 %v3798, %v3794
    %v4323 = vpack.c.b16 %v3803, %v3799
    %v4324 = vpack.c.b16 %v3804, %v3800
    %v4325 = vpack.c.b16 %v3805, %v3801
    %v4326 = vpack.c.b16 %v3806, %v3802
    %v4327 = vpack.c.b16 %v3811, %v3807
    %v4328 = vpack.c.b16 %v3812, %v3808
    %v4329 = vpack.c.b16 %v3813, %v3809
    %v4330 = vpack.c.b16 %v3814, %v3810
    %v4331 = vpack.c.b16 %v3819, %v3815
    %v4332 = vpack.c.b16 %v3820, %v3816
    %v4333 = vpack.c.b16 %v3821, %v3817
    %v4334 = vpack.c.b16 %v3822, %v3818
    %4847 = vmatprep.subr.bf16.mxu0 %v3824
    %4848 = vmatpush1.bf16.msra.mxu0 %v3823
    %4849 = vmatprep.subr.bf16.mxu0 %v3828
    %4850 = vmatpush1.bf16.msra.mxu0 %v3827
    %4851 = vmatprep.subr.bf16.mxu0 %v3832
    %4852 = vmatpush1.bf16.msra.mxu0 %v3831
    %4853 = vmatprep.subr.bf16.mxu0 %v3836
    %4854 = vmatpush1.bf16.msra.mxu0 %v3835
    %4855 = vmatprep.subr.bf16.mxu0 %v3840
    %4856 = vmatpush1.bf16.msra.mxu0 %v3839
    %4857 = vmatprep.subr.bf16.mxu0 %v3844
    %4858 = vmatpush1.bf16.msra.mxu0 %v3843
    %4859 = vmatprep.subr.bf16.mxu0 %v3848
    %4860 = vmatpush1.bf16.msra.mxu0 %v3847
    %4861 = vmatprep.subr.bf16.mxu0 %v3852
    %4862 = vmatpush1.bf16.msra.mxu0 %v3851
    %4863 = vmatprep.subr.bf16.mxu0 %v3856
    %4864 = vmatpush1.bf16.msra.mxu0 %v3855
    %4865 = vmatprep.subr.bf16.mxu0 %v3860
    %4866 = vmatpush1.bf16.msra.mxu0 %v3859
    %4867 = vmatprep.subr.bf16.mxu0 %v3864
    %4868 = vmatpush1.bf16.msra.mxu0 %v3863
    %4869 = vmatprep.subr.bf16.mxu0 %v3868
    %4870 = vmatpush1.bf16.msra.mxu0 %v3867
    %4871 = vmatprep.subr.bf16.mxu0 %v3872
    %4872 = vmatpush1.bf16.msra.mxu0 %v3871
    %4873 = vmatprep.subr.bf16.mxu0 %v3876
    %4874 = vmatpush1.bf16.msra.mxu0 %v3875
    %4875 = vmatprep.subr.bf16.mxu0 %v3880
    %4876 = vmatpush1.bf16.msra.mxu0 %v3879
    %4877 = vmatprep.subr.bf16.mxu0 %v3884
    %4878 = vmatpush1.bf16.msra.mxu0 %v3883
    %4879 = vmatprep.mubr.bf16.mxu0 %v1690
    %4880 = vmatmul.mubr.bf16.gmra.mrb[0].mxu0 %v1689
    %v4881 = vpop.f32.mrb[0].mxu0
    %v4882 = vadd.f32 %v2270, %v4881
    %v4883 = vpop.f32.mrb[0].mxu0
    %v4884 = vadd.f32 %v2274, %v4883
    %v4885 = vpop.f32.mrb[0].mxu0
    %v4886 = vadd.f32 %v2270, %v4885
    %v4887 = vpop.f32.mrb[0].mxu0
    %v4888 = vadd.f32 %v2274, %v4887
    %4889 = vmatprep.mubr.bf16.mxu0 %v1706
    %4890 = vmatmul.mubr.bf16.gmra.mrb[0].mxu0 %v1705
    %v4891 = vpop.f32.mrb[0].mxu0
    %v4892 = vadd.f32 %v2270, %v4891
    %v4893 = vpop.f32.mrb[0].mxu0
    %v4894 = vadd.f32 %v2274, %v4893
    %v4895 = vpop.f32.mrb[0].mxu0
    %v4896 = vadd.f32 %v2270, %v4895
    %v4897 = vpop.f32.mrb[0].mxu0
    %v4898 = vadd.f32 %v2274, %v4897
    %4899 = vmatprep.mubr.bf16.mxu0 %v1722
    %4900 = vmatmul.mubr.bf16.gmra.mrb[0].mxu0 %v1721
    %v4901 = vpop.f32.mrb[0].mxu0
    %v4902 = vadd.f32 %v2270, %v4901
    %v4903 = vpop.f32.mrb[0].mxu0
    %v4904 = vadd.f32 %v2274, %v4903
    %v4905 = vpop.f32.mrb[0].mxu0
    %v4906 = vadd.f32 %v2270, %v4905
    %v4907 = vpop.f32.mrb[0].mxu0
    %v4908 = vadd.f32 %v2274, %v4907
    %4909 = vmatprep.mubr.bf16.mxu0 %v1738
    %4910 = vmatmul.mubr.bf16.gmra.mrb[0].mxu0 %v1737
    %v4911 = vpop.f32.mrb[0].mxu0
    %v4912 = vadd.f32 %v2270, %v4911
    %v4913 = vpop.f32.mrb[0].mxu0
    %v4914 = vadd.f32 %v2274, %v4913
    %v4915 = vpop.f32.mrb[0].mxu0
    %v4916 = vadd.f32 %v2270, %v4915
    %v4917 = vpop.f32.mrb[0].mxu0
    %v4918 = vadd.f32 %v2274, %v4917
    %4919 = vdwg.mxu0
    %4920 = vmatprep.subr.bf16.mxu0 %v3888
    %4921 = vmatpush1.bf16.msra.mxu0 %v3887
    %4922 = vmatprep.subr.bf16.mxu0 %v3892
    %4923 = vmatpush1.bf16.msra.mxu0 %v3891
    %4924 = vmatprep.subr.bf16.mxu0 %v3896
    %4925 = vmatpush1.bf16.msra.mxu0 %v3895
    %4926 = vmatprep.subr.bf16.mxu0 %v3900
    %4927 = vmatpush1.bf16.msra.mxu0 %v3899
    %4928 = vmatprep.subr.bf16.mxu0 %v3904
    %4929 = vmatpush1.bf16.msra.mxu0 %v3903
    %4930 = vmatprep.subr.bf16.mxu0 %v3908
    %4931 = vmatpush1.bf16.msra.mxu0 %v3907
    %4932 = vmatprep.subr.bf16.mxu0 %v3912
    %4933 = vmatpush1.bf16.msra.mxu0 %v3911
    %4934 = vmatprep.subr.bf16.mxu0 %v3916
    %4935 = vmatpush1.bf16.msra.mxu0 %v3915
    %4936 = vmatprep.subr.bf16.mxu0 %v3920
    %4937 = vmatpush1.bf16.msra.mxu0 %v3919
    %4938 = vmatprep.subr.bf16.mxu0 %v3924
    %4939 = vmatpush1.bf16.msra.mxu0 %v3923
    %4940 = vmatprep.subr.bf16.mxu0 %v3928
    %4941 = vmatpush1.bf16.msra.mxu0 %v3927
    %4942 = vmatprep.subr.bf16.mxu0 %v3932
    %4943 = vmatpush1.bf16.msra.mxu0 %v3931
    %4944 = vmatprep.subr.bf16.mxu0 %v3936
    %4945 = vmatpush1.bf16.msra.mxu0 %v3935
    %4946 = vmatprep.subr.bf16.mxu0 %v3940
    %4947 = vmatpush1.bf16.msra.mxu0 %v3939
    %4948 = vmatprep.subr.bf16.mxu0 %v3944
    %4949 = vmatpush1.bf16.msra.mxu0 %v3943
    %4950 = vmatprep.subr.bf16.mxu0 %v3948
    %4951 = vmatpush1.bf16.msra.mxu0 %v3947
    %4952 = vmatprep.mubr.bf16.mxu0 %v1692
    %4953 = vmatmul.mubr.bf16.gmra.mrb[0].mxu0 %v1691
    %v4954 = vpop.f32.mrb[0].mxu0
    %v4955 = vadd.f32 %v4882, %v4954
    %v4956 = vpop.f32.mrb[0].mxu0
    %v4957 = vadd.f32 %v4884, %v4956
    %v4958 = vpop.f32.mrb[0].mxu0
    %v4959 = vadd.f32 %v4886, %v4958
    %v4960 = vpop.f32.mrb[0].mxu0
    %v4961 = vadd.f32 %v4888, %v4960
    %4962 = vmatprep.mubr.bf16.mxu0 %v1708
    %4963 = vmatmul.mubr.bf16.gmra.mrb[0].mxu0 %v1707
    %v4964 = vpop.f32.mrb[0].mxu0
    %v4965 = vadd.f32 %v4892, %v4964
    %v4966 = vpop.f32.mrb[0].mxu0
    %v4967 = vadd.f32 %v4894, %v4966
    %v4968 = vpop.f32.mrb[0].mxu0
    %v4969 = vadd.f32 %v4896, %v4968
    %v4970 = vpop.f32.mrb[0].mxu0
    %v4971 = vadd.f32 %v4898, %v4970
    %4972 = vmatprep.mubr.bf16.mxu0 %v1724
    %4973 = vmatmul.mubr.bf16.gmra.mrb[0].mxu0 %v1723
    %v4974 = vpop.f32.mrb[0].mxu0
    %v4975 = vadd.f32 %v4902, %v4974
    %v4976 = vpop.f32.mrb[0].mxu0
    %v4977 = vadd.f32 %v4904, %v4976
    %v4978 = vpop.f32.mrb[0].mxu0
    %v4979 = vadd.f32 %v4906, %v4978
    %v4980 = vpop.f32.mrb[0].mxu0
    %v4981 = vadd.f32 %v4908, %v4980
    %4982 = vmatprep.mubr.bf16.mxu0 %v1740
    %4983 = vmatmul.mubr.bf16.gmra.mrb[0].mxu0 %v1739
    %v4984 = vpop.f32.mrb[0].mxu0
    %v4985 = vadd.f32 %v4912, %v4984
    %v4986 = vpop.f32.mrb[0].mxu0
    %v4987 = vadd.f32 %v4914, %v4986
    %v4988 = vpop.f32.mrb[0].mxu0
    %v4989 = vadd.f32 %v4916, %v4988
    %v4990 = vpop.f32.mrb[0].mxu0
    %v4991 = vadd.f32 %v4918, %v4990
    %4992 = vdwg.mxu0
    %4993 = vmatprep.subr.bf16.mxu0 %v3952
    %4994 = vmatpush1.bf16.msra.mxu0 %v3951
    %4995 = vmatprep.subr.bf16.mxu0 %v3956
    %4996 = vmatpush1.bf16.msra.mxu0 %v3955
    %4997 = vmatprep.subr.bf16.mxu0 %v3960
    %4998 = vmatpush1.bf16.msra.mxu0 %v3959
    %4999 = vmatprep.subr.bf16.mxu0 %v3964
    %5000 = vmatpush1.bf16.msra.mxu0 %v3963
    %5001 = vmatprep.subr.bf16.mxu0 %v3968
    %5002 = vmatpush1.bf16.msra.mxu0 %v3967
    %5003 = vmatprep.subr.bf16.mxu0 %v3972
    %5004 = vmatpush1.bf16.msra.mxu0 %v3971
    %5005 = vmatprep.subr.bf16.mxu0 %v3976
    %5006 = vmatpush1.bf16.msra.mxu0 %v3975
    %5007 = vmatprep.subr.bf16.mxu0 %v3980
    %5008 = vmatpush1.bf16.msra.mxu0 %v3979
    %5009 = vmatprep.subr.bf16.mxu0 %v3984
    %5010 = vmatpush1.bf16.msra.mxu0 %v3983
    %5011 = vmatprep.subr.bf16.mxu0 %v3988
    %5012 = vmatpush1.bf16.msra.mxu0 %v3987
    %5013 = vmatprep.subr.bf16.mxu0 %v3992
    %5014 = vmatpush1.bf16.msra.mxu0 %v3991
    %5015 = vmatprep.subr.bf16.mxu0 %v3996
    %5016 = vmatpush1.bf16.msra.mxu0 %v3995
    %5017 = vmatprep.subr.bf16.mxu0 %v4000
    %5018 = vmatpush1.bf16.msra.mxu0 %v3999
    %5019 = vmatprep.subr.bf16.mxu0 %v4004
    %5020 = vmatpush1.bf16.msra.mxu0 %v4003
    %5021 = vmatprep.subr.bf16.mxu0 %v4008
    %5022 = vmatpush1.bf16.msra.mxu0 %v4007
    %5023 = vmatprep.subr.bf16.mxu0 %v4012
    %5024 = vmatpush1.bf16.msra.mxu0 %v4011
    %5025 = vmatprep.mubr.bf16.mxu0 %v1694
    %5026 = vmatmul.mubr.bf16.gmra.mrb[0].mxu0 %v1693
    %v5027 = vpop.f32.mrb[0].mxu0
    %v5028 = vadd.f32 %v4955, %v5027
    %v5029 = vpop.f32.mrb[0].mxu0
    %v5030 = vadd.f32 %v4957, %v5029
    %v5031 = vpop.f32.mrb[0].mxu0
    %v5032 = vadd.f32 %v4959, %v5031
    %v5033 = vpop.f32.mrb[0].mxu0
    %v5034 = vadd.f32 %v4961, %v5033
    %5035 = vmatprep.mubr.bf16.mxu0 %v1710
    %5036 = vmatmul.mubr.bf16.gmra.mrb[0].mxu0 %v1709
    %v5037 = vpop.f32.mrb[0].mxu0
    %v5038 = vadd.f32 %v4965, %v5037
    %v5039 = vpop.f32.mrb[0].mxu0
    %v5040 = vadd.f32 %v4967, %v5039
    %v5041 = vpop.f32.mrb[0].mxu0
    %v5042 = vadd.f32 %v4969, %v5041
    %v5043 = vpop.f32.mrb[0].mxu0
    %v5044 = vadd.f32 %v4971, %v5043
    %5045 = vmatprep.mubr.bf16.mxu0 %v1726
    %5046 = vmatmul.mubr.bf16.gmra.mrb[0].mxu0 %v1725
    %v5047 = vpop.f32.mrb[0].mxu0
    %v5048 = vadd.f32 %v4975, %v5047
    %v5049 = vpop.f32.mrb[0].mxu0
    %v5050 = vadd.f32 %v4977, %v5049
    %v5051 = vpop.f32.mrb[0].mxu0
    %v5052 = vadd.f32 %v4979, %v5051
    %v5053 = vpop.f32.mrb[0].mxu0
    %v5054 = vadd.f32 %v4981, %v5053
    %5055 = vmatprep.mubr.bf16.mxu0 %v1742
    %5056 = vmatmul.mubr.bf16.gmra.mrb[0].mxu0 %v1741
    %v5057 = vpop.f32.mrb[0].mxu0
    %v5058 = vadd.f32 %v4985, %v5057
    %v5059 = vpop.f32.mrb[0].mxu0
    %v5060 = vadd.f32 %v4987, %v5059
    %v5061 = vpop.f32.mrb[0].mxu0
    %v5062 = vadd.f32 %v4989, %v5061
    %v5063 = vpop.f32.mrb[0].mxu0
    %v5064 = vadd.f32 %v4991, %v5063
    %5065 = vdwg.mxu0
    %5066 = vmatprep.subr.bf16.mxu0 %v4016
    %5067 = vmatpush1.bf16.msra.mxu0 %v4015
    %5068 = vmatprep.subr.bf16.mxu0 %v4020
    %5069 = vmatpush1.bf16.msra.mxu0 %v4019
    %5070 = vmatprep.subr.bf16.mxu0 %v4024
    %5071 = vmatpush1.bf16.msra.mxu0 %v4023
    %5072 = vmatprep.subr.bf16.mxu0 %v4028
    %5073 = vmatpush1.bf16.msra.mxu0 %v4027
    %5074 = vmatprep.subr.bf16.mxu0 %v4032
    %5075 = vmatpush1.bf16.msra.mxu0 %v4031
    %5076 = vmatprep.subr.bf16.mxu0 %v4036
    %5077 = vmatpush1.bf16.msra.mxu0 %v4035
    %5078 = vmatprep.subr.bf16.mxu0 %v4040
    %5079 = vmatpush1.bf16.msra.mxu0 %v4039
    %5080 = vmatprep.subr.bf16.mxu0 %v4044
    %5081 = vmatpush1.bf16.msra.mxu0 %v4043
    %5082 = vmatprep.subr.bf16.mxu0 %v4048
    %5083 = vmatpush1.bf16.msra.mxu0 %v4047
    %5084 = vmatprep.subr.bf16.mxu0 %v4052
    %5085 = vmatpush1.bf16.msra.mxu0 %v4051
    %5086 = vmatprep.subr.bf16.mxu0 %v4056
    %5087 = vmatpush1.bf16.msra.mxu0 %v4055
    %5088 = vmatprep.subr.bf16.mxu0 %v4060
    %5089 = vmatpush1.bf16.msra.mxu0 %v4059
    %5090 = vmatprep.subr.bf16.mxu0 %v4064
    %5091 = vmatpush1.bf16.msra.mxu0 %v4063
    %5092 = vmatprep.subr.bf16.mxu0 %v4068
    %5093 = vmatpush1.bf16.msra.mxu0 %v4067
    %5094 = vmatprep.subr.bf16.mxu0 %v4072
    %5095 = vmatpush1.bf16.msra.mxu0 %v4071
    %5096 = vmatprep.subr.bf16.mxu0 %v4076
    %5097 = vmatpush1.bf16.msra.mxu0 %v4075
    %5098 = vmatprep.mubr.bf16.mxu0 %v1696
    %5099 = vmatmul.mubr.bf16.gmra.mrb[0].mxu0 %v1695
    %v5100 = vpop.f32.mrb[0].mxu0
    %v5101 = vadd.f32 %v5028, %v5100
    %v5102 = vpop.f32.mrb[0].mxu0
    %v5103 = vadd.f32 %v5030, %v5102
    %v5104 = vpop.f32.mrb[0].mxu0
    %v5105 = vadd.f32 %v5032, %v5104
    %v5106 = vpop.f32.mrb[0].mxu0
    %v5107 = vadd.f32 %v5034, %v5106
    %5108 = vmatprep.mubr.bf16.mxu0 %v1712
    %5109 = vmatmul.mubr.bf16.gmra.mrb[0].mxu0 %v1711
    %v5110 = vpop.f32.mrb[0].mxu0
    %v5111 = vadd.f32 %v5038, %v5110
    %v5112 = vpop.f32.mrb[0].mxu0
    %v5113 = vadd.f32 %v5040, %v5112
    %v5114 = vpop.f32.mrb[0].mxu0
    %v5115 = vadd.f32 %v5042, %v5114
    %v5116 = vpop.f32.mrb[0].mxu0
    %v5117 = vadd.f32 %v5044, %v5116
    %5118 = vmatprep.mubr.bf16.mxu0 %v1728
    %5119 = vmatmul.mubr.bf16.gmra.mrb[0].mxu0 %v1727
    %v5120 = vpop.f32.mrb[0].mxu0
    %v5121 = vadd.f32 %v5048, %v5120
    %v5122 = vpop.f32.mrb[0].mxu0
    %v5123 = vadd.f32 %v5050, %v5122
    %v5124 = vpop.f32.mrb[0].mxu0
    %v5125 = vadd.f32 %v5052, %v5124
    %v5126 = vpop.f32.mrb[0].mxu0
    %v5127 = vadd.f32 %v5054, %v5126
    %5128 = vmatprep.mubr.bf16.mxu0 %v1744
    %5129 = vmatmul.mubr.bf16.gmra.mrb[0].mxu0 %v1743
    %v5130 = vpop.f32.mrb[0].mxu0
    %v5131 = vadd.f32 %v5058, %v5130
    %v5132 = vpop.f32.mrb[0].mxu0
    %v5133 = vadd.f32 %v5060, %v5132
    %v5134 = vpop.f32.mrb[0].mxu0
    %v5135 = vadd.f32 %v5062, %v5134
    %v5136 = vpop.f32.mrb[0].mxu0
    %v5137 = vadd.f32 %v5064, %v5136
    %5138 = vdwg.mxu0
    %5139 = vmatprep.subr.bf16.mxu0 %v4080
    %5140 = vmatpush1.bf16.msra.mxu0 %v4079
    %5141 = vmatprep.subr.bf16.mxu0 %v4084
    %5142 = vmatpush1.bf16.msra.mxu0 %v4083
    %5143 = vmatprep.subr.bf16.mxu0 %v4088
    %5144 = vmatpush1.bf16.msra.mxu0 %v4087
    %5145 = vmatprep.subr.bf16.mxu0 %v4092
    %5146 = vmatpush1.bf16.msra.mxu0 %v4091
    %5147 = vmatprep.subr.bf16.mxu0 %v4096
    %5148 = vmatpush1.bf16.msra.mxu0 %v4095
    %5149 = vmatprep.subr.bf16.mxu0 %v4100
    %5150 = vmatpush1.bf16.msra.mxu0 %v4099
    %5151 = vmatprep.subr.bf16.mxu0 %v4104
    %5152 = vmatpush1.bf16.msra.mxu0 %v4103
    %5153 = vmatprep.subr.bf16.mxu0 %v4108
    %5154 = vmatpush1.bf16.msra.mxu0 %v4107
    %5155 = vmatprep.subr.bf16.mxu0 %v4112
    %5156 = vmatpush1.bf16.msra.mxu0 %v4111
    %5157 = vmatprep.subr.bf16.mxu0 %v4116
    %5158 = vmatpush1.bf16.msra.mxu0 %v4115
    %5159 = vmatprep.subr.bf16.mxu0 %v4120
    %5160 = vmatpush1.bf16.msra.mxu0 %v4119
    %5161 = vmatprep.subr.bf16.mxu0 %v4124
    %5162 = vmatpush1.bf16.msra.mxu0 %v4123
    %5163 = vmatprep.subr.bf16.mxu0 %v4128
    %5164 = vmatpush1.bf16.msra.mxu0 %v4127
    %5165 = vmatprep.subr.bf16.mxu0 %v4132
    %5166 = vmatpush1.bf16.msra.mxu0 %v4131
    %5167 = vmatprep.subr.bf16.mxu0 %v4136
    %5168 = vmatpush1.bf16.msra.mxu0 %v4135
    %5169 = vmatprep.subr.bf16.mxu0 %v4140
    %5170 = vmatpush1.bf16.msra.mxu0 %v4139
    %5171 = vmatprep.mubr.bf16.mxu0 %v1698
    %5172 = vmatmul.mubr.bf16.gmra.mrb[0].mxu0 %v1697
    %v5173 = vpop.f32.mrb[0].mxu0
    %v5174 = vadd.f32 %v5101, %v5173
    %v5175 = vpop.f32.mrb[0].mxu0
    %v5176 = vadd.f32 %v5103, %v5175
    %v5177 = vpop.f32.mrb[0].mxu0
    %v5178 = vadd.f32 %v5105, %v5177
    %v5179 = vpop.f32.mrb[0].mxu0
    %v5180 = vadd.f32 %v5107, %v5179
    %5181 = vmatprep.mubr.bf16.mxu0 %v1714
    %5182 = vmatmul.mubr.bf16.gmra.mrb[0].mxu0 %v1713
    %v5183 = vpop.f32.mrb[0].mxu0
    %v5184 = vadd.f32 %v5111, %v5183
    %v5185 = vpop.f32.mrb[0].mxu0
    %v5186 = vadd.f32 %v5113, %v5185
    %v5187 = vpop.f32.mrb[0].mxu0
    %v5188 = vadd.f32 %v5115, %v5187
    %v5189 = vpop.f32.mrb[0].mxu0
    %v5190 = vadd.f32 %v5117, %v5189
    %5191 = vmatprep.mubr.bf16.mxu0 %v1730
    %5192 = vmatmul.mubr.bf16.gmra.mrb[0].mxu0 %v1729
    %v5193 = vpop.f32.mrb[0].mxu0
    %v5194 = vadd.f32 %v5121, %v5193
    %v5195 = vpop.f32.mrb[0].mxu0
    %v5196 = vadd.f32 %v5123, %v5195
    %v5197 = vpop.f32.mrb[0].mxu0
    %v5198 = vadd.f32 %v5125, %v5197
    %v5199 = vpop.f32.mrb[0].mxu0
    %v5200 = vadd.f32 %v5127, %v5199
    %5201 = vmatprep.mubr.bf16.mxu0 %v1746
    %5202 = vmatmul.mubr.bf16.gmra.mrb[0].mxu0 %v1745
    %v5203 = vpop.f32.mrb[0].mxu0
    %v5204 = vadd.f32 %v5131, %v5203
    %v5205 = vpop.f32.mrb[0].mxu0
    %v5206 = vadd.f32 %v5133, %v5205
    %v5207 = vpop.f32.mrb[0].mxu0
    %v5208 = vadd.f32 %v5135, %v5207
    %v5209 = vpop.f32.mrb[0].mxu0
    %v5210 = vadd.f32 %v5137, %v5209
    %5211 = vdwg.mxu0
    %5212 = vmatprep.subr.bf16.mxu0 %v4144
    %5213 = vmatpush1.bf16.msra.mxu0 %v4143
    %5214 = vmatprep.subr.bf16.mxu0 %v4148
    %5215 = vmatpush1.bf16.msra.mxu0 %v4147
    %5216 = vmatprep.subr.bf16.mxu0 %v4152
    %5217 = vmatpush1.bf16.msra.mxu0 %v4151
    %5218 = vmatprep.subr.bf16.mxu0 %v4156
    %5219 = vmatpush1.bf16.msra.mxu0 %v4155
    %5220 = vmatprep.subr.bf16.mxu0 %v4160
    %5221 = vmatpush1.bf16.msra.mxu0 %v4159
    %5222 = vmatprep.subr.bf16.mxu0 %v4164
    %5223 = vmatpush1.bf16.msra.mxu0 %v4163
    %5224 = vmatprep.subr.bf16.mxu0 %v4168
    %5225 = vmatpush1.bf16.msra.mxu0 %v4167
    %5226 = vmatprep.subr.bf16.mxu0 %v4172
    %5227 = vmatpush1.bf16.msra.mxu0 %v4171
    %5228 = vmatprep.subr.bf16.mxu0 %v4176
    %5229 = vmatpush1.bf16.msra.mxu0 %v4175
    %5230 = vmatprep.subr.bf16.mxu0 %v4180
    %5231 = vmatpush1.bf16.msra.mxu0 %v4179
    %5232 = vmatprep.subr.bf16.mxu0 %v4184
    %5233 = vmatpush1.bf16.msra.mxu0 %v4183
    %5234 = vmatprep.subr.bf16.mxu0 %v4188
    %5235 = vmatpush1.bf16.msra.mxu0 %v4187
    %5236 = vmatprep.subr.bf16.mxu0 %v4192
    %5237 = vmatpush1.bf16.msra.mxu0 %v4191
    %5238 = vmatprep.subr.bf16.mxu0 %v4196
    %5239 = vmatpush1.bf16.msra.mxu0 %v4195
    %5240 = vmatprep.subr.bf16.mxu0 %v4200
    %5241 = vmatpush1.bf16.msra.mxu0 %v4199
    %5242 = vmatprep.subr.bf16.mxu0 %v4204
    %5243 = vmatpush1.bf16.msra.mxu0 %v4203
    %5244 = vmatprep.mubr.bf16.mxu0 %v1700
    %5245 = vmatmul.mubr.bf16.gmra.mrb[0].mxu0 %v1699
    %v5246 = vpop.f32.mrb[0].mxu0
    %v5247 = vadd.f32 %v5174, %v5246
    %v5248 = vpop.f32.mrb[0].mxu0
    %v5249 = vadd.f32 %v5176, %v5248
    %v5250 = vpop.f32.mrb[0].mxu0
    %v5251 = vadd.f32 %v5178, %v5250
    %v5252 = vpop.f32.mrb[0].mxu0
    %v5253 = vadd.f32 %v5180, %v5252
    %5254 = vmatprep.mubr.bf16.mxu0 %v1716
    %5255 = vmatmul.mubr.bf16.gmra.mrb[0].mxu0 %v1715
    %v5256 = vpop.f32.mrb[0].mxu0
    %v5257 = vadd.f32 %v5184, %v5256
    %v5258 = vpop.f32.mrb[0].mxu0
    %v5259 = vadd.f32 %v5186, %v5258
    %v5260 = vpop.f32.mrb[0].mxu0
    %v5261 = vadd.f32 %v5188, %v5260
    %v5262 = vpop.f32.mrb[0].mxu0
    %v5263 = vadd.f32 %v5190, %v5262
    %5264 = vmatprep.mubr.bf16.mxu0 %v1732
    %5265 = vmatmul.mubr.bf16.gmra.mrb[0].mxu0 %v1731
    %v5266 = vpop.f32.mrb[0].mxu0
    %v5267 = vadd.f32 %v5194, %v5266
    %v5268 = vpop.f32.mrb[0].mxu0
    %v5269 = vadd.f32 %v5196, %v5268
    %v5270 = vpop.f32.mrb[0].mxu0
    %v5271 = vadd.f32 %v5198, %v5270
    %v5272 = vpop.f32.mrb[0].mxu0
    %v5273 = vadd.f32 %v5200, %v5272
    %5274 = vmatprep.mubr.bf16.mxu0 %v1748
    %5275 = vmatmul.mubr.bf16.gmra.mrb[0].mxu0 %v1747
    %v5276 = vpop.f32.mrb[0].mxu0
    %v5277 = vadd.f32 %v5204, %v5276
    %v5278 = vpop.f32.mrb[0].mxu0
    %v5279 = vadd.f32 %v5206, %v5278
    %v5280 = vpop.f32.mrb[0].mxu0
    %v5281 = vadd.f32 %v5208, %v5280
    %v5282 = vpop.f32.mrb[0].mxu0
    %v5283 = vadd.f32 %v5210, %v5282
    %5284 = vdwg.mxu0
    %5285 = vmatprep.subr.bf16.mxu0 %v4208
    %5286 = vmatpush1.bf16.msra.mxu0 %v4207
    %5287 = vmatprep.subr.bf16.mxu0 %v4212
    %5288 = vmatpush1.bf16.msra.mxu0 %v4211
    %5289 = vmatprep.subr.bf16.mxu0 %v4216
    %5290 = vmatpush1.bf16.msra.mxu0 %v4215
    %5291 = vmatprep.subr.bf16.mxu0 %v4220
    %5292 = vmatpush1.bf16.msra.mxu0 %v4219
    %5293 = vmatprep.subr.bf16.mxu0 %v4224
    %5294 = vmatpush1.bf16.msra.mxu0 %v4223
    %5295 = vmatprep.subr.bf16.mxu0 %v4228
    %5296 = vmatpush1.bf16.msra.mxu0 %v4227
    %5297 = vmatprep.subr.bf16.mxu0 %v4232
    %5298 = vmatpush1.bf16.msra.mxu0 %v4231
    %5299 = vmatprep.subr.bf16.mxu0 %v4236
    %5300 = vmatpush1.bf16.msra.mxu0 %v4235
    %5301 = vmatprep.subr.bf16.mxu0 %v4240
    %5302 = vmatpush1.bf16.msra.mxu0 %v4239
    %5303 = vmatprep.subr.bf16.mxu0 %v4244
    %5304 = vmatpush1.bf16.msra.mxu0 %v4243
    %5305 = vmatprep.subr.bf16.mxu0 %v4248
    %5306 = vmatpush1.bf16.msra.mxu0 %v4247
    %5307 = vmatprep.subr.bf16.mxu0 %v4252
    %5308 = vmatpush1.bf16.msra.mxu0 %v4251
    %5309 = vmatprep.subr.bf16.mxu0 %v4256
    %5310 = vmatpush1.bf16.msra.mxu0 %v4255
    %5311 = vmatprep.subr.bf16.mxu0 %v4260
    %5312 = vmatpush1.bf16.msra.mxu0 %v4259
    %5313 = vmatprep.subr.bf16.mxu0 %v4264
    %5314 = vmatpush1.bf16.msra.mxu0 %v4263
    %5315 = vmatprep.subr.bf16.mxu0 %v4268
    %5316 = vmatpush1.bf16.msra.mxu0 %v4267
    %5317 = vmatprep.mubr.bf16.mxu0 %v1702
    %5318 = vmatmul.mubr.bf16.gmra.mrb[0].mxu0 %v1701
    %v5319 = vpop.f32.mrb[0].mxu0
    %v5320 = vadd.f32 %v5247, %v5319
    %v5321 = vpop.f32.mrb[0].mxu0
    %v5322 = vadd.f32 %v5249, %v5321
    %v5323 = vpop.f32.mrb[0].mxu0
    %v5324 = vadd.f32 %v5251, %v5323
    %v5325 = vpop.f32.mrb[0].mxu0
    %v5326 = vadd.f32 %v5253, %v5325
    %5327 = vmatprep.mubr.bf16.mxu0 %v1718
    %5328 = vmatmul.mubr.bf16.gmra.mrb[0].mxu0 %v1717
    %v5329 = vpop.f32.mrb[0].mxu0
    %v5330 = vadd.f32 %v5257, %v5329
    %v5331 = vpop.f32.mrb[0].mxu0
    %v5332 = vadd.f32 %v5259, %v5331
    %v5333 = vpop.f32.mrb[0].mxu0
    %v5334 = vadd.f32 %v5261, %v5333
    %v5335 = vpop.f32.mrb[0].mxu0
    %v5336 = vadd.f32 %v5263, %v5335
    %5337 = vmatprep.mubr.bf16.mxu0 %v1734
    %5338 = vmatmul.mubr.bf16.gmra.mrb[0].mxu0 %v1733
    %v5339 = vpop.f32.mrb[0].mxu0
    %v5340 = vadd.f32 %v5267, %v5339
    %v5341 = vpop.f32.mrb[0].mxu0
    %v5342 = vadd.f32 %v5269, %v5341
    %v5343 = vpop.f32.mrb[0].mxu0
    %v5344 = vadd.f32 %v5271, %v5343
    %v5345 = vpop.f32.mrb[0].mxu0
    %v5346 = vadd.f32 %v5273, %v5345
    %5347 = vmatprep.mubr.bf16.mxu0 %v1750
    %5348 = vmatmul.mubr.bf16.gmra.mrb[0].mxu0 %v1749
    %v5349 = vpop.f32.mrb[0].mxu0
    %v5350 = vadd.f32 %v5277, %v5349
    %v5351 = vpop.f32.mrb[0].mxu0
    %v5352 = vadd.f32 %v5279, %v5351
    %v5353 = vpop.f32.mrb[0].mxu0
    %v5354 = vadd.f32 %v5281, %v5353
    %v5355 = vpop.f32.mrb[0].mxu0
    %v5356 = vadd.f32 %v5283, %v5355
    %5357 = vdwg.mxu0
    %5358 = vmatprep.subr.bf16.mxu0 %v4272
    %5359 = vmatpush1.bf16.msra.mxu0 %v4271
    %5360 = vmatprep.subr.bf16.mxu0 %v4276
    %5361 = vmatpush1.bf16.msra.mxu0 %v4275
    %5362 = vmatprep.subr.bf16.mxu0 %v4280
    %5363 = vmatpush1.bf16.msra.mxu0 %v4279
    %5364 = vmatprep.subr.bf16.mxu0 %v4284
    %5365 = vmatpush1.bf16.msra.mxu0 %v4283
    %5366 = vmatprep.subr.bf16.mxu0 %v4288
    %5367 = vmatpush1.bf16.msra.mxu0 %v4287
    %5368 = vmatprep.subr.bf16.mxu0 %v4292
    %5369 = vmatpush1.bf16.msra.mxu0 %v4291
    %5370 = vmatprep.subr.bf16.mxu0 %v4296
    %5371 = vmatpush1.bf16.msra.mxu0 %v4295
    %5372 = vmatprep.subr.bf16.mxu0 %v4300
    %5373 = vmatpush1.bf16.msra.mxu0 %v4299
    %5374 = vmatprep.subr.bf16.mxu0 %v4304
    %5375 = vmatpush1.bf16.msra.mxu0 %v4303
    %5376 = vmatprep.subr.bf16.mxu0 %v4308
    %5377 = vmatpush1.bf16.msra.mxu0 %v4307
    %5378 = vmatprep.subr.bf16.mxu0 %v4312
    %5379 = vmatpush1.bf16.msra.mxu0 %v4311
    %5380 = vmatprep.subr.bf16.mxu0 %v4316
    %5381 = vmatpush1.bf16.msra.mxu0 %v4315
    %5382 = vmatprep.subr.bf16.mxu0 %v4320
    %5383 = vmatpush1.bf16.msra.mxu0 %v4319
    %5384 = vmatprep.subr.bf16.mxu0 %v4324
    %5385 = vmatpush1.bf16.msra.mxu0 %v4323
    %5386 = vmatprep.subr.bf16.mxu0 %v4328
    %5387 = vmatpush1.bf16.msra.mxu0 %v4327
    %5388 = vmatprep.subr.bf16.mxu0 %v4332
    %5389 = vmatpush1.bf16.msra.mxu0 %v4331
    %5390 = vmatprep.mubr.bf16.mxu0 %v1704
    %5391 = vmatmul.mubr.bf16.gmra.mrb[0].mxu0 %v1703
    %v5392 = vpop.f32.mrb[0].mxu0
    %v5393 = vadd.f32 %v5320, %v5392
    %v5394 = vpop.f32.mrb[0].mxu0
    %v5395 = vadd.f32 %v5322, %v5394
    %v5396 = vpop.f32.mrb[0].mxu0
    %v5397 = vadd.f32 %v5324, %v5396
    %v5398 = vpop.f32.mrb[0].mxu0
    %v5399 = vadd.f32 %v5326, %v5398
    %5400 = vmatprep.mubr.bf16.mxu0 %v1720
    %5401 = vmatmul.mubr.bf16.gmra.mrb[0].mxu0 %v1719
    %v5402 = vpop.f32.mrb[0].mxu0
    %v5403 = vadd.f32 %v5330, %v5402
    %v5404 = vpop.f32.mrb[0].mxu0
    %v5405 = vadd.f32 %v5332, %v5404
    %v5406 = vpop.f32.mrb[0].mxu0
    %v5407 = vadd.f32 %v5334, %v5406
    %v5408 = vpop.f32.mrb[0].mxu0
    %v5409 = vadd.f32 %v5336, %v5408
    %5410 = vmatprep.mubr.bf16.mxu0 %v1736
    %5411 = vmatmul.mubr.bf16.gmra.mrb[0].mxu0 %v1735
    %v5412 = vpop.f32.mrb[0].mxu0
    %v5413 = vadd.f32 %v5340, %v5412
    %v5414 = vpop.f32.mrb[0].mxu0
    %v5415 = vadd.f32 %v5342, %v5414
    %v5416 = vpop.f32.mrb[0].mxu0
    %v5417 = vadd.f32 %v5344, %v5416
    %v5418 = vpop.f32.mrb[0].mxu0
    %v5419 = vadd.f32 %v5346, %v5418
    %5420 = vmatprep.mubr.bf16.mxu0 %v1752
    %5421 = vmatmul.mubr.bf16.gmra.mrb[0].mxu0 %v1751
    %v5422 = vpop.f32.mrb[0].mxu0
    %v5423 = vadd.f32 %v5350, %v5422
    %v5424 = vpop.f32.mrb[0].mxu0
    %v5425 = vadd.f32 %v5352, %v5424
    %v5426 = vpop.f32.mrb[0].mxu0
    %v5427 = vadd.f32 %v5354, %v5426
    %v5428 = vpop.f32.mrb[0].mxu0
    %v5429 = vadd.f32 %v5356, %v5428
    %5430 = vdwg.mxu0
    %5431 = vmatprep.subr.bf16.mxu0 %v3826
    %5432 = vmatpush1.bf16.msra.mxu0 %v3825
    %5433 = vmatprep.subr.bf16.mxu0 %v3830
    %5434 = vmatpush1.bf16.msra.mxu0 %v3829
    %5435 = vmatprep.subr.bf16.mxu0 %v3834
    %5436 = vmatpush1.bf16.msra.mxu0 %v3833
    %5437 = vmatprep.subr.bf16.mxu0 %v3838
    %5438 = vmatpush1.bf16.msra.mxu0 %v3837
    %5439 = vmatprep.subr.bf16.mxu0 %v3842
    %5440 = vmatpush1.bf16.msra.mxu0 %v3841
    %5441 = vmatprep.subr.bf16.mxu0 %v3846
    %5442 = vmatpush1.bf16.msra.mxu0 %v3845
    %5443 = vmatprep.subr.bf16.mxu0 %v3850
    %5444 = vmatpush1.bf16.msra.mxu0 %v3849
    %5445 = vmatprep.subr.bf16.mxu0 %v3854
    %5446 = vmatpush1.bf16.msra.mxu0 %v3853
    %5447 = vmatprep.subr.bf16.mxu0 %v3858
    %5448 = vmatpush1.bf16.msra.mxu0 %v3857
    %5449 = vmatprep.subr.bf16.mxu0 %v3862
    %5450 = vmatpush1.bf16.msra.mxu0 %v3861
    %5451 = vmatprep.subr.bf16.mxu0 %v3866
    %5452 = vmatpush1.bf16.msra.mxu0 %v3865
    %5453 = vmatprep.subr.bf16.mxu0 %v3870
    %5454 = vmatpush1.bf16.msra.mxu0 %v3869
    %5455 = vmatprep.subr.bf16.mxu0 %v3874
    %5456 = vmatpush1.bf16.msra.mxu0 %v3873
    %5457 = vmatprep.subr.bf16.mxu0 %v3878
    %5458 = vmatpush1.bf16.msra.mxu0 %v3877
    %5459 = vmatprep.subr.bf16.mxu0 %v3882
    %5460 = vmatpush1.bf16.msra.mxu0 %v3881
    %5461 = vmatprep.subr.bf16.mxu0 %v3886
    %5462 = vmatpush1.bf16.msra.mxu0 %v3885
    %5463 = vmatprep.mubr.bf16.mxu0 %v1690
    %5464 = vmatmul.mubr.bf16.gmra.mrb[0].mxu0 %v1689
    %v5465 = vpop.f32.mrb[0].mxu0
    %v5466 = vadd.f32 %v2278, %v5465
    %v5467 = vpop.f32.mrb[0].mxu0
    %v5468 = vadd.f32 %v2282, %v5467
    %v5469 = vpop.f32.mrb[0].mxu0
    %v5470 = vadd.f32 %v2278, %v5469
    %v5471 = vpop.f32.mrb[0].mxu0
    %v5472 = vadd.f32 %v2282, %v5471
    %5473 = vmatprep.mubr.bf16.mxu0 %v1706
    %5474 = vmatmul.mubr.bf16.gmra.mrb[0].mxu0 %v1705
    %v5475 = vpop.f32.mrb[0].mxu0
    %v5476 = vadd.f32 %v2278, %v5475
    %v5477 = vpop.f32.mrb[0].mxu0
    %v5478 = vadd.f32 %v2282, %v5477
    %v5479 = vpop.f32.mrb[0].mxu0
    %v5480 = vadd.f32 %v2278, %v5479
    %v5481 = vpop.f32.mrb[0].mxu0
    %v5482 = vadd.f32 %v2282, %v5481
    %5483 = vmatprep.mubr.bf16.mxu0 %v1722
    %5484 = vmatmul.mubr.bf16.gmra.mrb[0].mxu0 %v1721
    %v5485 = vpop.f32.mrb[0].mxu0
    %v5486 = vadd.f32 %v2278, %v5485
    %v5487 = vpop.f32.mrb[0].mxu0
    %v5488 = vadd.f32 %v2282, %v5487
    %v5489 = vpop.f32.mrb[0].mxu0
    %v5490 = vadd.f32 %v2278, %v5489
    %v5491 = vpop.f32.mrb[0].mxu0
    %v5492 = vadd.f32 %v2282, %v5491
    %5493 = vmatprep.mubr.bf16.mxu0 %v1738
    %5494 = vmatmul.mubr.bf16.gmra.mrb[0].mxu0 %v1737
    %v5495 = vpop.f32.mrb[0].mxu0
    %v5496 = vadd.f32 %v2278, %v5495
    %v5497 = vpop.f32.mrb[0].mxu0
    %v5498 = vadd.f32 %v2282, %v5497
    %v5499 = vpop.f32.mrb[0].mxu0
    %v5500 = vadd.f32 %v2278, %v5499
    %v5501 = vpop.f32.mrb[0].mxu0
    %v5502 = vadd.f32 %v2282, %v5501
    %5503 = vdwg.mxu0
    %5504 = vmatprep.subr.bf16.mxu0 %v3890
    %5505 = vmatpush1.bf16.msra.mxu0 %v3889
    %5506 = vmatprep.subr.bf16.mxu0 %v3894
    %5507 = vmatpush1.bf16.msra.mxu0 %v3893
    %5508 = vmatprep.subr.bf16.mxu0 %v3898
    %5509 = vmatpush1.bf16.msra.mxu0 %v3897
    %5510 = vmatprep.subr.bf16.mxu0 %v3902
    %5511 = vmatpush1.bf16.msra.mxu0 %v3901
    %5512 = vmatprep.subr.bf16.mxu0 %v3906
    %5513 = vmatpush1.bf16.msra.mxu0 %v3905
    %5514 = vmatprep.subr.bf16.mxu0 %v3910
    %5515 = vmatpush1.bf16.msra.mxu0 %v3909
    %5516 = vmatprep.subr.bf16.mxu0 %v3914
    %5517 = vmatpush1.bf16.msra.mxu0 %v3913
    %5518 = vmatprep.subr.bf16.mxu0 %v3918
    %5519 = vmatpush1.bf16.msra.mxu0 %v3917
    %5520 = vmatprep.subr.bf16.mxu0 %v3922
    %5521 = vmatpush1.bf16.msra.mxu0 %v3921
    %5522 = vmatprep.subr.bf16.mxu0 %v3926
    %5523 = vmatpush1.bf16.msra.mxu0 %v3925
    %5524 = vmatprep.subr.bf16.mxu0 %v3930
    %5525 = vmatpush1.bf16.msra.mxu0 %v3929
    %5526 = vmatprep.subr.bf16.mxu0 %v3934
    %5527 = vmatpush1.bf16.msra.mxu0 %v3933
    %5528 = vmatprep.subr.bf16.mxu0 %v3938
    %5529 = vmatpush1.bf16.msra.mxu0 %v3937
    %5530 = vmatprep.subr.bf16.mxu0 %v3942
    %5531 = vmatpush1.bf16.msra.mxu0 %v3941
    %5532 = vmatprep.subr.bf16.mxu0 %v3946
    %5533 = vmatpush1.bf16.msra.mxu0 %v3945
    %5534 = vmatprep.subr.bf16.mxu0 %v3950
    %5535 = vmatpush1.bf16.msra.mxu0 %v3949
    %5536 = vmatprep.mubr.bf16.mxu0 %v1692
    %5537 = vmatmul.mubr.bf16.gmra.mrb[0].mxu0 %v1691
    %v5538 = vpop.f32.mrb[0].mxu0
    %v5539 = vadd.f32 %v5466, %v5538
    %v5540 = vpop.f32.mrb[0].mxu0
    %v5541 = vadd.f32 %v5468, %v5540
    %v5542 = vpop.f32.mrb[0].mxu0
    %v5543 = vadd.f32 %v5470, %v5542
    %v5544 = vpop.f32.mrb[0].mxu0
    %v5545 = vadd.f32 %v5472, %v5544
    %5546 = vmatprep.mubr.bf16.mxu0 %v1708
    %5547 = vmatmul.mubr.bf16.gmra.mrb[0].mxu0 %v1707
    %v5548 = vpop.f32.mrb[0].mxu0
    %v5549 = vadd.f32 %v5476, %v5548
    %v5550 = vpop.f32.mrb[0].mxu0
    %v5551 = vadd.f32 %v5478, %v5550
    %v5552 = vpop.f32.mrb[0].mxu0
    %v5553 = vadd.f32 %v5480, %v5552
    %v5554 = vpop.f32.mrb[0].mxu0
    %v5555 = vadd.f32 %v5482, %v5554
    %5556 = vmatprep.mubr.bf16.mxu0 %v1724
    %5557 = vmatmul.mubr.bf16.gmra.mrb[0].mxu0 %v1723
    %v5558 = vpop.f32.mrb[0].mxu0
    %v5559 = vadd.f32 %v5486, %v5558
    %v5560 = vpop.f32.mrb[0].mxu0
    %v5561 = vadd.f32 %v5488, %v5560
    %v5562 = vpop.f32.mrb[0].mxu0
    %v5563 = vadd.f32 %v5490, %v5562
    %v5564 = vpop.f32.mrb[0].mxu0
    %v5565 = vadd.f32 %v5492, %v5564
    %5566 = vmatprep.mubr.bf16.mxu0 %v1740
    %5567 = vmatmul.mubr.bf16.gmra.mrb[0].mxu0 %v1739
    %v5568 = vpop.f32.mrb[0].mxu0
    %v5569 = vadd.f32 %v5496, %v5568
    %v5570 = vpop.f32.mrb[0].mxu0
    %v5571 = vadd.f32 %v5498, %v5570
    %v5572 = vpop.f32.mrb[0].mxu0
    %v5573 = vadd.f32 %v5500, %v5572
    %v5574 = vpop.f32.mrb[0].mxu0
    %v5575 = vadd.f32 %v5502, %v5574
    %5576 = vdwg.mxu0
    %5577 = vmatprep.subr.bf16.mxu0 %v3954
    %5578 = vmatpush1.bf16.msra.mxu0 %v3953
    %5579 = vmatprep.subr.bf16.mxu0 %v3958
    %5580 = vmatpush1.bf16.msra.mxu0 %v3957
    %5581 = vmatprep.subr.bf16.mxu0 %v3962
    %5582 = vmatpush1.bf16.msra.mxu0 %v3961
    %5583 = vmatprep.subr.bf16.mxu0 %v3966
    %5584 = vmatpush1.bf16.msra.mxu0 %v3965
    %5585 = vmatprep.subr.bf16.mxu0 %v3970
    %5586 = vmatpush1.bf16.msra.mxu0 %v3969
    %5587 = vmatprep.subr.bf16.mxu0 %v3974
    %5588 = vmatpush1.bf16.msra.mxu0 %v3973
    %5589 = vmatprep.subr.bf16.mxu0 %v3978
    %5590 = vmatpush1.bf16.msra.mxu0 %v3977
    %5591 = vmatprep.subr.bf16.mxu0 %v3982
    %5592 = vmatpush1.bf16.msra.mxu0 %v3981
    %5593 = vmatprep.subr.bf16.mxu0 %v3986
    %5594 = vmatpush1.bf16.msra.mxu0 %v3985
    %5595 = vmatprep.subr.bf16.mxu0 %v3990
    %5596 = vmatpush1.bf16.msra.mxu0 %v3989
    %5597 = vmatprep.subr.bf16.mxu0 %v3994
    %5598 = vmatpush1.bf16.msra.mxu0 %v3993
    %5599 = vmatprep.subr.bf16.mxu0 %v3998
    %5600 = vmatpush1.bf16.msra.mxu0 %v3997
    %5601 = vmatprep.subr.bf16.mxu0 %v4002
    %5602 = vmatpush1.bf16.msra.mxu0 %v4001
    %5603 = vmatprep.subr.bf16.mxu0 %v4006
    %5604 = vmatpush1.bf16.msra.mxu0 %v4005
    %5605 = vmatprep.subr.bf16.mxu0 %v4010
    %5606 = vmatpush1.bf16.msra.mxu0 %v4009
    %5607 = vmatprep.subr.bf16.mxu0 %v4014
    %5608 = vmatpush1.bf16.msra.mxu0 %v4013
    %5609 = vmatprep.mubr.bf16.mxu0 %v1694
    %5610 = vmatmul.mubr.bf16.gmra.mrb[0].mxu0 %v1693
    %v5611 = vpop.f32.mrb[0].mxu0
    %v5612 = vadd.f32 %v5539, %v5611
    %v5613 = vpop.f32.mrb[0].mxu0
    %v5614 = vadd.f32 %v5541, %v5613
    %v5615 = vpop.f32.mrb[0].mxu0
    %v5616 = vadd.f32 %v5543, %v5615
    %v5617 = vpop.f32.mrb[0].mxu0
    %v5618 = vadd.f32 %v5545, %v5617
    %5619 = vmatprep.mubr.bf16.mxu0 %v1710
    %5620 = vmatmul.mubr.bf16.gmra.mrb[0].mxu0 %v1709
    %v5621 = vpop.f32.mrb[0].mxu0
    %v5622 = vadd.f32 %v5549, %v5621
    %v5623 = vpop.f32.mrb[0].mxu0
    %v5624 = vadd.f32 %v5551, %v5623
    %v5625 = vpop.f32.mrb[0].mxu0
    %v5626 = vadd.f32 %v5553, %v5625
    %v5627 = vpop.f32.mrb[0].mxu0
    %v5628 = vadd.f32 %v5555, %v5627
    %5629 = vmatprep.mubr.bf16.mxu0 %v1726
    %5630 = vmatmul.mubr.bf16.gmra.mrb[0].mxu0 %v1725
    %v5631 = vpop.f32.mrb[0].mxu0
    %v5632 = vadd.f32 %v5559, %v5631
    %v5633 = vpop.f32.mrb[0].mxu0
    %v5634 = vadd.f32 %v5561, %v5633
    %v5635 = vpop.f32.mrb[0].mxu0
    %v5636 = vadd.f32 %v5563, %v5635
    %v5637 = vpop.f32.mrb[0].mxu0
    %v5638 = vadd.f32 %v5565, %v5637
    %5639 = vmatprep.mubr.bf16.mxu0 %v1742
    %5640 = vmatmul.mubr.bf16.gmra.mrb[0].mxu0 %v1741
    %v5641 = vpop.f32.mrb[0].mxu0
    %v5642 = vadd.f32 %v5569, %v5641
    %v5643 = vpop.f32.mrb[0].mxu0
    %v5644 = vadd.f32 %v5571, %v5643
    %v5645 = vpop.f32.mrb[0].mxu0
    %v5646 = vadd.f32 %v5573, %v5645
    %v5647 = vpop.f32.mrb[0].mxu0
    %v5648 = vadd.f32 %v5575, %v5647
    %5649 = vdwg.mxu0
    %5650 = vmatprep.subr.bf16.mxu0 %v4018
    %5651 = vmatpush1.bf16.msra.mxu0 %v4017
    %5652 = vmatprep.subr.bf16.mxu0 %v4022
    %5653 = vmatpush1.bf16.msra.mxu0 %v4021
    %5654 = vmatprep.subr.bf16.mxu0 %v4026
    %5655 = vmatpush1.bf16.msra.mxu0 %v4025
    %5656 = vmatprep.subr.bf16.mxu0 %v4030
    %5657 = vmatpush1.bf16.msra.mxu0 %v4029
    %5658 = vmatprep.subr.bf16.mxu0 %v4034
    %5659 = vmatpush1.bf16.msra.mxu0 %v4033
    %5660 = vmatprep.subr.bf16.mxu0 %v4038
    %5661 = vmatpush1.bf16.msra.mxu0 %v4037
    %5662 = vmatprep.subr.bf16.mxu0 %v4042
    %5663 = vmatpush1.bf16.msra.mxu0 %v4041
    %5664 = vmatprep.subr.bf16.mxu0 %v4046
    %5665 = vmatpush1.bf16.msra.mxu0 %v4045
    %5666 = vmatprep.subr.bf16.mxu0 %v4050
    %5667 = vmatpush1.bf16.msra.mxu0 %v4049
    %5668 = vmatprep.subr.bf16.mxu0 %v4054
    %5669 = vmatpush1.bf16.msra.mxu0 %v4053
    %5670 = vmatprep.subr.bf16.mxu0 %v4058
    %5671 = vmatpush1.bf16.msra.mxu0 %v4057
    %5672 = vmatprep.subr.bf16.mxu0 %v4062
    %5673 = vmatpush1.bf16.msra.mxu0 %v4061
    %5674 = vmatprep.subr.bf16.mxu0 %v4066
    %5675 = vmatpush1.bf16.msra.mxu0 %v4065
    %5676 = vmatprep.subr.bf16.mxu0 %v4070
    %5677 = vmatpush1.bf16.msra.mxu0 %v4069
    %5678 = vmatprep.subr.bf16.mxu0 %v4074
    %5679 = vmatpush1.bf16.msra.mxu0 %v4073
    %5680 = vmatprep.subr.bf16.mxu0 %v4078
    %5681 = vmatpush1.bf16.msra.mxu0 %v4077
    %5682 = vmatprep.mubr.bf16.mxu0 %v1696
    %5683 = vmatmul.mubr.bf16.gmra.mrb[0].mxu0 %v1695
    %v5684 = vpop.f32.mrb[0].mxu0
    %v5685 = vadd.f32 %v5612, %v5684
    %v5686 = vpop.f32.mrb[0].mxu0
    %v5687 = vadd.f32 %v5614, %v5686
    %v5688 = vpop.f32.mrb[0].mxu0
    %v5689 = vadd.f32 %v5616, %v5688
    %v5690 = vpop.f32.mrb[0].mxu0
    %v5691 = vadd.f32 %v5618, %v5690
    %5692 = vmatprep.mubr.bf16.mxu0 %v1712
    %5693 = vmatmul.mubr.bf16.gmra.mrb[0].mxu0 %v1711
    %v5694 = vpop.f32.mrb[0].mxu0
    %v5695 = vadd.f32 %v5622, %v5694
    %v5696 = vpop.f32.mrb[0].mxu0
    %v5697 = vadd.f32 %v5624, %v5696
    %v5698 = vpop.f32.mrb[0].mxu0
    %v5699 = vadd.f32 %v5626, %v5698
    %v5700 = vpop.f32.mrb[0].mxu0
    %v5701 = vadd.f32 %v5628, %v5700
    %5702 = vmatprep.mubr.bf16.mxu0 %v1728
    %5703 = vmatmul.mubr.bf16.gmra.mrb[0].mxu0 %v1727
    %v5704 = vpop.f32.mrb[0].mxu0
    %v5705 = vadd.f32 %v5632, %v5704
    %v5706 = vpop.f32.mrb[0].mxu0
    %v5707 = vadd.f32 %v5634, %v5706
    %v5708 = vpop.f32.mrb[0].mxu0
    %v5709 = vadd.f32 %v5636, %v5708
    %v5710 = vpop.f32.mrb[0].mxu0
    %v5711 = vadd.f32 %v5638, %v5710
    %5712 = vmatprep.mubr.bf16.mxu0 %v1744
    %5713 = vmatmul.mubr.bf16.gmra.mrb[0].mxu0 %v1743
    %v5714 = vpop.f32.mrb[0].mxu0
    %v5715 = vadd.f32 %v5642, %v5714
    %v5716 = vpop.f32.mrb[0].mxu0
    %v5717 = vadd.f32 %v5644, %v5716
    %v5718 = vpop.f32.mrb[0].mxu0
    %v5719 = vadd.f32 %v5646, %v5718
    %v5720 = vpop.f32.mrb[0].mxu0
    %v5721 = vadd.f32 %v5648, %v5720
    %5722 = vdwg.mxu0
    %5723 = vmatprep.subr.bf16.mxu0 %v4082
    %5724 = vmatpush1.bf16.msra.mxu0 %v4081
    %5725 = vmatprep.subr.bf16.mxu0 %v4086
    %5726 = vmatpush1.bf16.msra.mxu0 %v4085
    %5727 = vmatprep.subr.bf16.mxu0 %v4090
    %5728 = vmatpush1.bf16.msra.mxu0 %v4089
    %5729 = vmatprep.subr.bf16.mxu0 %v4094
    %5730 = vmatpush1.bf16.msra.mxu0 %v4093
    %5731 = vmatprep.subr.bf16.mxu0 %v4098
    %5732 = vmatpush1.bf16.msra.mxu0 %v4097
    %5733 = vmatprep.subr.bf16.mxu0 %v4102
    %5734 = vmatpush1.bf16.msra.mxu0 %v4101
    %5735 = vmatprep.subr.bf16.mxu0 %v4106
    %5736 = vmatpush1.bf16.msra.mxu0 %v4105
    %5737 = vmatprep.subr.bf16.mxu0 %v4110
    %5738 = vmatpush1.bf16.msra.mxu0 %v4109
    %5739 = vmatprep.subr.bf16.mxu0 %v4114
    %5740 = vmatpush1.bf16.msra.mxu0 %v4113
    %5741 = vmatprep.subr.bf16.mxu0 %v4118
    %5742 = vmatpush1.bf16.msra.mxu0 %v4117
    %5743 = vmatprep.subr.bf16.mxu0 %v4122
    %5744 = vmatpush1.bf16.msra.mxu0 %v4121
    %5745 = vmatprep.subr.bf16.mxu0 %v4126
    %5746 = vmatpush1.bf16.msra.mxu0 %v4125
    %5747 = vmatprep.subr.bf16.mxu0 %v4130
    %5748 = vmatpush1.bf16.msra.mxu0 %v4129
    %5749 = vmatprep.subr.bf16.mxu0 %v4134
    %5750 = vmatpush1.bf16.msra.mxu0 %v4133
    %5751 = vmatprep.subr.bf16.mxu0 %v4138
    %5752 = vmatpush1.bf16.msra.mxu0 %v4137
    %5753 = vmatprep.subr.bf16.mxu0 %v4142
    %5754 = vmatpush1.bf16.msra.mxu0 %v4141
    %5755 = vmatprep.mubr.bf16.mxu0 %v1698
    %5756 = vmatmul.mubr.bf16.gmra.mrb[0].mxu0 %v1697
    %v5757 = vpop.f32.mrb[0].mxu0
    %v5758 = vadd.f32 %v5685, %v5757
    %v5759 = vpop.f32.mrb[0].mxu0
    %v5760 = vadd.f32 %v5687, %v5759
    %v5761 = vpop.f32.mrb[0].mxu0
    %v5762 = vadd.f32 %v5689, %v5761
    %v5763 = vpop.f32.mrb[0].mxu0
    %v5764 = vadd.f32 %v5691, %v5763
    %5765 = vmatprep.mubr.bf16.mxu0 %v1714
    %5766 = vmatmul.mubr.bf16.gmra.mrb[0].mxu0 %v1713
    %v5767 = vpop.f32.mrb[0].mxu0
    %v5768 = vadd.f32 %v5695, %v5767
    %v5769 = vpop.f32.mrb[0].mxu0
    %v5770 = vadd.f32 %v5697, %v5769
    %v5771 = vpop.f32.mrb[0].mxu0
    %v5772 = vadd.f32 %v5699, %v5771
    %v5773 = vpop.f32.mrb[0].mxu0
    %v5774 = vadd.f32 %v5701, %v5773
    %5775 = vmatprep.mubr.bf16.mxu0 %v1730
    %5776 = vmatmul.mubr.bf16.gmra.mrb[0].mxu0 %v1729
    %v5777 = vpop.f32.mrb[0].mxu0
    %v5778 = vadd.f32 %v5705, %v5777
    %v5779 = vpop.f32.mrb[0].mxu0
    %v5780 = vadd.f32 %v5707, %v5779
    %v5781 = vpop.f32.mrb[0].mxu0
    %v5782 = vadd.f32 %v5709, %v5781
    %v5783 = vpop.f32.mrb[0].mxu0
    %v5784 = vadd.f32 %v5711, %v5783
    %5785 = vmatprep.mubr.bf16.mxu0 %v1746
    %5786 = vmatmul.mubr.bf16.gmra.mrb[0].mxu0 %v1745
    %v5787 = vpop.f32.mrb[0].mxu0
    %v5788 = vadd.f32 %v5715, %v5787
    %v5789 = vpop.f32.mrb[0].mxu0
    %v5790 = vadd.f32 %v5717, %v5789
    %v5791 = vpop.f32.mrb[0].mxu0
    %v5792 = vadd.f32 %v5719, %v5791
    %v5793 = vpop.f32.mrb[0].mxu0
    %v5794 = vadd.f32 %v5721, %v5793
    %5795 = vdwg.mxu0
    %5796 = vmatprep.subr.bf16.mxu0 %v4146
    %5797 = vmatpush1.bf16.msra.mxu0 %v4145
    %5798 = vmatprep.subr.bf16.mxu0 %v4150
    %5799 = vmatpush1.bf16.msra.mxu0 %v4149
    %5800 = vmatprep.subr.bf16.mxu0 %v4154
    %5801 = vmatpush1.bf16.msra.mxu0 %v4153
    %5802 = vmatprep.subr.bf16.mxu0 %v4158
    %5803 = vmatpush1.bf16.msra.mxu0 %v4157
    %5804 = vmatprep.subr.bf16.mxu0 %v4162
    %5805 = vmatpush1.bf16.msra.mxu0 %v4161
    %5806 = vmatprep.subr.bf16.mxu0 %v4166
    %5807 = vmatpush1.bf16.msra.mxu0 %v4165
    %5808 = vmatprep.subr.bf16.mxu0 %v4170
    %5809 = vmatpush1.bf16.msra.mxu0 %v4169
    %5810 = vmatprep.subr.bf16.mxu0 %v4174
    %5811 = vmatpush1.bf16.msra.mxu0 %v4173
    %5812 = vmatprep.subr.bf16.mxu0 %v4178
    %5813 = vmatpush1.bf16.msra.mxu0 %v4177
    %5814 = vmatprep.subr.bf16.mxu0 %v4182
    %5815 = vmatpush1.bf16.msra.mxu0 %v4181
    %5816 = vmatprep.subr.bf16.mxu0 %v4186
    %5817 = vmatpush1.bf16.msra.mxu0 %v4185
    %5818 = vmatprep.subr.bf16.mxu0 %v4190
    %5819 = vmatpush1.bf16.msra.mxu0 %v4189
    %5820 = vmatprep.subr.bf16.mxu0 %v4194
    %5821 = vmatpush1.bf16.msra.mxu0 %v4193
    %5822 = vmatprep.subr.bf16.mxu0 %v4198
    %5823 = vmatpush1.bf16.msra.mxu0 %v4197
    %5824 = vmatprep.subr.bf16.mxu0 %v4202
    %5825 = vmatpush1.bf16.msra.mxu0 %v4201
    %5826 = vmatprep.subr.bf16.mxu0 %v4206
    %5827 = vmatpush1.bf16.msra.mxu0 %v4205
    %5828 = vmatprep.mubr.bf16.mxu0 %v1700
    %5829 = vmatmul.mubr.bf16.gmra.mrb[0].mxu0 %v1699
    %v5830 = vpop.f32.mrb[0].mxu0
    %v5831 = vadd.f32 %v5758, %v5830
    %v5832 = vpop.f32.mrb[0].mxu0
    %v5833 = vadd.f32 %v5760, %v5832
    %v5834 = vpop.f32.mrb[0].mxu0
    %v5835 = vadd.f32 %v5762, %v5834
    %v5836 = vpop.f32.mrb[0].mxu0
    %v5837 = vadd.f32 %v5764, %v5836
    %5838 = vmatprep.mubr.bf16.mxu0 %v1716
    %5839 = vmatmul.mubr.bf16.gmra.mrb[0].mxu0 %v1715
    %v5840 = vpop.f32.mrb[0].mxu0
    %v5841 = vadd.f32 %v5768, %v5840
    %v5842 = vpop.f32.mrb[0].mxu0
    %v5843 = vadd.f32 %v5770, %v5842
    %v5844 = vpop.f32.mrb[0].mxu0
    %v5845 = vadd.f32 %v5772, %v5844
    %v5846 = vpop.f32.mrb[0].mxu0
    %v5847 = vadd.f32 %v5774, %v5846
    %5848 = vmatprep.mubr.bf16.mxu0 %v1732
    %5849 = vmatmul.mubr.bf16.gmra.mrb[0].mxu0 %v1731
    %v5850 = vpop.f32.mrb[0].mxu0
    %v5851 = vadd.f32 %v5778, %v5850
    %v5852 = vpop.f32.mrb[0].mxu0
    %v5853 = vadd.f32 %v5780, %v5852
    %v5854 = vpop.f32.mrb[0].mxu0
    %v5855 = vadd.f32 %v5782, %v5854
    %v5856 = vpop.f32.mrb[0].mxu0
    %v5857 = vadd.f32 %v5784, %v5856
    %5858 = vmatprep.mubr.bf16.mxu0 %v1748
    %5859 = vmatmul.mubr.bf16.gmra.mrb[0].mxu0 %v1747
    %v5860 = vpop.f32.mrb[0].mxu0
    %v5861 = vadd.f32 %v5788, %v5860
    %v5862 = vpop.f32.mrb[0].mxu0
    %v5863 = vadd.f32 %v5790, %v5862
    %v5864 = vpop.f32.mrb[0].mxu0
    %v5865 = vadd.f32 %v5792, %v5864
    %v5866 = vpop.f32.mrb[0].mxu0
    %v5867 = vadd.f32 %v5794, %v5866
    %5868 = vdwg.mxu0
    %5869 = vmatprep.subr.bf16.mxu0 %v4210
    %5870 = vmatpush1.bf16.msra.mxu0 %v4209
    %5871 = vmatprep.subr.bf16.mxu0 %v4214
    %5872 = vmatpush1.bf16.msra.mxu0 %v4213
    %5873 = vmatprep.subr.bf16.mxu0 %v4218
    %5874 = vmatpush1.bf16.msra.mxu0 %v4217
    %5875 = vmatprep.subr.bf16.mxu0 %v4222
    %5876 = vmatpush1.bf16.msra.mxu0 %v4221
    %5877 = vmatprep.subr.bf16.mxu0 %v4226
    %5878 = vmatpush1.bf16.msra.mxu0 %v4225
    %5879 = vmatprep.subr.bf16.mxu0 %v4230
    %5880 = vmatpush1.bf16.msra.mxu0 %v4229
    %5881 = vmatprep.subr.bf16.mxu0 %v4234
    %5882 = vmatpush1.bf16.msra.mxu0 %v4233
    %5883 = vmatprep.subr.bf16.mxu0 %v4238
    %5884 = vmatpush1.bf16.msra.mxu0 %v4237
    %5885 = vmatprep.subr.bf16.mxu0 %v4242
    %5886 = vmatpush1.bf16.msra.mxu0 %v4241
    %5887 = vmatprep.subr.bf16.mxu0 %v4246
    %5888 = vmatpush1.bf16.msra.mxu0 %v4245
    %5889 = vmatprep.subr.bf16.mxu0 %v4250
    %5890 = vmatpush1.bf16.msra.mxu0 %v4249
    %5891 = vmatprep.subr.bf16.mxu0 %v4254
    %5892 = vmatpush1.bf16.msra.mxu0 %v4253
    %5893 = vmatprep.subr.bf16.mxu0 %v4258
    %5894 = vmatpush1.bf16.msra.mxu0 %v4257
    %5895 = vmatprep.subr.bf16.mxu0 %v4262
    %5896 = vmatpush1.bf16.msra.mxu0 %v4261
    %5897 = vmatprep.subr.bf16.mxu0 %v4266
    %5898 = vmatpush1.bf16.msra.mxu0 %v4265
    %5899 = vmatprep.subr.bf16.mxu0 %v4270
    %5900 = vmatpush1.bf16.msra.mxu0 %v4269
    %5901 = vmatprep.mubr.bf16.mxu0 %v1702
    %5902 = vmatmul.mubr.bf16.gmra.mrb[0].mxu0 %v1701
    %v5903 = vpop.f32.mrb[0].mxu0
    %v5904 = vadd.f32 %v5831, %v5903
    %v5905 = vpop.f32.mrb[0].mxu0
    %v5906 = vadd.f32 %v5833, %v5905
    %v5907 = vpop.f32.mrb[0].mxu0
    %v5908 = vadd.f32 %v5835, %v5907
    %v5909 = vpop.f32.mrb[0].mxu0
    %v5910 = vadd.f32 %v5837, %v5909
    %5911 = vmatprep.mubr.bf16.mxu0 %v1718
    %5912 = vmatmul.mubr.bf16.gmra.mrb[0].mxu0 %v1717
    %v5913 = vpop.f32.mrb[0].mxu0
    %v5914 = vadd.f32 %v5841, %v5913
    %v5915 = vpop.f32.mrb[0].mxu0
    %v5916 = vadd.f32 %v5843, %v5915
    %v5917 = vpop.f32.mrb[0].mxu0
    %v5918 = vadd.f32 %v5845, %v5917
    %v5919 = vpop.f32.mrb[0].mxu0
    %v5920 = vadd.f32 %v5847, %v5919
    %5921 = vmatprep.mubr.bf16.mxu0 %v1734
    %5922 = vmatmul.mubr.bf16.gmra.mrb[0].mxu0 %v1733
    %v5923 = vpop.f32.mrb[0].mxu0
    %v5924 = vadd.f32 %v5851, %v5923
    %v5925 = vpop.f32.mrb[0].mxu0
    %v5926 = vadd.f32 %v5853, %v5925
    %v5927 = vpop.f32.mrb[0].mxu0
    %v5928 = vadd.f32 %v5855, %v5927
    %v5929 = vpop.f32.mrb[0].mxu0
    %v5930 = vadd.f32 %v5857, %v5929
    %5931 = vmatprep.mubr.bf16.mxu0 %v1750
    %5932 = vmatmul.mubr.bf16.gmra.mrb[0].mxu0 %v1749
    %v5933 = vpop.f32.mrb[0].mxu0
    %v5934 = vadd.f32 %v5861, %v5933
    %v5935 = vpop.f32.mrb[0].mxu0
    %v5936 = vadd.f32 %v5863, %v5935
    %v5937 = vpop.f32.mrb[0].mxu0
    %v5938 = vadd.f32 %v5865, %v5937
    %v5939 = vpop.f32.mrb[0].mxu0
    %v5940 = vadd.f32 %v5867, %v5939
    %5941 = vdwg.mxu0
    %5942 = vmatprep.subr.bf16.mxu0 %v4274
    %5943 = vmatpush1.bf16.msra.mxu0 %v4273
    %5944 = vmatprep.subr.bf16.mxu0 %v4278
    %5945 = vmatpush1.bf16.msra.mxu0 %v4277
    %5946 = vmatprep.subr.bf16.mxu0 %v4282
    %5947 = vmatpush1.bf16.msra.mxu0 %v4281
    %5948 = vmatprep.subr.bf16.mxu0 %v4286
    %5949 = vmatpush1.bf16.msra.mxu0 %v4285
    %5950 = vmatprep.subr.bf16.mxu0 %v4290
    %5951 = vmatpush1.bf16.msra.mxu0 %v4289
    %5952 = vmatprep.subr.bf16.mxu0 %v4294
    %5953 = vmatpush1.bf16.msra.mxu0 %v4293
    %5954 = vmatprep.subr.bf16.mxu0 %v4298
    %5955 = vmatpush1.bf16.msra.mxu0 %v4297
    %5956 = vmatprep.subr.bf16.mxu0 %v4302
    %5957 = vmatpush1.bf16.msra.mxu0 %v4301
    %5958 = vmatprep.subr.bf16.mxu0 %v4306
    %5959 = vmatpush1.bf16.msra.mxu0 %v4305
    %5960 = vmatprep.subr.bf16.mxu0 %v4310
    %5961 = vmatpush1.bf16.msra.mxu0 %v4309
    %5962 = vmatprep.subr.bf16.mxu0 %v4314
    %5963 = vmatpush1.bf16.msra.mxu0 %v4313
    %5964 = vmatprep.subr.bf16.mxu0 %v4318
    %5965 = vmatpush1.bf16.msra.mxu0 %v4317
    %5966 = vmatprep.subr.bf16.mxu0 %v4322
    %5967 = vmatpush1.bf16.msra.mxu0 %v4321
    %5968 = vmatprep.subr.bf16.mxu0 %v4326
    %5969 = vmatpush1.bf16.msra.mxu0 %v4325
    %5970 = vmatprep.subr.bf16.mxu0 %v4330
    %5971 = vmatpush1.bf16.msra.mxu0 %v4329
    %5972 = vmatprep.subr.bf16.mxu0 %v4334
    %5973 = vmatpush1.bf16.msra.mxu0 %v4333
    %5974 = vmatprep.mubr.bf16.mxu0 %v1704
    %5975 = vmatmul.mubr.bf16.gmra.mrb[0].mxu0 %v1703
    %v5976 = vpop.f32.mrb[0].mxu0
    %v5977 = vadd.f32 %v5904, %v5976
    %v5978 = vpop.f32.mrb[0].mxu0
    %v5979 = vadd.f32 %v5906, %v5978
    %v5980 = vpop.f32.mrb[0].mxu0
    %v5981 = vadd.f32 %v5908, %v5980
    %v5982 = vpop.f32.mrb[0].mxu0
    %v5983 = vadd.f32 %v5910, %v5982
    %5984 = vmatprep.mubr.bf16.mxu0 %v1720
    %5985 = vmatmul.mubr.bf16.gmra.mrb[0].mxu0 %v1719
    %v5986 = vpop.f32.mrb[0].mxu0
    %v5987 = vadd.f32 %v5914, %v5986
    %v5988 = vpop.f32.mrb[0].mxu0
    %v5989 = vadd.f32 %v5916, %v5988
    %v5990 = vpop.f32.mrb[0].mxu0
    %v5991 = vadd.f32 %v5918, %v5990
    %v5992 = vpop.f32.mrb[0].mxu0
    %v5993 = vadd.f32 %v5920, %v5992
    %5994 = vmatprep.mubr.bf16.mxu0 %v1736
    %5995 = vmatmul.mubr.bf16.gmra.mrb[0].mxu0 %v1735
    %v5996 = vpop.f32.mrb[0].mxu0
    %v5997 = vadd.f32 %v5924, %v5996
    %v5998 = vpop.f32.mrb[0].mxu0
    %v5999 = vadd.f32 %v5926, %v5998
    %v6000 = vpop.f32.mrb[0].mxu0
    %v6001 = vadd.f32 %v5928, %v6000
    %v6002 = vpop.f32.mrb[0].mxu0
    %v6003 = vadd.f32 %v5930, %v6002
    %6004 = vmatprep.mubr.bf16.mxu0 %v1752
    %6005 = vmatmul.mubr.bf16.gmra.mrb[0].mxu0 %v1751
    %v6006 = vpop.f32.mrb[0].mxu0
    %v6007 = vadd.f32 %v5934, %v6006
    %v6008 = vpop.f32.mrb[0].mxu0
    %v6009 = vadd.f32 %v5936, %v6008
    %v6010 = vpop.f32.mrb[0].mxu0
    %v6011 = vadd.f32 %v5938, %v6010
    %v6012 = vpop.f32.mrb[0].mxu0
    %v6013 = vadd.f32 %v5940, %v6012
    %6014 = vdwg.mxu0
    %v6015 = vmax.f32 %v5393, 0.0
    %v6016 = vmax.f32 %v5395, 0.0
    %v6017 = vmax.f32 %v5977, 0.0
    %v6018 = vmax.f32 %v5979, 0.0
    %v6019 = vmax.f32 %v5397, 0.0
    %v6020 = vmax.f32 %v5399, 0.0
    %v6021 = vmax.f32 %v5981, 0.0
    %v6022 = vmax.f32 %v5983, 0.0
    %v6023 = vmax.f32 %v5403, 0.0
    %v6024 = vmax.f32 %v5405, 0.0
    %v6025 = vmax.f32 %v5987, 0.0
    %v6026 = vmax.f32 %v5989, 0.0
    %v6027 = vmax.f32 %v5407, 0.0
    %v6028 = vmax.f32 %v5409, 0.0
    %v6029 = vmax.f32 %v5991, 0.0
    %v6030 = vmax.f32 %v5993, 0.0
    %v6031 = vmax.f32 %v5413, 0.0
    %v6032 = vmax.f32 %v5415, 0.0
    %v6033 = vmax.f32 %v5997, 0.0
    %v6034 = vmax.f32 %v5999, 0.0
    %v6035 = vmax.f32 %v5417, 0.0
    %v6036 = vmax.f32 %v5419, 0.0
    %v6037 = vmax.f32 %v6001, 0.0
    %v6038 = vmax.f32 %v6003, 0.0
    %v6039 = vmax.f32 %v5423, 0.0
    %v6040 = vmax.f32 %v5425, 0.0
    %v6041 = vmax.f32 %v6007, 0.0
    %v6042 = vmax.f32 %v6009, 0.0
    %v6043 = vmax.f32 %v5427, 0.0
    %v6044 = vmax.f32 %v5429, 0.0
    %v6045 = vmax.f32 %v6011, 0.0
    %v6046 = vmax.f32 %v6013, 0.0
    %v6047 = vpack.c.bf16 %v6019, %v6015
    %v6048 = vpack.c.bf16 %v6020, %v6016
    %v6049 = vpack.c.bf16 %v6021, %v6017
    %v6050 = vpack.c.bf16 %v6022, %v6018
    %v6051 = vpack.c.bf16 %v6027, %v6023
    %v6052 = vpack.c.bf16 %v6028, %v6024
    %v6053 = vpack.c.bf16 %v6029, %v6025
    %v6054 = vpack.c.bf16 %v6030, %v6026
    %v6055 = vpack.c.bf16 %v6035, %v6031
    %v6056 = vpack.c.bf16 %v6036, %v6032
    %v6057 = vpack.c.bf16 %v6037, %v6033
    %v6058 = vpack.c.bf16 %v6038, %v6034
    %v6059 = vpack.c.bf16 %v6043, %v6039
    %v6060 = vpack.c.bf16 %v6044, %v6040
    %v6061 = vpack.c.bf16 %v6045, %v6041
    %v6062 = vpack.c.bf16 %v6046, %v6042
    %v6063 = vld [vmem:[#allocation6] sm:$0xf]
    %v6064 = vld [vmem:[#allocation6 + $0x4] sm:$0xf]
    %v6065 = vld [vmem:[#allocation6 + $0x8] sm:$0xf]
    %v6066 = vld [vmem:[#allocation6 + $0xc] sm:$0xf]
    %v6067 = vld [vmem:[#allocation6 + $0x10] sm:$0xf]
    %v6068 = vld [vmem:[#allocation6 + $0x14] sm:$0xf]
    %v6069 = vld [vmem:[#allocation6 + $0x18] sm:$0xf]
    %v6070 = vld [vmem:[#allocation6 + $0x1c] sm:$0xf]
    %v6071 = vld [vmem:[#allocation6 + $0x20] sm:$0xf]
    %v6072 = vld [vmem:[#allocation6 + $0x24] sm:$0xf]
    %v6073 = vld [vmem:[#allocation6 + $0x28] sm:$0xf]
    %v6074 = vld [vmem:[#allocation6 + $0x2c] sm:$0xf]
    %v6075 = vld [vmem:[#allocation6 + $0x30] sm:$0xf]
    %v6076 = vld [vmem:[#allocation6 + $0x34] sm:$0xf]
    %v6077 = vld [vmem:[#allocation6 + $0x38] sm:$0xf]
    %v6078 = vld [vmem:[#allocation6 + $0x3c] sm:$0xf]
    %v6079 = vld [vmem:[#allocation6 + $0x40] sm:$0xf]
    %v6080 = vld [vmem:[#allocation6 + $0x44] sm:$0xf]
    %v6081 = vld [vmem:[#allocation6 + $0x48] sm:$0xf]
    %v6082 = vld [vmem:[#allocation6 + $0x4c] sm:$0xf]
    %v6083 = vld [vmem:[#allocation6 + $0x50] sm:$0xf]
    %v6084 = vld [vmem:[#allocation6 + $0x54] sm:$0xf]
    %v6085 = vld [vmem:[#allocation6 + $0x58] sm:$0xf]
    %v6086 = vld [vmem:[#allocation6 + $0x5c] sm:$0xf]
    %v6087 = vld [vmem:[#allocation6 + $0x60] sm:$0xf]
    %v6088 = vld [vmem:[#allocation6 + $0x64] sm:$0xf]
    %v6089 = vld [vmem:[#allocation6 + $0x68] sm:$0xf]
    %v6090 = vld [vmem:[#allocation6 + $0x6c] sm:$0xf]
    %v6091 = vld [vmem:[#allocation6 + $0x70] sm:$0xf]
    %v6092 = vld [vmem:[#allocation6 + $0x74] sm:$0xf]
    %v6093 = vld [vmem:[#allocation6 + $0x78] sm:$0xf]
    %v6094 = vld [vmem:[#allocation6 + $0x7c] sm:$0xf]
    %v6095 = vld [vmem:[#allocation6 + $0x80] sm:$0xf]
    %v6096 = vld [vmem:[#allocation6 + $0x84] sm:$0xf]
    %v6097 = vld [vmem:[#allocation6 + $0x88] sm:$0xf]
    %v6098 = vld [vmem:[#allocation6 + $0x8c] sm:$0xf]
    %v6099 = vld [vmem:[#allocation6 + $0x90] sm:$0xf]
    %v6100 = vld [vmem:[#allocation6 + $0x94] sm:$0xf]
    %v6101 = vld [vmem:[#allocation6 + $0x98] sm:$0xf]
    %v6102 = vld [vmem:[#allocation6 + $0x9c] sm:$0xf]
    %v6103 = vld [vmem:[#allocation6 + $0xa0] sm:$0xf]
    %v6104 = vld [vmem:[#allocation6 + $0xa4] sm:$0xf]
    %v6105 = vld [vmem:[#allocation6 + $0xa8] sm:$0xf]
    %v6106 = vld [vmem:[#allocation6 + $0xac] sm:$0xf]
    %v6107 = vld [vmem:[#allocation6 + $0xb0] sm:$0xf]
    %v6108 = vld [vmem:[#allocation6 + $0xb4] sm:$0xf]
    %v6109 = vld [vmem:[#allocation6 + $0xb8] sm:$0xf]
    %v6110 = vld [vmem:[#allocation6 + $0xbc] sm:$0xf]
    %v6111 = vld [vmem:[#allocation6 + $0xc0] sm:$0xf]
    %v6112 = vld [vmem:[#allocation6 + $0xc4] sm:$0xf]
    %v6113 = vld [vmem:[#allocation6 + $0xc8] sm:$0xf]
    %v6114 = vld [vmem:[#allocation6 + $0xcc] sm:$0xf]
    %v6115 = vld [vmem:[#allocation6 + $0xd0] sm:$0xf]
    %v6116 = vld [vmem:[#allocation6 + $0xd4] sm:$0xf]
    %v6117 = vld [vmem:[#allocation6 + $0xd8] sm:$0xf]
    %v6118 = vld [vmem:[#allocation6 + $0xdc] sm:$0xf]
    %v6119 = vld [vmem:[#allocation6 + $0xe0] sm:$0xf]
    %v6120 = vld [vmem:[#allocation6 + $0xe4] sm:$0xf]
    %v6121 = vld [vmem:[#allocation6 + $0xe8] sm:$0xf]
    %v6122 = vld [vmem:[#allocation6 + $0xec] sm:$0xf]
    %v6123 = vld [vmem:[#allocation6 + $0xf0] sm:$0xf]
    %v6124 = vld [vmem:[#allocation6 + $0xf4] sm:$0xf]
    %v6125 = vld [vmem:[#allocation6 + $0xf8] sm:$0xf]
    %v6126 = vld [vmem:[#allocation6 + $0xfc] sm:$0xf]
    %v6127 = vld [vmem:[#allocation9 + $0x14] sm:$0x1]
    %v6129 = vlaneseq
    %v6130 = vshrl.u32 %v6129, 7
    %v6131 = vsub.s32 0, %v6130
    %v6132 = vrot.slane %v6127, %v6131
    %v6198 = vunpack.c.l.b16 %v6063
    %v6199 = vunpack.c.l.b16 %v6064
    %v6200 = vunpack.c.l.b16 %v6065
    %v6201 = vunpack.c.l.b16 %v6066
    %v6202 = vunpack.c.l.b16 %v6067
    %v6203 = vunpack.c.l.b16 %v6068
    %v6204 = vunpack.c.l.b16 %v6069
    %v6205 = vunpack.c.l.b16 %v6070
    %v6206 = vunpack.c.l.b16 %v6071
    %v6207 = vunpack.c.l.b16 %v6072
    %v6208 = vunpack.c.l.b16 %v6073
    %v6209 = vunpack.c.l.b16 %v6074
    %v6210 = vunpack.c.l.b16 %v6075
    %v6211 = vunpack.c.l.b16 %v6076
    %v6212 = vunpack.c.l.b16 %v6077
    %v6213 = vunpack.c.l.b16 %v6078
    %v6214 = vunpack.c.l.b16 %v6079
    %v6215 = vunpack.c.l.b16 %v6080
    %v6216 = vunpack.c.l.b16 %v6081
    %v6217 = vunpack.c.l.b16 %v6082
    %v6218 = vunpack.c.l.b16 %v6083
    %v6219 = vunpack.c.l.b16 %v6084
    %v6220 = vunpack.c.l.b16 %v6085
    %v6221 = vunpack.c.l.b16 %v6086
    %v6222 = vunpack.c.l.b16 %v6087
    %v6223 = vunpack.c.l.b16 %v6088
    %v6224 = vunpack.c.l.b16 %v6089
    %v6225 = vunpack.c.l.b16 %v6090
    %v6226 = vunpack.c.l.b16 %v6091
    %v6227 = vunpack.c.l.b16 %v6092
    %v6228 = vunpack.c.l.b16 %v6093
    %v6229 = vunpack.c.l.b16 %v6094
    %v6230 = vunpack.c.l.b16 %v6095
    %v6231 = vunpack.c.l.b16 %v6096
    %v6232 = vunpack.c.l.b16 %v6097
    %v6233 = vunpack.c.l.b16 %v6098
    %v6234 = vunpack.c.l.b16 %v6099
    %v6235 = vunpack.c.l.b16 %v6100
    %v6236 = vunpack.c.l.b16 %v6101
    %v6237 = vunpack.c.l.b16 %v6102
    %v6238 = vunpack.c.l.b16 %v6103
    %v6239 = vunpack.c.l.b16 %v6104
    %v6240 = vunpack.c.l.b16 %v6105
    %v6241 = vunpack.c.l.b16 %v6106
    %v6242 = vunpack.c.l.b16 %v6107
    %v6243 = vunpack.c.l.b16 %v6108
    %v6244 = vunpack.c.l.b16 %v6109
    %v6245 = vunpack.c.l.b16 %v6110
    %v6246 = vunpack.c.l.b16 %v6111
    %v6247 = vunpack.c.l.b16 %v6112
    %v6248 = vunpack.c.l.b16 %v6113
    %v6249 = vunpack.c.l.b16 %v6114
    %v6250 = vunpack.c.l.b16 %v6115
    %v6251 = vunpack.c.l.b16 %v6116
    %v6252 = vunpack.c.l.b16 %v6117
    %v6253 = vunpack.c.l.b16 %v6118
    %v6254 = vunpack.c.l.b16 %v6119
    %v6255 = vunpack.c.l.b16 %v6120
    %v6256 = vunpack.c.l.b16 %v6121
    %v6257 = vunpack.c.l.b16 %v6122
    %v6258 = vunpack.c.l.b16 %v6123
    %v6259 = vunpack.c.l.b16 %v6124
    %v6260 = vunpack.c.l.b16 %v6125
    %v6261 = vunpack.c.l.b16 %v6126
    %v6262 = vpack.c.b16 %v6199, %v6198
    %v6263 = vpack.c.b16 %v6201, %v6200
    %v6264 = vpack.c.b16 %v6203, %v6202
    %v6265 = vpack.c.b16 %v6205, %v6204
    %v6266 = vpack.c.b16 %v6207, %v6206
    %v6267 = vpack.c.b16 %v6209, %v6208
    %v6268 = vpack.c.b16 %v6211, %v6210
    %v6269 = vpack.c.b16 %v6213, %v6212
    %v6270 = vpack.c.b16 %v6215, %v6214
    %v6271 = vpack.c.b16 %v6217, %v6216
    %v6272 = vpack.c.b16 %v6219, %v6218
    %v6273 = vpack.c.b16 %v6221, %v6220
    %v6274 = vpack.c.b16 %v6223, %v6222
    %v6275 = vpack.c.b16 %v6225, %v6224
    %v6276 = vpack.c.b16 %v6227, %v6226
    %v6277 = vpack.c.b16 %v6229, %v6228
    %v6278 = vpack.c.b16 %v6231, %v6230
    %v6279 = vpack.c.b16 %v6233, %v6232
    %v6280 = vpack.c.b16 %v6235, %v6234
    %v6281 = vpack.c.b16 %v6237, %v6236
    %v6282 = vpack.c.b16 %v6239, %v6238
    %v6283 = vpack.c.b16 %v6241, %v6240
    %v6284 = vpack.c.b16 %v6243, %v6242
    %v6285 = vpack.c.b16 %v6245, %v6244
    %v6286 = vpack.c.b16 %v6247, %v6246
    %v6287 = vpack.c.b16 %v6249, %v6248
    %v6288 = vpack.c.b16 %v6251, %v6250
    %v6289 = vpack.c.b16 %v6253, %v6252
    %v6290 = vpack.c.b16 %v6255, %v6254
    %v6291 = vpack.c.b16 %v6257, %v6256
    %v6292 = vpack.c.b16 %v6259, %v6258
    %v6293 = vpack.c.b16 %v6261, %v6260
    %6326 = vmatprep.subr.bf16.mxu0 0
    %6327 = vmatpush1.bf16.msra.mxu0 %v6262
    %6328 = vmatprep.subr.bf16.mxu0 0
    %6329 = vmatpush1.bf16.msra.mxu0 %v6263
    %6330 = vmatprep.subr.bf16.mxu0 0
    %6331 = vmatpush1.bf16.msra.mxu0 %v6264
    %6332 = vmatprep.subr.bf16.mxu0 0
    %6333 = vmatpush1.bf16.msra.mxu0 %v6265
    %6334 = vmatprep.subr.bf16.mxu0 0
    %6335 = vmatpush1.bf16.msra.mxu0 %v6266
    %6336 = vmatprep.subr.bf16.mxu0 0
    %6337 = vmatpush1.bf16.msra.mxu0 %v6267
    %6338 = vmatprep.subr.bf16.mxu0 0
    %6339 = vmatpush1.bf16.msra.mxu0 %v6268
    %6340 = vmatprep.subr.bf16.mxu0 0
    %6341 = vmatpush1.bf16.msra.mxu0 %v6269
    %6342 = vmatprep.subr.bf16.mxu0 0
    %6343 = vmatpush1.bf16.msra.mxu0 %v6270
    %6344 = vmatprep.subr.bf16.mxu0 0
    %6345 = vmatpush1.bf16.msra.mxu0 %v6271
    %6346 = vmatprep.subr.bf16.mxu0 0
    %6347 = vmatpush1.bf16.msra.mxu0 %v6272
    %6348 = vmatprep.subr.bf16.mxu0 0
    %6349 = vmatpush1.bf16.msra.mxu0 %v6273
    %6350 = vmatprep.subr.bf16.mxu0 0
    %6351 = vmatpush1.bf16.msra.mxu0 %v6274
    %6352 = vmatprep.subr.bf16.mxu0 0
    %6353 = vmatpush1.bf16.msra.mxu0 %v6275
    %6354 = vmatprep.subr.bf16.mxu0 0
    %6355 = vmatpush1.bf16.msra.mxu0 %v6276
    %6356 = vmatprep.subr.bf16.mxu0 0
    %6357 = vmatpush1.bf16.msra.mxu0 %v6277
    %6358 = vmatprep.mubr.bf16.mxu0 %v6048
    %6359 = vmatmul.mubr.bf16.gmra.mrb[0].mxu0 %v6047
    %v6360 = vpop.f32.mrb[0].mxu0
    %v6361 = vadd.f32 %v6132, %v6360
    %v6362 = vpop.f32.mrb[0].mxu0
    %v6363 = vpop.f32.mrb[0].mxu0
    %v6364 = vadd.f32 %v6132, %v6363
    %v6365 = vpop.f32.mrb[0].mxu0
    %6366 = vmatprep.mubr.bf16.mxu0 %v6052
    %6367 = vmatmul.mubr.bf16.gmra.mrb[0].mxu0 %v6051
    %v6368 = vpop.f32.mrb[0].mxu0
    %v6369 = vadd.f32 %v6132, %v6368
    %v6370 = vpop.f32.mrb[0].mxu0
    %v6371 = vpop.f32.mrb[0].mxu0
    %v6372 = vadd.f32 %v6132, %v6371
    %v6373 = vpop.f32.mrb[0].mxu0
    %6374 = vmatprep.mubr.bf16.mxu0 %v6056
    %6375 = vmatmul.mubr.bf16.gmra.mrb[0].mxu0 %v6055
    %v6376 = vpop.f32.mrb[0].mxu0
    %v6377 = vadd.f32 %v6132, %v6376
    %v6378 = vpop.f32.mrb[0].mxu0
    %v6379 = vpop.f32.mrb[0].mxu0
    %v6380 = vadd.f32 %v6132, %v6379
    %v6381 = vpop.f32.mrb[0].mxu0
    %6382 = vmatprep.mubr.bf16.mxu0 %v6060
    %6383 = vmatmul.mubr.bf16.gmra.mrb[0].mxu0 %v6059
    %v6384 = vpop.f32.mrb[0].mxu0
    %v6385 = vadd.f32 %v6132, %v6384
    %v6386 = vpop.f32.mrb[0].mxu0
    %v6387 = vpop.f32.mrb[0].mxu0
    %v6388 = vadd.f32 %v6132, %v6387
    %v6389 = vpop.f32.mrb[0].mxu0
    %6390 = vdwg.mxu0
    %6391 = vmatprep.subr.bf16.mxu0 0
    %6392 = vmatpush1.bf16.msra.mxu0 %v6278
    %6393 = vmatprep.subr.bf16.mxu0 0
    %6394 = vmatpush1.bf16.msra.mxu0 %v6279
    %6395 = vmatprep.subr.bf16.mxu0 0
    %6396 = vmatpush1.bf16.msra.mxu0 %v6280
    %6397 = vmatprep.subr.bf16.mxu0 0
    %6398 = vmatpush1.bf16.msra.mxu0 %v6281
    %6399 = vmatprep.subr.bf16.mxu0 0
    %6400 = vmatpush1.bf16.msra.mxu0 %v6282
    %6401 = vmatprep.subr.bf16.mxu0 0
    %6402 = vmatpush1.bf16.msra.mxu0 %v6283
    %6403 = vmatprep.subr.bf16.mxu0 0
    %6404 = vmatpush1.bf16.msra.mxu0 %v6284
    %6405 = vmatprep.subr.bf16.mxu0 0
    %6406 = vmatpush1.bf16.msra.mxu0 %v6285
    %6407 = vmatprep.subr.bf16.mxu0 0
    %6408 = vmatpush1.bf16.msra.mxu0 %v6286
    %6409 = vmatprep.subr.bf16.mxu0 0
    %6410 = vmatpush1.bf16.msra.mxu0 %v6287
    %6411 = vmatprep.subr.bf16.mxu0 0
    %6412 = vmatpush1.bf16.msra.mxu0 %v6288
    %6413 = vmatprep.subr.bf16.mxu0 0
    %6414 = vmatpush1.bf16.msra.mxu0 %v6289
    %6415 = vmatprep.subr.bf16.mxu0 0
    %6416 = vmatpush1.bf16.msra.mxu0 %v6290
    %6417 = vmatprep.subr.bf16.mxu0 0
    %6418 = vmatpush1.bf16.msra.mxu0 %v6291
    %6419 = vmatprep.subr.bf16.mxu0 0
    %6420 = vmatpush1.bf16.msra.mxu0 %v6292
    %6421 = vmatprep.subr.bf16.mxu0 0
    %6422 = vmatpush1.bf16.msra.mxu0 %v6293
    %6423 = vmatprep.mubr.bf16.mxu0 %v6050
    %6424 = vmatmul.mubr.bf16.gmra.mrb[0].mxu0 %v6049
    %v6425 = vpop.f32.mrb[0].mxu0
    %v6426 = vadd.f32 %v6361, %v6425
    %v6427 = vpop.f32.mrb[0].mxu0
    %v6428 = vpop.f32.mrb[0].mxu0
    %v6429 = vadd.f32 %v6364, %v6428
    %v6430 = vpop.f32.mrb[0].mxu0
    %6431 = vmatprep.mubr.bf16.mxu0 %v6054
    %6432 = vmatmul.mubr.bf16.gmra.mrb[0].mxu0 %v6053
    %v6433 = vpop.f32.mrb[0].mxu0
    %v6434 = vadd.f32 %v6369, %v6433
    %v6435 = vpop.f32.mrb[0].mxu0
    %v6436 = vpop.f32.mrb[0].mxu0
    %v6437 = vadd.f32 %v6372, %v6436
    %v6438 = vpop.f32.mrb[0].mxu0
    %6439 = vmatprep.mubr.bf16.mxu0 %v6058
    %6440 = vmatmul.mubr.bf16.gmra.mrb[0].mxu0 %v6057
    %v6441 = vpop.f32.mrb[0].mxu0
    %v6442 = vadd.f32 %v6377, %v6441
    %v6443 = vpop.f32.mrb[0].mxu0
    %v6444 = vpop.f32.mrb[0].mxu0
    %v6445 = vadd.f32 %v6380, %v6444
    %v6446 = vpop.f32.mrb[0].mxu0
    %6447 = vmatprep.mubr.bf16.mxu0 %v6062
    %6448 = vmatmul.mubr.bf16.gmra.mrb[0].mxu0 %v6061
    %v6449 = vpop.f32.mrb[0].mxu0
    %v6450 = vadd.f32 %v6385, %v6449
    %v6451 = vpop.f32.mrb[0].mxu0
    %v6452 = vpop.f32.mrb[0].mxu0
    %v6453 = vadd.f32 %v6388, %v6452
    %v6454 = vpop.f32.mrb[0].mxu0
    %6455 = vdwg.mxu0
    %v6456 = vmax.f32 %v6426, 0.0
    %v6457 = vmax.f32 %v6429, 0.0
    %v6458 = vmax.f32 %v6434, 0.0
    %v6459 = vmax.f32 %v6437, 0.0
    %v6460 = vmax.f32 %v6442, 0.0
    %v6461 = vmax.f32 %v6445, 0.0
    %v6462 = vmax.f32 %v6450, 0.0
    %v6463 = vmax.f32 %v6453, 0.0
    %v6464 = vpack.c.bf16 %v6457, %v6456
    %v6465 = vpack.c.bf16 %v6459, %v6458
    %v6466 = vpack.c.bf16 %v6461, %v6460
    %v6467 = vpack.c.bf16 %v6463, %v6462
    %v6468 = vld [vmem:[%s4] sm:$0xf]
    %v6469 = vld [vmem:[%s4 + $0x4] sm:$0xf]
    %v6470 = vld [vmem:[%s4 + $0x8] sm:$0xf]
    %v6471 = vld [vmem:[%s4 + $0xc] sm:$0xf]
    %v6472 = vld [vmem:[%s4 + $0x10] sm:$0xf]
    %v6473 = vld [vmem:[%s4 + $0x14] sm:$0xf]
    %v6474 = vld [vmem:[%s4 + $0x18] sm:$0xf]
    %v6475 = vld [vmem:[%s4 + $0x1c] sm:$0xf]
    %v6476 = vld [vmem:[%s4 + $0x20] sm:$0xf]
    %v6477 = vld [vmem:[%s4 + $0x24] sm:$0xf]
    %v6478 = vld [vmem:[%s4 + $0x28] sm:$0xf]
    %v6479 = vld [vmem:[%s4 + $0x2c] sm:$0xf]
    %v6480 = vld [vmem:[%s4 + $0x30] sm:$0xf]
    %v6481 = vld [vmem:[%s4 + $0x34] sm:$0xf]
    %v6482 = vld [vmem:[%s4 + $0x38] sm:$0xf]
    %v6483 = vld [vmem:[%s4 + $0x3c] sm:$0xf]
    %v6484 = vld [vmem:[#allocation9 + $0x15] sm:$0x1]
    %v6486 = vlaneseq
    %v6487 = vshrl.u32 %v6486, 7
    %v6488 = vsub.s32 0, %v6487
    %v6489 = vrot.slane %v6484, %v6488
    %v6507 = vunpack.c.l.b16 %v6468
    %v6508 = vunpack.c.l.b16 %v6469
    %v6509 = vunpack.c.l.b16 %v6470
    %v6510 = vunpack.c.l.b16 %v6471
    %v6511 = vunpack.c.l.b16 %v6472
    %v6512 = vunpack.c.l.b16 %v6473
    %v6513 = vunpack.c.l.b16 %v6474
    %v6514 = vunpack.c.l.b16 %v6475
    %v6515 = vunpack.c.l.b16 %v6476
    %v6516 = vunpack.c.l.b16 %v6477
    %v6517 = vunpack.c.l.b16 %v6478
    %v6518 = vunpack.c.l.b16 %v6479
    %v6519 = vunpack.c.l.b16 %v6480
    %v6520 = vunpack.c.l.b16 %v6481
    %v6521 = vunpack.c.l.b16 %v6482
    %v6522 = vunpack.c.l.b16 %v6483
    %v6523 = vpack.c.b16 %v6508, %v6507
    %v6524 = vpack.c.b16 %v6510, %v6509
    %v6525 = vpack.c.b16 %v6512, %v6511
    %v6526 = vpack.c.b16 %v6514, %v6513
    %v6527 = vpack.c.b16 %v6516, %v6515
    %v6528 = vpack.c.b16 %v6518, %v6517
    %v6529 = vpack.c.b16 %v6520, %v6519
    %v6530 = vpack.c.b16 %v6522, %v6521
    %6539 = vmatprep.subr.bf16.mxu0 0
    %6540 = vmatpush1.bf16.msra.mxu0 %v6523
    %6541 = vmatprep.subr.bf16.mxu0 0
    %6542 = vmatpush1.bf16.msra.mxu0 %v6524
    %6543 = vmatprep.subr.bf16.mxu0 0
    %6544 = vmatpush1.bf16.msra.mxu0 %v6525
    %6545 = vmatprep.subr.bf16.mxu0 0
    %6546 = vmatpush1.bf16.msra.mxu0 %v6526
    %6547 = vmatprep.subr.bf16.mxu0 0
    %6548 = vmatpush1.bf16.msra.mxu0 %v6527
    %6549 = vmatprep.subr.bf16.mxu0 0
    %6550 = vmatpush1.bf16.msra.mxu0 %v6528
    %6551 = vmatprep.subr.bf16.mxu0 0
    %6552 = vmatpush1.bf16.msra.mxu0 %v6529
    %6553 = vmatprep.subr.bf16.mxu0 0
    %6554 = vmatpush1.bf16.msra.mxu0 %v6530
    %6555 = vmatprep.subr.bf16.mxu0 0
    %6556 = vmatpush1.bf16.msra.mxu0 0
    %6557 = vmatprep.subr.bf16.mxu0 0
    %6558 = vmatpush1.bf16.msra.mxu0 0
    %6559 = vmatprep.subr.bf16.mxu0 0
    %6560 = vmatpush1.bf16.msra.mxu0 0
    %6561 = vmatprep.subr.bf16.mxu0 0
    %6562 = vmatpush1.bf16.msra.mxu0 0
    %6563 = vmatprep.subr.bf16.mxu0 0
    %6564 = vmatpush1.bf16.msra.mxu0 0
    %6565 = vmatprep.subr.bf16.mxu0 0
    %6566 = vmatpush1.bf16.msra.mxu0 0
    %6567 = vmatprep.subr.bf16.mxu0 0
    %6568 = vmatpush1.bf16.msra.mxu0 0
    %6569 = vmatprep.subr.bf16.mxu0 0
    %6570 = vmatpush1.bf16.msra.mxu0 0
    %6571 = vmatprep.mubr.bf16.mxu0 0
    %6572 = vmatmul.mubr.bf16.gmra.mrb[0].mxu0 %v6464
    %v6573 = vpop.f32.mrb[0].mxu0
    %v6574 = vadd.f32 %v6489, %v6573
    %v6575 = vpop.f32.mrb[0].mxu0
    %v6576 = vpop.f32.mrb[0].mxu0
    %v6577 = vadd.f32 %v6489, %v6576
    %v6578 = vpop.f32.mrb[0].mxu0
    %6579 = vmatprep.mubr.bf16.mxu0 0
    %6580 = vmatmul.mubr.bf16.gmra.mrb[0].mxu0 %v6465
    %v6581 = vpop.f32.mrb[0].mxu0
    %v6582 = vadd.f32 %v6489, %v6581
    %v6583 = vpop.f32.mrb[0].mxu0
    %v6584 = vpop.f32.mrb[0].mxu0
    %v6585 = vadd.f32 %v6489, %v6584
    %v6586 = vpop.f32.mrb[0].mxu0
    %6587 = vmatprep.mubr.bf16.mxu0 0
    %6588 = vmatmul.mubr.bf16.gmra.mrb[0].mxu0 %v6466
    %v6589 = vpop.f32.mrb[0].mxu0
    %v6590 = vadd.f32 %v6489, %v6589
    %v6591 = vpop.f32.mrb[0].mxu0
    %v6592 = vpop.f32.mrb[0].mxu0
    %v6593 = vadd.f32 %v6489, %v6592
    %v6594 = vpop.f32.mrb[0].mxu0
    %6595 = vmatprep.mubr.bf16.mxu0 0
    %6596 = vmatmul.mubr.bf16.gmra.mrb[0].mxu0 %v6467
    %v6597 = vpop.f32.mrb[0].mxu0
    %v6598 = vadd.f32 %v6489, %v6597
    %v6599 = vpop.f32.mrb[0].mxu0
    %v6600 = vpop.f32.mrb[0].mxu0
    %v6601 = vadd.f32 %v6489, %v6600
    %v6602 = vpop.f32.mrb[0].mxu0
    %6603 = vdwg.mxu0
    %v6604 = vmax.f32 %v6574, 0.0
    %v6605 = vmax.f32 %v6577, 0.0
    %v6606 = vmax.f32 %v6582, 0.0
    %v6607 = vmax.f32 %v6585, 0.0
    %v6608 = vmax.f32 %v6590, 0.0
    %v6609 = vmax.f32 %v6593, 0.0
    %v6610 = vmax.f32 %v6598, 0.0
    %v6611 = vmax.f32 %v6601, 0.0
    %v6612 = vpack.c.bf16 %v6605, %v6604
    %v6613 = vpack.c.bf16 %v6607, %v6606
    %v6614 = vpack.c.bf16 %v6609, %v6608
    %v6615 = vpack.c.bf16 %v6611, %v6610
    %v6616 = vld [vmem:[#allocation7] sm:$0xf]
    %v6617 = vld [vmem:[#allocation7 + $0x4] sm:$0xf]
    %v6618 = vld [vmem:[#allocation7 + $0x8] sm:$0xf]
    %v6619 = vld [vmem:[#allocation7 + $0xc] sm:$0xf]
    %v6620 = vld [vmem:[#allocation9 + $0x16] sm:$0x1]
    %v6622 = vlaneseq
    %v6623 = vshrl.u32 %v6622, 7
    %v6624 = vsub.s32 0, %v6623
    %v6625 = vrot.slane %v6620, %v6624
    %v6631 = vunpack.c.l.b16 %v6616
    %v6632 = vunpack.c.l.b16 %v6617
    %v6633 = vunpack.c.l.b16 %v6618
    %v6634 = vunpack.c.l.b16 %v6619
    %v6635 = vpack.c.b16 %v6632, %v6631
    %v6636 = vpack.c.b16 %v6634, %v6633
    %vm6639 = vcmask 261120
    %v6641 = vsel %vm6639, %v6612, 0
    %v6644 = vsel %vm6639, %v6613, 0
    %v6647 = vsel %vm6639, %v6614, 0
    %v6650 = vsel %vm6639, %v6615, 0
    %6652 = vmatprep.subr.bf16.mxu0 0
    %6653 = vmatpush1.bf16.msra.mxu0 %v6635
    %6654 = vmatprep.subr.bf16.mxu0 0
    %6655 = vmatpush1.bf16.msra.mxu0 %v6636
    %6656 = vmatprep.subr.bf16.mxu0 0
    %6657 = vmatpush1.bf16.msra.mxu0 0
    %6658 = vmatprep.subr.bf16.mxu0 0
    %6659 = vmatpush1.bf16.msra.mxu0 0
    %6660 = vmatprep.subr.bf16.mxu0 0
    %6661 = vmatpush1.bf16.msra.mxu0 0
    %6662 = vmatprep.subr.bf16.mxu0 0
    %6663 = vmatpush1.bf16.msra.mxu0 0
    %6664 = vmatprep.subr.bf16.mxu0 0
    %6665 = vmatpush1.bf16.msra.mxu0 0
    %6666 = vmatprep.subr.bf16.mxu0 0
    %6667 = vmatpush1.bf16.msra.mxu0 0
    %6668 = vmatprep.subr.bf16.mxu0 0
    %6669 = vmatpush1.bf16.msra.mxu0 0
    %6670 = vmatprep.subr.bf16.mxu0 0
    %6671 = vmatpush1.bf16.msra.mxu0 0
    %6672 = vmatprep.subr.bf16.mxu0 0
    %6673 = vmatpush1.bf16.msra.mxu0 0
    %6674 = vmatprep.subr.bf16.mxu0 0
    %6675 = vmatpush1.bf16.msra.mxu0 0
    %6676 = vmatprep.subr.bf16.mxu0 0
    %6677 = vmatpush1.bf16.msra.mxu0 0
    %6678 = vmatprep.subr.bf16.mxu0 0
    %6679 = vmatpush1.bf16.msra.mxu0 0
    %6680 = vmatprep.subr.bf16.mxu0 0
    %6681 = vmatpush1.bf16.msra.mxu0 0
    %6682 = vmatprep.subr.bf16.mxu0 0
    %6683 = vmatpush1.bf16.msra.mxu0 0
    %6684 = vmatprep.mubr.bf16.mxu0 0
    %6685 = vmatmul.mubr.bf16.gmra.mrb[0].mxu0 %v6641
    %v6686 = vpop.f32.mrb[0].mxu0
    %v6687 = vadd.f32 %v6625, %v6686
    %v6688 = vpop.f32.mrb[0].mxu0
    %v6689 = vpop.f32.mrb[0].mxu0
    %v6690 = vadd.f32 %v6625, %v6689
    %v6691 = vpop.f32.mrb[0].mxu0
    %6692 = vmatprep.mubr.bf16.mxu0 0
    %6693 = vmatmul.mubr.bf16.gmra.mrb[0].mxu0 %v6644
    %v6694 = vpop.f32.mrb[0].mxu0
    %v6695 = vadd.f32 %v6625, %v6694
    %v6696 = vpop.f32.mrb[0].mxu0
    %v6697 = vpop.f32.mrb[0].mxu0
    %v6698 = vadd.f32 %v6625, %v6697
    %v6699 = vpop.f32.mrb[0].mxu0
    %6700 = vmatprep.mubr.bf16.mxu0 0
    %6701 = vmatmul.mubr.bf16.gmra.mrb[0].mxu0 %v6647
    %v6702 = vpop.f32.mrb[0].mxu0
    %v6703 = vadd.f32 %v6625, %v6702
    %v6704 = vpop.f32.mrb[0].mxu0
    %v6705 = vpop.f32.mrb[0].mxu0
    %v6706 = vadd.f32 %v6625, %v6705
    %v6707 = vpop.f32.mrb[0].mxu0
    %6708 = vmatprep.mubr.bf16.mxu0 0
    %6709 = vmatmul.mubr.bf16.gmra.mrb[0].mxu0 %v6650
    %v6710 = vpop.f32.mrb[0].mxu0
    %v6711 = vadd.f32 %v6625, %v6710
    %v6712 = vpop.f32.mrb[0].mxu0
    %v6713 = vpop.f32.mrb[0].mxu0
    %v6714 = vadd.f32 %v6625, %v6713
    %v6715 = vpop.f32.mrb[0].mxu0
    %6716 = vdwg.mxu0
    %v6717 = vlaneseq
    %v6718 = vand.u32 %v6717, 127
    %vm6719 = vcmp.lt.s32.totalorder %v6718, 2
    %v6720 = vsel %vm6719, %v6687, -1e+30
    %v6721 = vsel %vm6719, %v6690, -1e+30
    %v6722 = vsel %vm6719, %v6695, -1e+30
    %v6723 = vsel %vm6719, %v6698, -1e+30
    %v6724 = vsel %vm6719, %v6703, -1e+30
    %v6725 = vsel %vm6719, %v6706, -1e+30
    %v6726 = vsel %vm6719, %v6711, -1e+30
    %v6727 = vsel %vm6719, %v6714, -1e+30
    %6728 = vmax.xlane.f32.xlu0 %v6720
    %v6729 = vpop.xlane.xlu0 %6728
    %6730 = vmax.xlane.f32.xlu0 %v6721
    %v6731 = vpop.xlane.xlu0 %6730
    %6732 = vmax.xlane.f32.xlu0 %v6722
    %v6733 = vpop.xlane.xlu0 %6732
    %6734 = vmax.xlane.f32.xlu0 %v6723
    %v6735 = vpop.xlane.xlu0 %6734
    %6736 = vmax.xlane.f32.xlu0 %v6724
    %v6737 = vpop.xlane.xlu0 %6736
    %6738 = vmax.xlane.f32.xlu0 %v6725
    %v6739 = vpop.xlane.xlu0 %6738
    %6740 = vmax.xlane.f32.xlu0 %v6726
    %v6741 = vpop.xlane.xlu0 %6740
    %6742 = vmax.xlane.f32.xlu0 %v6727
    %v6743 = vpop.xlane.xlu0 %6742
    %v6744 = vsub.f32 %v6720, %v6729
    %v6745 = vsub.f32 %v6721, %v6731
    %v6746 = vsub.f32 %v6722, %v6733
    %v6747 = vsub.f32 %v6723, %v6735
    %v6748 = vsub.f32 %v6724, %v6737
    %v6749 = vsub.f32 %v6725, %v6739
    %v6750 = vsub.f32 %v6726, %v6741
    %v6751 = vsub.f32 %v6727, %v6743
    %v6752 = vmul.f32 %v6744, 1.442695
    %v6753 = vpow.pop %v6752
    %v6754 = vmul.f32 %v6745, 1.442695
    %v6755 = vpow.pop %v6754
    %v6756 = vmul.f32 %v6746, 1.442695
    %v6757 = vpow.pop %v6756
    %v6758 = vmul.f32 %v6747, 1.442695
    %v6759 = vpow.pop %v6758
    %v6760 = vmul.f32 %v6748, 1.442695
    %v6761 = vpow.pop %v6760
    %v6762 = vmul.f32 %v6749, 1.442695
    %v6763 = vpow.pop %v6762
    %v6764 = vmul.f32 %v6750, 1.442695
    %v6765 = vpow.pop %v6764
    %v6766 = vmul.f32 %v6751, 1.442695
    %v6767 = vpow.pop %v6766
    %v6768 = vsel %vm6719, %v6753, 0.0
    %v6769 = vsel %vm6719, %v6755, 0.0
    %v6770 = vsel %vm6719, %v6757, 0.0
    %v6771 = vsel %vm6719, %v6759, 0.0
    %v6772 = vsel %vm6719, %v6761, 0.0
    %v6773 = vsel %vm6719, %v6763, 0.0
    %v6774 = vsel %vm6719, %v6765, 0.0
    %v6775 = vsel %vm6719, %v6767, 0.0
    %6776 = vadd.xlane.f32.xlu0 %v6768
    %v6777 = vpop.xlane.xlu0 %6776
    %6778 = vadd.xlane.f32.xlu0 %v6769
    %v6779 = vpop.xlane.xlu0 %6778
    %6780 = vadd.xlane.f32.xlu0 %v6770
    %v6781 = vpop.xlane.xlu0 %6780
    %6782 = vadd.xlane.f32.xlu0 %v6771
    %v6783 = vpop.xlane.xlu0 %6782
    %6784 = vadd.xlane.f32.xlu0 %v6772
    %v6785 = vpop.xlane.xlu0 %6784
    %6786 = vadd.xlane.f32.xlu0 %v6773
    %v6787 = vpop.xlane.xlu0 %6786
    %6788 = vadd.xlane.f32.xlu0 %v6774
    %v6789 = vpop.xlane.xlu0 %6788
    %6790 = vadd.xlane.f32.xlu0 %v6775
    %v6791 = vpop.xlane.xlu0 %6790
    %v6792 = vrcp.pop %v6777
    %v6793 = vmul.f32 %v6768, %v6792
    %v6794 = vrcp.pop %v6779
    %v6795 = vmul.f32 %v6769, %v6794
    %v6796 = vrcp.pop %v6781
    %v6797 = vmul.f32 %v6770, %v6796
    %v6798 = vrcp.pop %v6783
    %v6799 = vmul.f32 %v6771, %v6798
    %v6800 = vrcp.pop %v6785
    %v6801 = vmul.f32 %v6772, %v6800
    %v6802 = vrcp.pop %v6787
    %v6803 = vmul.f32 %v6773, %v6802
    %v6804 = vrcp.pop %v6789
    %v6805 = vmul.f32 %v6774, %v6804
    %v6806 = vrcp.pop %v6791
    %v6807 = vmul.f32 %v6775, %v6806
    %6808 = vst [vmem:[%s7] sm:$0xff] %v6793
    %6809 = vst [vmem:[%s7 + $0x8] sm:$0xff] %v6795
    %6810 = vst [vmem:[%s7 + $0x10] sm:$0xff] %v6797
    %6811 = vst [vmem:[%s7 + $0x18] sm:$0xff] %v6799
    %6812 = vst [vmem:[%s7 + $0x20] sm:$0xff] %v6801
    %6813 = vst [vmem:[%s7 + $0x28] sm:$0xff] %v6803
    %6814 = vst [vmem:[%s7 + $0x30] sm:$0xff] %v6805
    %6815 = vst [vmem:[%s7 + $0x38] sm:$0xff] %v6807
    // Predicated region
    $region50: #{mlp_forward.1} parent=1 // pred_check
      _
    $region51: #{mlp_forward.1} parent=1 // pred_check_branch
      %6817 = sbr.rel (0) target = $region53
    $region52: #{mlp_forward.1} parent=1 // pred_region
      _
    $region53: #{mlp_forward.1} parent=1 // pred_fallthru
      _
    // Predicated region
    $region54: #{mlp_forward.1} parent=1 // pred_check
      _
    $region55: #{mlp_forward.1} parent=1 // pred_check_branch
      %6819 = sbr.rel (0) target = $region57
    $region56: #{mlp_forward.1} parent=1 // pred_region
      _
    $region57: #{mlp_forward.1} parent=1 // pred_fallthru
      _
    %6820 = vsyncpa [#allocation3], 1
    %6821 = vsyncpa [#allocation5], 1
    %6822 = vsyncpa [#allocation8], 1

</llo_original>
